<compile_context>
chip_gen: v5e
topology: v5e:2x2
jax: 0.10.0
libtpu: 0.0.40
codegen_flags: <defaults>
</compile_context>

<pallas_src>
import jax
import jax.numpy as jnp
from jax.experimental import pallas as pl
from jax.experimental.pallas import tpu as pltpu

# ---------------------------------------------------------------------------
# Model dimensions (fixed by the PyTorch module) and their lane-aligned pads.
# ---------------------------------------------------------------------------
D_IN, D_H1, D_H2, D_Z = 784, 400, 20, 2
D_IN_P, D_H1_P, D_H2_P, D_Z_P = 896, 512, 128, 128

MAX_BATCH_TILE = 512  # fills MXU M dim, amortizes per-step overhead; VMEM-safe


def _round_up(a, m):
    return (a + m - 1) // m * m


def _ceil_div(a, b):
    return -(-a // b)


# ---------------------------------------------------------------------------
# Kernel: one batch tile of the full encode+decode pipeline (5 MXU matmuls).
# ---------------------------------------------------------------------------
def _vae_kernel(x_ref,
                w1_ref, b1_ref, w2_ref, b2_ref, wcat_ref, bcat_ref,
                w5_ref, b5_ref, w6_ref, b6_ref,
                xrec_ref, z_ref):
    x = x_ref[...].astype(jnp.bfloat16)                          # (bt, 784)

    # ----- encode -----
    h1 = jnp.dot(x, w1_ref[...], preferred_element_type=jnp.float32) + b1_ref[...]
    h1 = jnp.maximum(h1, 0.0).astype(jnp.bfloat16)               # relu(fc1)
    h2 = jnp.dot(h1, w2_ref[...], preferred_element_type=jnp.float32) + b2_ref[...]
    h2 = jnp.maximum(h2, 0.0).astype(jnp.bfloat16)               # relu(fc2)

    # fc3 and the fused fc3*fc4 share one N=256 matmul: zd = [z | d1_pre].
    zd = jnp.dot(h2, wcat_ref[...], preferred_element_type=jnp.float32) + bcat_ref[...]
    z = zd[:, :D_Z_P]                                            # fc3 (pad cols = 0)
    d1 = jnp.maximum(zd[:, D_Z_P:], 0.0).astype(jnp.bfloat16)    # relu(fc4), fused

    # ----- decode -----
    d2 = jnp.dot(d1, w5_ref[...], preferred_element_type=jnp.float32) + b5_ref[...]
    d2 = jnp.maximum(d2, 0.0).astype(jnp.bfloat16)               # relu(fc5)
    logits = jnp.dot(d2, w6_ref[...], preferred_element_type=jnp.float32) + b6_ref[...]
    xrec = 0.5 * jnp.tanh(0.5 * logits) + 0.5                    # sigmoid(fc6)

    xrec_ref[...] = xrec.astype(xrec_ref.dtype)                  # bf16 writeback
    z_ref[...] = z.astype(z_ref.dtype)


# ---------------------------------------------------------------------------
# Parameter helpers
# ---------------------------------------------------------------------------
def init_vae_params(key, dtype=jnp.float32):
    """nn.Linear-style U(-1/sqrt(fan_in), 1/sqrt(fan_in)) init.

    Weights stored as (in_features, out_features) so each layer is x @ W + b.
    """
    dims = [(D_IN, D_H1), (D_H1, D_H2), (D_H2, D_Z),
            (D_Z, D_H2), (D_H2, D_H1), (D_H1, D_IN)]
    params = []
    for (din, dout) in dims:
        key, kw, kb = jax.random.split(key, 3)
        bound = 1.0 / float(din) ** 0.5
        w = jax.random.uniform(kw, (din, dout), dtype, -bound, bound)
        b = jax.random.uniform(kb, (1, dout), dtype, -bound, bound)
        params.append((w, b))
    return params


def prepare_params(params):
    """Zero-pad to lane-aligned feature dims, cast weights to bf16, and fuse
    fc3->fc4 into a concatenated (128, 256) weight (done once, offline)."""
    (w1, b1), (w2, b2), (w3, b3), (w4, b4), (w5, b5), (w6, b6) = params

    def padw(w, rows, cols):
        r, c = w.shape
        return jnp.pad(w, ((0, rows - r), (0, cols - c))).astype(jnp.bfloat16)

    def padb(b, cols):
        return jnp.pad(b, ((0, 0), (0, cols - b.shape[1]))).astype(jnp.float32)

    # Algebraic fusion: d1_pre = z @ W4 + b4 = h2 @ (W3 @ W4) + (b3 @ W4 + b4).
    w34 = jnp.dot(w3.astype(jnp.float32), w4.astype(jnp.float32))          # (20, 20)
    b4f = jnp.dot(b3.astype(jnp.float32), w4.astype(jnp.float32)) + b4.astype(jnp.float32)

    wcat = jnp.concatenate([padw(w3, D_H2_P, D_Z_P),
                            padw(w34, D_H2_P, D_H2_P)], axis=1)            # (128, 256)
    bcat = jnp.concatenate([padb(b3, D_Z_P), padb(b4f, D_H2_P)], axis=1)   # (1, 256)

    prepared = (
        padw(w1, D_IN, D_H1_P),  padb(b1, D_H1_P),    # fc1: (784, 512) -- no row pad
        padw(w2, D_H1_P, D_H2_P), padb(b2, D_H2_P),   # fc2: (512, 128)
        wcat, bcat,                                   # [fc3 | fc3*fc4]: (128, 256)
        padw(w5, D_H2_P, D_H1_P), padb(b5, D_H1_P),   # fc5: (128, 512)
        padw(w6, D_H1_P, D_IN_P), padb(b6, D_IN_P),   # fc6: (512, 896)
    )
    return jax.tree_util.tree_map(jax.device_put, prepared)


# ---------------------------------------------------------------------------
# Wrapper
# ---------------------------------------------------------------------------
@jax.jit
def vae_forward(x, prepared_params):
    """Matches VAE.forward: returns (x_reconstruction, z)."""
    x2 = x.reshape(-1, D_IN)                 # torch's x.view(-1, 784)
    n = x2.shape[0]

    # Tile selection: as large as possible (<=512, multiple of 16 for bf16
    # sublane packing) to amortize per-step overhead and fill the MXU M dim,
    # but always >=2 grid steps for batches over 128 rows so both v7x
    # TensorCores get work via the "parallel" semantics.
    num_tiles = max(1, _ceil_div(n, MAX_BATCH_TILE))
    if n > 128 and num_tiles < 2:
        num_tiles = 2
    bt = _round_up(_ceil_div(n, num_tiles), 16)
    n_pad = _round_up(n, bt)

    if n_pad != n:
        x2 = jnp.pad(x2, ((0, n_pad - n), (0, 0)))   # batch pad only (zeros)
    grid = (n_pad // bt,)

    # Input read directly as f32 (bt, 784): 784 == full array dim is a legal
    # block; the bf16 cast happens in-kernel, so no wrapper pad/cast round trip.
    in_specs = [pl.BlockSpec((bt, D_IN), lambda i: (i, 0))]
    for p in prepared_params:
        # Full-array weight/bias blocks with a constant index_map: fetched
        # once up front, never re-fetched across grid steps.
        in_specs.append(pl.BlockSpec(p.shape, lambda i: (0, 0)))

    out_shapes = (
        jax.ShapeDtypeStruct((n_pad, D_IN_P), jnp.bfloat16),  # reconstruction (padded, bf16)
        jax.ShapeDtypeStruct((n_pad, D_Z_P), jnp.float32),    # latent z (lane-dense, padded)
    )
    out_specs = [
        pl.BlockSpec((bt, D_IN_P), lambda i: (i, 0)),
        pl.BlockSpec((bt, D_Z_P), lambda i: (i, 0)),
    ]

    xrec_p, z_p = pl.pallas_call(
        _vae_kernel,
        out_shape=out_shapes,
        grid_spec=pltpu.PrefetchScalarGridSpec(
            num_scalar_prefetch=0,
            grid=grid,
            in_specs=in_specs,
            out_specs=out_specs,
        ),
        compiler_params=pltpu.CompilerParams(
            dimension_semantics=("parallel",),
            vmem_limit_bytes=32 * 1024 * 1024,   # raises v5e's 16 MiB default
        ),
    )(x2, *prepared_params)

    # Slice off padding; bf16->f32 cast fuses into the same slice op so the
    # public output dtype matches the PyTorch module (f32).
    return xrec_p[:n, :D_IN].astype(jnp.float32), z_p[:n, :D_Z]


# ---------------------------------------------------------------------------
# Pure-JAX reference: unfused layers, bf16 matmuls with f32 accumulation.
# ---------------------------------------------------------------------------
def _vae_forward_ref(x, params):
    def lin(a, w, b):
        return jnp.dot(a.astype(jnp.bfloat16), w.astype(jnp.bfloat16),
                       preferred_element_type=jnp.float32) + b

    (w1, b1), (w2, b2), (w3, b3), (w4, b4), (w5, b5), (w6, b6) = params
    h = x.reshape(-1, D_IN).astype(jnp.float32)
    h1 = jnp.maximum(lin(h, w1, b1), 0.0)
    h2 = jnp.maximum(lin(h1, w2, b2), 0.0)
    z = lin(h2, w3, b3)
    d1 = jnp.maximum(lin(z, w4, b4), 0.0)
    d2 = jnp.maximum(lin(d1, w5, b5), 0.0)
    xrec = jax.nn.sigmoid(lin(d2, w6, b6))
    return xrec, z


if __name__ == "__main__":
    key = jax.random.PRNGKey(0)
    kp, kx = jax.random.split(key)

    params = init_vae_params(kp)
    prepared = prepare_params(params)

    # Small MNIST-like input: batch=2, NCHW (2, 1, 28, 28) -> view(-1, 784).
    x = jax.random.uniform(kx, (2, 1, 28, 28), jnp.float32)

    xrec, z = vae_forward(x, prepared)
    xrec = jax.block_until_ready(xrec)
    z = jax.block_until_ready(z)

    # Correctness check against the unfused pure-JAX reference.
    xrec_ref, z_ref = _vae_forward_ref(x, params)
    assert xrec.shape == (2, D_IN) and z.shape == (2, D_Z)
    assert jnp.allclose(xrec, xrec_ref, atol=2e-2, rtol=2e-2)
    assert jnp.allclose(z, z_ref, atol=2e-2, rtol=2e-2)

    print("KERNEL_OK")
</pallas_src>

<mosaic_0001>
module attributes {stable_mosaic.version = 11 : i64} {
  func.func @_vae_kernel(%arg0: i32, %arg1: memref<16x784xf32, #tpu.memory_space<vmem>>, %arg2: memref<784x512xbf16, #tpu.memory_space<vmem>>, %arg3: memref<1x512xf32, #tpu.memory_space<vmem>>, %arg4: memref<512x128xbf16, #tpu.memory_space<vmem>>, %arg5: memref<1x128xf32, #tpu.memory_space<vmem>>, %arg6: memref<128x256xbf16, #tpu.memory_space<vmem>>, %arg7: memref<1x256xf32, #tpu.memory_space<vmem>>, %arg8: memref<128x512xbf16, #tpu.memory_space<vmem>>, %arg9: memref<1x512xf32, #tpu.memory_space<vmem>>, %arg10: memref<512x896xbf16, #tpu.memory_space<vmem>>, %arg11: memref<1x896xf32, #tpu.memory_space<vmem>>, %arg12: memref<16x896xbf16, #tpu.memory_space<vmem>>, %arg13: memref<16x128xf32, #tpu.memory_space<vmem>>) attributes {dimension_semantics = [#tpu.dimension_semantics<parallel>], iteration_bounds = array<i64: 1>, scalar_prefetch = 0 : i64, scratch_operands = 0 : i64, tpu.core_type = #tpu.core_type<tc>, window_params = [{transform_indices = @transform_0, window_bounds = array<i64: 16, 784>}, {pipeline_mode = #tpu.pipeline_mode<synchronous>, transform_indices = @transform_1, window_bounds = array<i64: 784, 512>}, {pipeline_mode = #tpu.pipeline_mode<synchronous>, transform_indices = @transform_2, window_bounds = array<i64: 1, 512>}, {pipeline_mode = #tpu.pipeline_mode<synchronous>, transform_indices = @transform_3, window_bounds = array<i64: 512, 128>}, {pipeline_mode = #tpu.pipeline_mode<synchronous>, transform_indices = @transform_4, window_bounds = array<i64: 1, 128>}, {pipeline_mode = #tpu.pipeline_mode<synchronous>, transform_indices = @transform_5, window_bounds = array<i64: 128, 256>}, {pipeline_mode = #tpu.pipeline_mode<synchronous>, transform_indices = @transform_6, window_bounds = array<i64: 1, 256>}, {pipeline_mode = #tpu.pipeline_mode<synchronous>, transform_indices = @transform_7, window_bounds = array<i64: 128, 512>}, {pipeline_mode = #tpu.pipeline_mode<synchronous>, transform_indices = @transform_8, window_bounds = array<i64: 1, 512>}, {pipeline_mode = #tpu.pipeline_mode<synchronous>, transform_indices = @transform_9, window_bounds = array<i64: 512, 896>}, {pipeline_mode = #tpu.pipeline_mode<synchronous>, transform_indices = @transform_10, window_bounds = array<i64: 1, 896>}, {transform_indices = @transform_11, window_bounds = array<i64: 16, 896>}, {transform_indices = @transform_12, window_bounds = array<i64: 16, 128>}]} {
    %c0 = arith.constant 0 : index
    %c0_0 = arith.constant 0 : index
    %0 = vector.load %arg1[%c0, %c0_0] : memref<16x784xf32, #tpu.memory_space<vmem>>, vector<16x784xf32>
    %1 = arith.truncf %0 : vector<16x784xf32> to vector<16x784xbf16>
    %c0_1 = arith.constant 0 : index
    %c0_2 = arith.constant 0 : index
    %2 = vector.load %arg2[%c0_1, %c0_2] : memref<784x512xbf16, #tpu.memory_space<vmem>>, vector<784x512xbf16>
    %cst = arith.constant dense<0.000000e+00> : vector<16x512xf32>
    %3 = tpu.matmul %1, %2, %cst {dimension_numbers = #tpu.dot_dimension_numbers<[1], [0], [0], [1], [0, 0, 1, 1], [], []>} : vector<16x784xbf16>, vector<784x512xbf16>, vector<16x512xf32> -> vector<16x512xf32>
    %c0_3 = arith.constant 0 : index
    %c0_4 = arith.constant 0 : index
    %4 = vector.load %arg3[%c0_3, %c0_4] : memref<1x512xf32, #tpu.memory_space<vmem>>, vector<1x512xf32>
    %5 = vector.broadcast %4 : vector<1x512xf32> to vector<16x512xf32>
    %6 = arith.addf %3, %5 : vector<16x512xf32>
    %cst_5 = arith.constant 0.000000e+00 : f32
    %7 = vector.broadcast %cst_5 : f32 to vector<16x512xf32>
    %8 = arith.maximumf %6, %7 : vector<16x512xf32>
    %9 = arith.truncf %8 : vector<16x512xf32> to vector<16x512xbf16>
    %c0_6 = arith.constant 0 : index
    %c0_7 = arith.constant 0 : index
    %10 = vector.load %arg4[%c0_6, %c0_7] : memref<512x128xbf16, #tpu.memory_space<vmem>>, vector<512x128xbf16>
    %cst_8 = arith.constant dense<0.000000e+00> : vector<16x128xf32>
    %11 = tpu.matmul %9, %10, %cst_8 {dimension_numbers = #tpu.dot_dimension_numbers<[1], [0], [0], [1], [0, 0, 1, 1], [], []>} : vector<16x512xbf16>, vector<512x128xbf16>, vector<16x128xf32> -> vector<16x128xf32>
    %c0_9 = arith.constant 0 : index
    %c0_10 = arith.constant 0 : index
    %12 = vector.load %arg5[%c0_9, %c0_10] : memref<1x128xf32, #tpu.memory_space<vmem>>, vector<1x128xf32>
    %13 = vector.broadcast %12 : vector<1x128xf32> to vector<16x128xf32>
    %14 = arith.addf %11, %13 : vector<16x128xf32>
    %cst_11 = arith.constant 0.000000e+00 : f32
    %15 = vector.broadcast %cst_11 : f32 to vector<16x128xf32>
    %16 = arith.maximumf %14, %15 : vector<16x128xf32>
    %17 = arith.truncf %16 : vector<16x128xf32> to vector<16x128xbf16>
    %c0_12 = arith.constant 0 : index
    %c0_13 = arith.constant 0 : index
    %18 = vector.load %arg6[%c0_12, %c0_13] : memref<128x256xbf16, #tpu.memory_space<vmem>>, vector<128x256xbf16>
    %cst_14 = arith.constant dense<0.000000e+00> : vector<16x256xf32>
    %19 = tpu.matmul %17, %18, %cst_14 {dimension_numbers = #tpu.dot_dimension_numbers<[1], [0], [0], [1], [0, 0, 1, 1], [], []>} : vector<16x128xbf16>, vector<128x256xbf16>, vector<16x256xf32> -> vector<16x256xf32>
    %c0_15 = arith.constant 0 : index
    %c0_16 = arith.constant 0 : index
    %20 = vector.load %arg7[%c0_15, %c0_16] : memref<1x256xf32, #tpu.memory_space<vmem>>, vector<1x256xf32>
    %21 = vector.broadcast %20 : vector<1x256xf32> to vector<16x256xf32>
    %22 = arith.addf %19, %21 : vector<16x256xf32>
    %23 = vector.extract_strided_slice %22 {offsets = [0, 0], sizes = [16, 128], strides = [1, 1]} : vector<16x256xf32> to vector<16x128xf32>
    %24 = vector.extract_strided_slice %22 {offsets = [0, 128], sizes = [16, 128], strides = [1, 1]} : vector<16x256xf32> to vector<16x128xf32>
    %cst_17 = arith.constant 0.000000e+00 : f32
    %25 = vector.broadcast %cst_17 : f32 to vector<16x128xf32>
    %26 = arith.maximumf %24, %25 : vector<16x128xf32>
    %27 = arith.truncf %26 : vector<16x128xf32> to vector<16x128xbf16>
    %c0_18 = arith.constant 0 : index
    %c0_19 = arith.constant 0 : index
    %28 = vector.load %arg8[%c0_18, %c0_19] : memref<128x512xbf16, #tpu.memory_space<vmem>>, vector<128x512xbf16>
    %cst_20 = arith.constant dense<0.000000e+00> : vector<16x512xf32>
    %29 = tpu.matmul %27, %28, %cst_20 {dimension_numbers = #tpu.dot_dimension_numbers<[1], [0], [0], [1], [0, 0, 1, 1], [], []>} : vector<16x128xbf16>, vector<128x512xbf16>, vector<16x512xf32> -> vector<16x512xf32>
    %c0_21 = arith.constant 0 : index
    %c0_22 = arith.constant 0 : index
    %30 = vector.load %arg9[%c0_21, %c0_22] : memref<1x512xf32, #tpu.memory_space<vmem>>, vector<1x512xf32>
    %31 = vector.broadcast %30 : vector<1x512xf32> to vector<16x512xf32>
    %32 = arith.addf %29, %31 : vector<16x512xf32>
    %cst_23 = arith.constant 0.000000e+00 : f32
    %33 = vector.broadcast %cst_23 : f32 to vector<16x512xf32>
    %34 = arith.maximumf %32, %33 : vector<16x512xf32>
    %35 = arith.truncf %34 : vector<16x512xf32> to vector<16x512xbf16>
    %c0_24 = arith.constant 0 : index
    %c0_25 = arith.constant 0 : index
    %36 = vector.load %arg10[%c0_24, %c0_25] : memref<512x896xbf16, #tpu.memory_space<vmem>>, vector<512x896xbf16>
    %cst_26 = arith.constant dense<0.000000e+00> : vector<16x896xf32>
    %37 = tpu.matmul %35, %36, %cst_26 {dimension_numbers = #tpu.dot_dimension_numbers<[1], [0], [0], [1], [0, 0, 1, 1], [], []>} : vector<16x512xbf16>, vector<512x896xbf16>, vector<16x896xf32> -> vector<16x896xf32>
    %c0_27 = arith.constant 0 : index
    %c0_28 = arith.constant 0 : index
    %38 = vector.load %arg11[%c0_27, %c0_28] : memref<1x896xf32, #tpu.memory_space<vmem>>, vector<1x896xf32>
    %39 = vector.broadcast %38 : vector<1x896xf32> to vector<16x896xf32>
    %40 = arith.addf %37, %39 : vector<16x896xf32>
    %cst_29 = arith.constant 5.000000e-01 : f32
    %41 = vector.broadcast %cst_29 : f32 to vector<16x896xf32>
    %42 = arith.mulf %41, %40 : vector<16x896xf32>
    %43 = math.tanh %42 : vector<16x896xf32>
    %cst_30 = arith.constant 5.000000e-01 : f32
    %44 = vector.broadcast %cst_30 : f32 to vector<16x896xf32>
    %45 = arith.mulf %44, %43 : vector<16x896xf32>
    %cst_31 = arith.constant 5.000000e-01 : f32
    %46 = vector.broadcast %cst_31 : f32 to vector<16x896xf32>
    %47 = arith.addf %45, %46 : vector<16x896xf32>
    %48 = arith.truncf %47 : vector<16x896xf32> to vector<16x896xbf16>
    %c0_32 = arith.constant 0 : index
    %c0_33 = arith.constant 0 : index
    %49 = vector.load %arg12[%c0_32, %c0_33] : memref<16x896xbf16, #tpu.memory_space<vmem>>, vector<16x896xbf16>
    tpu.vector_store %arg12[%c0_32, %c0_33], %48 {strides = array<i32>} : memref<16x896xbf16, #tpu.memory_space<vmem>>, vector<16x896xbf16>,
    %c0_34 = arith.constant 0 : index
    %c0_35 = arith.constant 0 : index
    %50 = vector.load %arg13[%c0_34, %c0_35] : memref<16x128xf32, #tpu.memory_space<vmem>>, vector<16x128xf32>
    tpu.vector_store %arg13[%c0_34, %c0_35], %23 {strides = array<i32>} : memref<16x128xf32, #tpu.memory_space<vmem>>, vector<16x128xf32>,
    return
  }
  func.func @transform_0(%arg0: i32) -> (i32, i32) {
    %c0_i32 = arith.constant 0 : i32
    %c0_i32_0 = arith.constant 0 : i32
    return %arg0, %c0_i32 : i32, i32
  }
  func.func @transform_1(%arg0: i32) -> (i32, i32) {
    %c0_i32 = arith.constant 0 : i32
    %c0_i32_0 = arith.constant 0 : i32
    %c0_i32_1 = arith.constant 0 : i32
    return %c0_i32, %c0_i32_0 : i32, i32
  }
  func.func @transform_2(%arg0: i32) -> (i32, i32) {
    %c0_i32 = arith.constant 0 : i32
    %c0_i32_0 = arith.constant 0 : i32
    %c0_i32_1 = arith.constant 0 : i32
    return %c0_i32, %c0_i32_0 : i32, i32
  }
  func.func @transform_3(%arg0: i32) -> (i32, i32) {
    %c0_i32 = arith.constant 0 : i32
    %c0_i32_0 = arith.constant 0 : i32
    %c0_i32_1 = arith.constant 0 : i32
    return %c0_i32, %c0_i32_0 : i32, i32
  }
  func.func @transform_4(%arg0: i32) -> (i32, i32) {
    %c0_i32 = arith.constant 0 : i32
    %c0_i32_0 = arith.constant 0 : i32
    %c0_i32_1 = arith.constant 0 : i32
    return %c0_i32, %c0_i32_0 : i32, i32
  }
  func.func @transform_5(%arg0: i32) -> (i32, i32) {
    %c0_i32 = arith.constant 0 : i32
    %c0_i32_0 = arith.constant 0 : i32
    %c0_i32_1 = arith.constant 0 : i32
    return %c0_i32, %c0_i32_0 : i32, i32
  }
  func.func @transform_6(%arg0: i32) -> (i32, i32) {
    %c0_i32 = arith.constant 0 : i32
    %c0_i32_0 = arith.constant 0 : i32
    %c0_i32_1 = arith.constant 0 : i32
    return %c0_i32, %c0_i32_0 : i32, i32
  }
  func.func @transform_7(%arg0: i32) -> (i32, i32) {
    %c0_i32 = arith.constant 0 : i32
    %c0_i32_0 = arith.constant 0 : i32
    %c0_i32_1 = arith.constant 0 : i32
    return %c0_i32, %c0_i32_0 : i32, i32
  }
  func.func @transform_8(%arg0: i32) -> (i32, i32) {
    %c0_i32 = arith.constant 0 : i32
    %c0_i32_0 = arith.constant 0 : i32
    %c0_i32_1 = arith.constant 0 : i32
    return %c0_i32, %c0_i32_0 : i32, i32
  }
  func.func @transform_9(%arg0: i32) -> (i32, i32) {
    %c0_i32 = arith.constant 0 : i32
    %c0_i32_0 = arith.constant 0 : i32
    %c0_i32_1 = arith.constant 0 : i32
    return %c0_i32, %c0_i32_0 : i32, i32
  }
  func.func @transform_10(%arg0: i32) -> (i32, i32) {
    %c0_i32 = arith.constant 0 : i32
    %c0_i32_0 = arith.constant 0 : i32
    %c0_i32_1 = arith.constant 0 : i32
    return %c0_i32, %c0_i32_0 : i32, i32
  }
  func.func @transform_11(%arg0: i32) -> (i32, i32) {
    %c0_i32 = arith.constant 0 : i32
    %c0_i32_0 = arith.constant 0 : i32
    return %arg0, %c0_i32 : i32, i32
  }
  func.func @transform_12(%arg0: i32) -> (i32, i32) {
    %c0_i32 = arith.constant 0 : i32
    %c0_i32_0 = arith.constant 0 : i32
    return %arg0, %c0_i32 : i32, i32
  }
}

</mosaic_0001>

<llo_original>
// kernel: vae_forward.1
$region0: #{vae_forward.1}
  #allocation0 [shape = 'u32[]', space=smem, size = 0x4, offset = 0x4, fixed_abs, tag = 'smem constant byte address 0x4 - core index']
  #allocation1 [shape = 'u32[72,128]{1,0:T(1,128)}', space=vmem, size = 0x9000, scoped, tag = 'internal scratch']
  %s0 = inlined_call_operand.vmem [shape: f32[16,784], index: 0, kind: input, shape index: {}]
  %s1 = inlined_call_operand.hbm [shape: bf16[784,512], index: 1, kind: input, shape index: {}]
  %s2 = inlined_call_operand.vmem [shape: f32[1,512], index: 2, kind: input, shape index: {}]
  %s3 = inlined_call_operand.vmem [shape: bf16[512,128], index: 3, kind: input, shape index: {}]
  %s4 = inlined_call_operand.vmem [shape: f32[1,128], index: 4, kind: input, shape index: {}]
  %s5 = inlined_call_operand.hbm [shape: bf16[128,256], index: 5, kind: input, shape index: {}]
  %s6 = inlined_call_operand.vmem [shape: f32[1,256], index: 6, kind: input, shape index: {}]
  %s7 = inlined_call_operand.hbm [shape: bf16[128,512], index: 7, kind: input, shape index: {}]
  %s8 = inlined_call_operand.vmem [shape: f32[1,512], index: 8, kind: input, shape index: {}]
  %s9 = inlined_call_operand.hbm [shape: bf16[512,896], index: 9, kind: input, shape index: {}]
  %s10 = inlined_call_operand.vmem [shape: f32[1,896], index: 10, kind: input, shape index: {}]
  %s11 = inlined_call_operand.vmem [shape: bf16[16,896], index: 11, kind: output, shape index: {0}]
  %s12 = inlined_call_operand.vmem [shape: f32[16,128], index: 12, kind: output, shape index: {1}]
  %13 = xla_tuple %s11, %s12
  %s14 = sld [smem:[#allocation0]]
  $region78: #{vae_forward.1} parent=0
    _
  %s16 = ssub.s32 1, %s14
  %s17 = scalar_select 0, %s16, %s14
  $region1: #{vae_forward.1} parent=0
    #allocation2 [shape = 'u8[802816]{0}', space=vmem, size = 0xc4000, scoped, tag = 'input window, operand 1, single buffered']
    #allocation3 [shape = 's32[1]{0}', space=sflag, size = 0x4, scoped, tag = 'scoped memory for vae_forward.1']
    #allocation4 [shape = 'u8[65536]{0}', space=vmem, size = 0x10000, scoped, tag = 'input window, operand 5, single buffered']
    #allocation5 [shape = 's32[1]{0}', space=sflag, size = 0x4, scoped, tag = 'scoped memory for vae_forward.1']
    #allocation6 [shape = 'u8[131072]{0}', space=vmem, size = 0x20000, scoped, tag = 'input window, operand 7, single buffered']
    #allocation7 [shape = 'u8[917504]{0}', space=vmem, size = 0xe0000, scoped, tag = 'input window, operand 9, single buffered']
    #allocation8 [shape = 's32[1]{0}', space=sflag, size = 0x4, scoped, tag = 'scoped memory for vae_forward.1']
    %18 = vsyncpa [#allocation3], 0
    %19 = vsyncpa [#allocation5], 0
    %20 = vsyncpa [#allocation8], 0
    // Predicated region
    $region2: #{vae_forward.1} parent=1 // pred_check
      _
    $region3: #{vae_forward.1} parent=1 // pred_check_branch
      %22 = sbr.rel (0) target = $region5
    $region4: #{vae_forward.1} parent=1 // pred_region
      _
    $region5: #{vae_forward.1} parent=1 // pred_fallthru
      _
    // Predicated region
    $region6: #{vae_forward.1} parent=1 // pred_check
      _
    $region7: #{vae_forward.1} parent=1 // pred_check_branch
      %24 = sbr.rel (0) target = $region9
    $region8: #{vae_forward.1} parent=1 // pred_region
      %26 = vsyncadd [#allocation3], 0
      %s27 = sshll.u32 %s1, 4
      %s28 = int_to_ptr.hbm [resolvable:$true] %s27
      %s29 = sshll.u32 [#allocation2], 4
      %s30 = int_to_ptr.vmem [resolvable:$true] %s29
      %35 = dma.hbm_to_vmem [thread:$0]  %s28, 25088, %s30, [#allocation3], 256, 256, 16
    $region9: #{vae_forward.1} parent=1 // pred_fallthru
      _
    // Predicated region
    $region10: #{vae_forward.1} parent=1 // pred_check
      _
    $region11: #{vae_forward.1} parent=1 // pred_check_branch
      %37 = sbr.rel (0) target = $region13
    $region12: #{vae_forward.1} parent=1 // pred_region
      _
    $region13: #{vae_forward.1} parent=1 // pred_fallthru
      _
    // Predicated region
    $region14: #{vae_forward.1} parent=1 // pred_check
      _
    $region15: #{vae_forward.1} parent=1 // pred_check_branch
      %39 = sbr.rel (0) target = $region17
    $region16: #{vae_forward.1} parent=1 // pred_region
      _
    $region17: #{vae_forward.1} parent=1 // pred_fallthru
      _
    // Predicated region
    $region18: #{vae_forward.1} parent=1 // pred_check
      _
    $region19: #{vae_forward.1} parent=1 // pred_check_branch
      %41 = sbr.rel (0) target = $region21
    $region20: #{vae_forward.1} parent=1 // pred_region
      _
    $region21: #{vae_forward.1} parent=1 // pred_fallthru
      _
    // Predicated region
    $region22: #{vae_forward.1} parent=1 // pred_check
      _
    $region23: #{vae_forward.1} parent=1 // pred_check_branch
      %43 = sbr.rel (0) target = $region25
    $region24: #{vae_forward.1} parent=1 // pred_region
      %45 = vsyncadd [#allocation5], 0
      %s46 = sshll.u32 %s5, 4
      %s47 = int_to_ptr.hbm [resolvable:$true] %s46
      %s48 = sshll.u32 [#allocation4], 4
      %s49 = int_to_ptr.vmem [resolvable:$true] %s48
      %54 = dma.hbm_to_vmem [thread:$0]  %s47, 2048, %s49, [#allocation5], 128, 128, 8
    $region25: #{vae_forward.1} parent=1 // pred_fallthru
      _
    // Predicated region
    $region26: #{vae_forward.1} parent=1 // pred_check
      _
    $region27: #{vae_forward.1} parent=1 // pred_check_branch
      %56 = sbr.rel (0) target = $region29
    $region28: #{vae_forward.1} parent=1 // pred_region
      _
    $region29: #{vae_forward.1} parent=1 // pred_fallthru
      _
    // Predicated region
    $region30: #{vae_forward.1} parent=1 // pred_check
      _
    $region31: #{vae_forward.1} parent=1 // pred_check_branch
      %58 = sbr.rel (0) target = $region33
    $region32: #{vae_forward.1} parent=1 // pred_region
      %60 = vsyncadd [#allocation5], 0
      %s61 = sshll.u32 %s7, 4
      %s62 = int_to_ptr.hbm [resolvable:$true] %s61
      %s63 = sshll.u32 [#allocation6], 4
      %s64 = int_to_ptr.vmem [resolvable:$true] %s63
      %69 = dma.hbm_to_vmem [thread:$0]  %s62, 4096, %s64, [#allocation5], 256, 256, 16
    $region33: #{vae_forward.1} parent=1 // pred_fallthru
      _
    // Predicated region
    $region34: #{vae_forward.1} parent=1 // pred_check
      _
    $region35: #{vae_forward.1} parent=1 // pred_check_branch
      %71 = sbr.rel (0) target = $region37
    $region36: #{vae_forward.1} parent=1 // pred_region
      _
    $region37: #{vae_forward.1} parent=1 // pred_fallthru
      _
    // Predicated region
    $region38: #{vae_forward.1} parent=1 // pred_check
      _
    $region39: #{vae_forward.1} parent=1 // pred_check_branch
      %73 = sbr.rel (0) target = $region41
    $region40: #{vae_forward.1} parent=1 // pred_region
      %75 = vsyncadd [#allocation8], 0
      %s76 = sshll.u32 %s9, 4
      %s77 = int_to_ptr.hbm [resolvable:$true] %s76
      %s78 = sshll.u32 [#allocation7], 4
      %s79 = int_to_ptr.vmem [resolvable:$true] %s78
      %84 = dma.hbm_to_vmem [thread:$0]  %s77, 28672, %s79, [#allocation8], 448, 448, 28
    $region41: #{vae_forward.1} parent=1 // pred_fallthru
      _
    // Predicated region
    $region42: #{vae_forward.1} parent=1 // pred_check
      _
    $region43: #{vae_forward.1} parent=1 // pred_check_branch
      %86 = sbr.rel (0) target = $region45
    $region44: #{vae_forward.1} parent=1 // pred_region
      _
    $region45: #{vae_forward.1} parent=1 // pred_fallthru
      _
    // Predicated region
    $region46: #{vae_forward.1} parent=1 // pred_check
      _
    $region47: #{vae_forward.1} parent=1 // pred_check_branch
      %88 = sbr.rel (0) target = $region49
    $region48: #{vae_forward.1} parent=1 // pred_region
      %90 = dma.done [#allocation3], 25088
    $region49: #{vae_forward.1} parent=1 // pred_fallthru
      _
    // Predicated region
    $region50: #{vae_forward.1} parent=1 // pred_check
      _
    $region51: #{vae_forward.1} parent=1 // pred_check_branch
      %92 = sbr.rel (0) target = $region53
    $region52: #{vae_forward.1} parent=1 // pred_region
      %94 = dma.done [#allocation5], 2048
    $region53: #{vae_forward.1} parent=1 // pred_fallthru
      _
    // Predicated region
    $region54: #{vae_forward.1} parent=1 // pred_check
      _
    $region55: #{vae_forward.1} parent=1 // pred_check_branch
      %96 = sbr.rel (0) target = $region57
    $region56: #{vae_forward.1} parent=1 // pred_region
      %98 = dma.done [#allocation5], 4096
    $region57: #{vae_forward.1} parent=1 // pred_fallthru
      _
    // Predicated region
    $region58: #{vae_forward.1} parent=1 // pred_check
      _
    $region59: #{vae_forward.1} parent=1 // pred_check_branch
      %100 = sbr.rel (0) target = $region61
    $region60: #{vae_forward.1} parent=1 // pred_region
      %102 = dma.done [#allocation8], 28672
    $region61: #{vae_forward.1} parent=1 // pred_fallthru
      _
    %v104 = vld [vmem:[%s0] sm:$0xff]
    %v105 = vld [vmem:[%s0 + $0x8] sm:$0xff]
    %v106 = vld [vmem:[%s0 + $0x10] sm:$0xff]
    %v107 = vld [vmem:[%s0 + $0x18] sm:$0xff]
    %v108 = vld [vmem:[%s0 + $0x20] sm:$0xff]
    %v109 = vld [vmem:[%s0 + $0x28] sm:$0xff]
    %v110 = vld [vmem:[%s0 + $0x30] sm:$0xff]
    %v111 = vld [vmem:[%s0 + $0x38] sm:$0xff]
    %v112 = vld [vmem:[%s0 + $0x40] sm:$0xff]
    %v113 = vld [vmem:[%s0 + $0x48] sm:$0xff]
    %v114 = vld [vmem:[%s0 + $0x50] sm:$0xff]
    %v115 = vld [vmem:[%s0 + $0x58] sm:$0xff]
    %v116 = vld [vmem:[%s0 + $0x60] sm:$0xff]
    %v117 = vld [vmem:[%s0 + $0x68] sm:$0xff]
    %v118 = vpack.c.bf16 %v111, %v104
    %v119 = vpack.c.bf16 %v112, %v105
    %v120 = vpack.c.bf16 %v113, %v106
    %v121 = vpack.c.bf16 %v114, %v107
    %v122 = vpack.c.bf16 %v115, %v108
    %v123 = vpack.c.bf16 %v116, %v109
    %v124 = vpack.c.bf16 %v117, %v110
    %v125 = vld [vmem:[#allocation2] sm:$0xff]
    %v126 = vld [vmem:[#allocation2 + $0x8] sm:$0xff]
    %v127 = vld [vmem:[#allocation2 + $0x10] sm:$0xff]
    %v128 = vld [vmem:[#allocation2 + $0x18] sm:$0xff]
    %v129 = vld [vmem:[#allocation2 + $0x20] sm:$0xff]
    %v130 = vld [vmem:[#allocation2 + $0x28] sm:$0xff]
    %v131 = vld [vmem:[#allocation2 + $0x30] sm:$0xff]
    %v132 = vld [vmem:[#allocation2 + $0x38] sm:$0xff]
    %v133 = vld [vmem:[#allocation2 + $0x40] sm:$0xff]
    %v134 = vld [vmem:[#allocation2 + $0x48] sm:$0xff]
    %v135 = vld [vmem:[#allocation2 + $0x50] sm:$0xff]
    %v136 = vld [vmem:[#allocation2 + $0x58] sm:$0xff]
    %v137 = vld [vmem:[#allocation2 + $0x60] sm:$0xff]
    %v138 = vld [vmem:[#allocation2 + $0x68] sm:$0xff]
    %v139 = vld [vmem:[#allocation2 + $0x70] sm:$0xff]
    %v140 = vld [vmem:[#allocation2 + $0x78] sm:$0xff]
    %v141 = vld [vmem:[#allocation2 + $0x80] sm:$0xff]
    %v142 = vld [vmem:[#allocation2 + $0x88] sm:$0xff]
    %v143 = vld [vmem:[#allocation2 + $0x90] sm:$0xff]
    %v144 = vld [vmem:[#allocation2 + $0x98] sm:$0xff]
    %v145 = vld [vmem:[#allocation2 + $0xa0] sm:$0xff]
    %v146 = vld [vmem:[#allocation2 + $0xa8] sm:$0xff]
    %v147 = vld [vmem:[#allocation2 + $0xb0] sm:$0xff]
    %v148 = vld [vmem:[#allocation2 + $0xb8] sm:$0xff]
    %v149 = vld [vmem:[#allocation2 + $0xc0] sm:$0xff]
    %v150 = vld [vmem:[#allocation2 + $0xc8] sm:$0xff]
    %v151 = vld [vmem:[#allocation2 + $0xd0] sm:$0xff]
    %v152 = vld [vmem:[#allocation2 + $0xd8] sm:$0xff]
    %v153 = vld [vmem:[#allocation2 + $0xe0] sm:$0xff]
    %v154 = vld [vmem:[#allocation2 + $0xe8] sm:$0xff]
    %v155 = vld [vmem:[#allocation2 + $0xf0] sm:$0xff]
    %v156 = vld [vmem:[#allocation2 + $0xf8] sm:$0xff]
    %v157 = vld [vmem:[#allocation2 + $0x100] sm:$0xff]
    %v158 = vld [vmem:[#allocation2 + $0x108] sm:$0xff]
    %v159 = vld [vmem:[#allocation2 + $0x110] sm:$0xff]
    %v160 = vld [vmem:[#allocation2 + $0x118] sm:$0xff]
    %v161 = vld [vmem:[#allocation2 + $0x120] sm:$0xff]
    %v162 = vld [vmem:[#allocation2 + $0x128] sm:$0xff]
    %v163 = vld [vmem:[#allocation2 + $0x130] sm:$0xff]
    %v164 = vld [vmem:[#allocation2 + $0x138] sm:$0xff]
    %v165 = vld [vmem:[#allocation2 + $0x140] sm:$0xff]
    %v166 = vld [vmem:[#allocation2 + $0x148] sm:$0xff]
    %v167 = vld [vmem:[#allocation2 + $0x150] sm:$0xff]
    %v168 = vld [vmem:[#allocation2 + $0x158] sm:$0xff]
    %v169 = vld [vmem:[#allocation2 + $0x160] sm:$0xff]
    %v170 = vld [vmem:[#allocation2 + $0x168] sm:$0xff]
    %v171 = vld [vmem:[#allocation2 + $0x170] sm:$0xff]
    %v172 = vld [vmem:[#allocation2 + $0x178] sm:$0xff]
    %v173 = vld [vmem:[#allocation2 + $0x180] sm:$0xff]
    %v174 = vld [vmem:[#allocation2 + $0x188] sm:$0xff]
    %v175 = vld [vmem:[#allocation2 + $0x190] sm:$0xff]
    %v176 = vld [vmem:[#allocation2 + $0x198] sm:$0xff]
    %v177 = vld [vmem:[#allocation2 + $0x1a0] sm:$0xff]
    %v178 = vld [vmem:[#allocation2 + $0x1a8] sm:$0xff]
    %v179 = vld [vmem:[#allocation2 + $0x1b0] sm:$0xff]
    %v180 = vld [vmem:[#allocation2 + $0x1b8] sm:$0xff]
    %v181 = vld [vmem:[#allocation2 + $0x1c0] sm:$0xff]
    %v182 = vld [vmem:[#allocation2 + $0x1c8] sm:$0xff]
    %v183 = vld [vmem:[#allocation2 + $0x1d0] sm:$0xff]
    %v184 = vld [vmem:[#allocation2 + $0x1d8] sm:$0xff]
    %v185 = vld [vmem:[#allocation2 + $0x1e0] sm:$0xff]
    %v186 = vld [vmem:[#allocation2 + $0x1e8] sm:$0xff]
    %v187 = vld [vmem:[#allocation2 + $0x1f0] sm:$0xff]
    %v188 = vld [vmem:[#allocation2 + $0x1f8] sm:$0xff]
    %v189 = vld [vmem:[#allocation2 + $0x200] sm:$0xff]
    %v190 = vld [vmem:[#allocation2 + $0x208] sm:$0xff]
    %v191 = vld [vmem:[#allocation2 + $0x210] sm:$0xff]
    %v192 = vld [vmem:[#allocation2 + $0x218] sm:$0xff]
    %v193 = vld [vmem:[#allocation2 + $0x220] sm:$0xff]
    %v194 = vld [vmem:[#allocation2 + $0x228] sm:$0xff]
    %v195 = vld [vmem:[#allocation2 + $0x230] sm:$0xff]
    %v196 = vld [vmem:[#allocation2 + $0x238] sm:$0xff]
    %v197 = vld [vmem:[#allocation2 + $0x240] sm:$0xff]
    %v198 = vld [vmem:[#allocation2 + $0x248] sm:$0xff]
    %v199 = vld [vmem:[#allocation2 + $0x250] sm:$0xff]
    %v200 = vld [vmem:[#allocation2 + $0x258] sm:$0xff]
    %v201 = vld [vmem:[#allocation2 + $0x260] sm:$0xff]
    %v202 = vld [vmem:[#allocation2 + $0x268] sm:$0xff]
    %v203 = vld [vmem:[#allocation2 + $0x270] sm:$0xff]
    %v204 = vld [vmem:[#allocation2 + $0x278] sm:$0xff]
    %v205 = vld [vmem:[#allocation2 + $0x280] sm:$0xff]
    %v206 = vld [vmem:[#allocation2 + $0x288] sm:$0xff]
    %v207 = vld [vmem:[#allocation2 + $0x290] sm:$0xff]
    %v208 = vld [vmem:[#allocation2 + $0x298] sm:$0xff]
    %v209 = vld [vmem:[#allocation2 + $0x2a0] sm:$0xff]
    %v210 = vld [vmem:[#allocation2 + $0x2a8] sm:$0xff]
    %v211 = vld [vmem:[#allocation2 + $0x2b0] sm:$0xff]
    %v212 = vld [vmem:[#allocation2 + $0x2b8] sm:$0xff]
    %v213 = vld [vmem:[#allocation2 + $0x2c0] sm:$0xff]
    %v214 = vld [vmem:[#allocation2 + $0x2c8] sm:$0xff]
    %v215 = vld [vmem:[#allocation2 + $0x2d0] sm:$0xff]
    %v216 = vld [vmem:[#allocation2 + $0x2d8] sm:$0xff]
    %v217 = vld [vmem:[#allocation2 + $0x2e0] sm:$0xff]
    %v218 = vld [vmem:[#allocation2 + $0x2e8] sm:$0xff]
    %v219 = vld [vmem:[#allocation2 + $0x2f0] sm:$0xff]
    %v220 = vld [vmem:[#allocation2 + $0x2f8] sm:$0xff]
    %v221 = vld [vmem:[#allocation2 + $0x300] sm:$0xff]
    %v222 = vld [vmem:[#allocation2 + $0x308] sm:$0xff]
    %v223 = vld [vmem:[#allocation2 + $0x310] sm:$0xff]
    %v224 = vld [vmem:[#allocation2 + $0x318] sm:$0xff]
    %v225 = vld [vmem:[#allocation2 + $0x320] sm:$0xff]
    %v226 = vld [vmem:[#allocation2 + $0x328] sm:$0xff]
    %v227 = vld [vmem:[#allocation2 + $0x330] sm:$0xff]
    %v228 = vld [vmem:[#allocation2 + $0x338] sm:$0xff]
    %v229 = vld [vmem:[#allocation2 + $0x340] sm:$0xff]
    %v230 = vld [vmem:[#allocation2 + $0x348] sm:$0xff]
    %v231 = vld [vmem:[#allocation2 + $0x350] sm:$0xff]
    %v232 = vld [vmem:[#allocation2 + $0x358] sm:$0xff]
    %v233 = vld [vmem:[#allocation2 + $0x360] sm:$0xff]
    %v234 = vld [vmem:[#allocation2 + $0x368] sm:$0xff]
    %v235 = vld [vmem:[#allocation2 + $0x370] sm:$0xff]
    %v236 = vld [vmem:[#allocation2 + $0x378] sm:$0xff]
    %v237 = vld [vmem:[#allocation2 + $0x380] sm:$0xff]
    %v238 = vld [vmem:[#allocation2 + $0x388] sm:$0xff]
    %v239 = vld [vmem:[#allocation2 + $0x390] sm:$0xff]
    %v240 = vld [vmem:[#allocation2 + $0x398] sm:$0xff]
    %v241 = vld [vmem:[#allocation2 + $0x3a0] sm:$0xff]
    %v242 = vld [vmem:[#allocation2 + $0x3a8] sm:$0xff]
    %v243 = vld [vmem:[#allocation2 + $0x3b0] sm:$0xff]
    %v244 = vld [vmem:[#allocation2 + $0x3b8] sm:$0xff]
    %v245 = vld [vmem:[#allocation2 + $0x3c0] sm:$0xff]
    %v246 = vld [vmem:[#allocation2 + $0x3c8] sm:$0xff]
    %v247 = vld [vmem:[#allocation2 + $0x3d0] sm:$0xff]
    %v248 = vld [vmem:[#allocation2 + $0x3d8] sm:$0xff]
    %v249 = vld [vmem:[#allocation2 + $0x3e0] sm:$0xff]
    %v250 = vld [vmem:[#allocation2 + $0x3e8] sm:$0xff]
    %v251 = vld [vmem:[#allocation2 + $0x3f0] sm:$0xff]
    %v252 = vld [vmem:[#allocation2 + $0x3f8] sm:$0xff]
    %v253 = vld [vmem:[#allocation2 + $0x400] sm:$0xff]
    %v254 = vld [vmem:[#allocation2 + $0x408] sm:$0xff]
    %v255 = vld [vmem:[#allocation2 + $0x410] sm:$0xff]
    %v256 = vld [vmem:[#allocation2 + $0x418] sm:$0xff]
    %v257 = vld [vmem:[#allocation2 + $0x420] sm:$0xff]
    %v258 = vld [vmem:[#allocation2 + $0x428] sm:$0xff]
    %v259 = vld [vmem:[#allocation2 + $0x430] sm:$0xff]
    %v260 = vld [vmem:[#allocation2 + $0x438] sm:$0xff]
    %v261 = vld [vmem:[#allocation2 + $0x440] sm:$0xff]
    %v262 = vld [vmem:[#allocation2 + $0x448] sm:$0xff]
    %v263 = vld [vmem:[#allocation2 + $0x450] sm:$0xff]
    %v264 = vld [vmem:[#allocation2 + $0x458] sm:$0xff]
    %v265 = vld [vmem:[#allocation2 + $0x460] sm:$0xff]
    %v266 = vld [vmem:[#allocation2 + $0x468] sm:$0xff]
    %v267 = vld [vmem:[#allocation2 + $0x470] sm:$0xff]
    %v268 = vld [vmem:[#allocation2 + $0x478] sm:$0xff]
    %v269 = vld [vmem:[#allocation2 + $0x480] sm:$0xff]
    %v270 = vld [vmem:[#allocation2 + $0x488] sm:$0xff]
    %v271 = vld [vmem:[#allocation2 + $0x490] sm:$0xff]
    %v272 = vld [vmem:[#allocation2 + $0x498] sm:$0xff]
    %v273 = vld [vmem:[#allocation2 + $0x4a0] sm:$0xff]
    %v274 = vld [vmem:[#allocation2 + $0x4a8] sm:$0xff]
    %v275 = vld [vmem:[#allocation2 + $0x4b0] sm:$0xff]
    %v276 = vld [vmem:[#allocation2 + $0x4b8] sm:$0xff]
    %v277 = vld [vmem:[#allocation2 + $0x4c0] sm:$0xff]
    %v278 = vld [vmem:[#allocation2 + $0x4c8] sm:$0xff]
    %v279 = vld [vmem:[#allocation2 + $0x4d0] sm:$0xff]
    %v280 = vld [vmem:[#allocation2 + $0x4d8] sm:$0xff]
    %v281 = vld [vmem:[#allocation2 + $0x4e0] sm:$0xff]
    %v282 = vld [vmem:[#allocation2 + $0x4e8] sm:$0xff]
    %v283 = vld [vmem:[#allocation2 + $0x4f0] sm:$0xff]
    %v284 = vld [vmem:[#allocation2 + $0x4f8] sm:$0xff]
    %v285 = vld [vmem:[#allocation2 + $0x500] sm:$0xff]
    %v286 = vld [vmem:[#allocation2 + $0x508] sm:$0xff]
    %v287 = vld [vmem:[#allocation2 + $0x510] sm:$0xff]
    %v288 = vld [vmem:[#allocation2 + $0x518] sm:$0xff]
    %v289 = vld [vmem:[#allocation2 + $0x520] sm:$0xff]
    %v290 = vld [vmem:[#allocation2 + $0x528] sm:$0xff]
    %v291 = vld [vmem:[#allocation2 + $0x530] sm:$0xff]
    %v292 = vld [vmem:[#allocation2 + $0x538] sm:$0xff]
    %v293 = vld [vmem:[#allocation2 + $0x540] sm:$0xff]
    %v294 = vld [vmem:[#allocation2 + $0x548] sm:$0xff]
    %v295 = vld [vmem:[#allocation2 + $0x550] sm:$0xff]
    %v296 = vld [vmem:[#allocation2 + $0x558] sm:$0xff]
    %v297 = vld [vmem:[#allocation2 + $0x560] sm:$0xff]
    %v298 = vld [vmem:[#allocation2 + $0x568] sm:$0xff]
    %v299 = vld [vmem:[#allocation2 + $0x570] sm:$0xff]
    %v300 = vld [vmem:[#allocation2 + $0x578] sm:$0xff]
    %v301 = vld [vmem:[#allocation2 + $0x580] sm:$0xff]
    %v302 = vld [vmem:[#allocation2 + $0x588] sm:$0xff]
    %v303 = vld [vmem:[#allocation2 + $0x590] sm:$0xff]
    %v304 = vld [vmem:[#allocation2 + $0x598] sm:$0xff]
    %v305 = vld [vmem:[#allocation2 + $0x5a0] sm:$0xff]
    %v306 = vld [vmem:[#allocation2 + $0x5a8] sm:$0xff]
    %v307 = vld [vmem:[#allocation2 + $0x5b0] sm:$0xff]
    %v308 = vld [vmem:[#allocation2 + $0x5b8] sm:$0xff]
    %v309 = vld [vmem:[#allocation2 + $0x5c0] sm:$0xff]
    %v310 = vld [vmem:[#allocation2 + $0x5c8] sm:$0xff]
    %v311 = vld [vmem:[#allocation2 + $0x5d0] sm:$0xff]
    %v312 = vld [vmem:[#allocation2 + $0x5d8] sm:$0xff]
    %v313 = vld [vmem:[#allocation2 + $0x5e0] sm:$0xff]
    %v314 = vld [vmem:[#allocation2 + $0x5e8] sm:$0xff]
    %v315 = vld [vmem:[#allocation2 + $0x5f0] sm:$0xff]
    %v316 = vld [vmem:[#allocation2 + $0x5f8] sm:$0xff]
    %v317 = vld [vmem:[#allocation2 + $0x600] sm:$0xff]
    %v318 = vld [vmem:[#allocation2 + $0x608] sm:$0xff]
    %v319 = vld [vmem:[#allocation2 + $0x610] sm:$0xff]
    %v320 = vld [vmem:[#allocation2 + $0x618] sm:$0xff]
    %v321 = vld [vmem:[%s2] sm:$0xf]
    %v323 = vperm.slane %v321, 0
    %v324 = vperm.slane %v321, 1
    %v325 = vperm.slane %v321, 2
    %v326 = vperm.slane %v321, 3
    %v527 = vunpack.c.l.b16 %v125
    %v528 = vunpack.c.h.b16 %v125
    %v529 = vunpack.c.l.b16 %v126
    %v530 = vunpack.c.h.b16 %v126
    %v531 = vunpack.c.l.b16 %v127
    %v532 = vunpack.c.h.b16 %v127
    %v533 = vunpack.c.l.b16 %v128
    %v534 = vunpack.c.h.b16 %v128
    %v535 = vunpack.c.l.b16 %v129
    %v536 = vunpack.c.h.b16 %v129
    %v537 = vunpack.c.l.b16 %v130
    %v538 = vunpack.c.h.b16 %v130
    %v539 = vunpack.c.l.b16 %v131
    %v540 = vunpack.c.h.b16 %v131
    %v541 = vunpack.c.l.b16 %v132
    %v542 = vunpack.c.h.b16 %v132
    %v543 = vunpack.c.l.b16 %v133
    %v544 = vunpack.c.h.b16 %v133
    %v545 = vunpack.c.l.b16 %v134
    %v546 = vunpack.c.h.b16 %v134
    %v547 = vunpack.c.l.b16 %v135
    %v548 = vunpack.c.h.b16 %v135
    %v549 = vunpack.c.l.b16 %v136
    %v550 = vunpack.c.h.b16 %v136
    %v551 = vunpack.c.l.b16 %v137
    %v552 = vunpack.c.h.b16 %v137
    %v553 = vunpack.c.l.b16 %v138
    %v554 = vunpack.c.h.b16 %v138
    %v555 = vunpack.c.l.b16 %v139
    %v556 = vunpack.c.h.b16 %v139
    %v557 = vunpack.c.l.b16 %v140
    %v558 = vunpack.c.h.b16 %v140
    %v559 = vunpack.c.l.b16 %v141
    %v560 = vunpack.c.h.b16 %v141
    %v561 = vunpack.c.l.b16 %v142
    %v562 = vunpack.c.h.b16 %v142
    %v563 = vunpack.c.l.b16 %v143
    %v564 = vunpack.c.h.b16 %v143
    %v565 = vunpack.c.l.b16 %v144
    %v566 = vunpack.c.h.b16 %v144
    %v567 = vunpack.c.l.b16 %v145
    %v568 = vunpack.c.h.b16 %v145
    %v569 = vunpack.c.l.b16 %v146
    %v570 = vunpack.c.h.b16 %v146
    %v571 = vunpack.c.l.b16 %v147
    %v572 = vunpack.c.h.b16 %v147
    %v573 = vunpack.c.l.b16 %v148
    %v574 = vunpack.c.h.b16 %v148
    %v575 = vunpack.c.l.b16 %v149
    %v576 = vunpack.c.h.b16 %v149
    %v577 = vunpack.c.l.b16 %v150
    %v578 = vunpack.c.h.b16 %v150
    %v579 = vunpack.c.l.b16 %v151
    %v580 = vunpack.c.h.b16 %v151
    %v581 = vunpack.c.l.b16 %v152
    %v582 = vunpack.c.h.b16 %v152
    %v583 = vunpack.c.l.b16 %v153
    %v584 = vunpack.c.h.b16 %v153
    %v585 = vunpack.c.l.b16 %v154
    %v586 = vunpack.c.h.b16 %v154
    %v587 = vunpack.c.l.b16 %v155
    %v588 = vunpack.c.h.b16 %v155
    %v589 = vunpack.c.l.b16 %v156
    %v590 = vunpack.c.h.b16 %v156
    %v591 = vunpack.c.l.b16 %v157
    %v592 = vunpack.c.h.b16 %v157
    %v593 = vunpack.c.l.b16 %v158
    %v594 = vunpack.c.h.b16 %v158
    %v595 = vunpack.c.l.b16 %v159
    %v596 = vunpack.c.h.b16 %v159
    %v597 = vunpack.c.l.b16 %v160
    %v598 = vunpack.c.h.b16 %v160
    %v599 = vunpack.c.l.b16 %v161
    %v600 = vunpack.c.h.b16 %v161
    %v601 = vunpack.c.l.b16 %v162
    %v602 = vunpack.c.h.b16 %v162
    %v603 = vunpack.c.l.b16 %v163
    %v604 = vunpack.c.h.b16 %v163
    %v605 = vunpack.c.l.b16 %v164
    %v606 = vunpack.c.h.b16 %v164
    %v607 = vunpack.c.l.b16 %v165
    %v608 = vunpack.c.h.b16 %v165
    %v609 = vunpack.c.l.b16 %v166
    %v610 = vunpack.c.h.b16 %v166
    %v611 = vunpack.c.l.b16 %v167
    %v612 = vunpack.c.h.b16 %v167
    %v613 = vunpack.c.l.b16 %v168
    %v614 = vunpack.c.h.b16 %v168
    %v615 = vunpack.c.l.b16 %v169
    %v616 = vunpack.c.h.b16 %v169
    %v617 = vunpack.c.l.b16 %v170
    %v618 = vunpack.c.h.b16 %v170
    %v619 = vunpack.c.l.b16 %v171
    %v620 = vunpack.c.h.b16 %v171
    %v621 = vunpack.c.l.b16 %v172
    %v622 = vunpack.c.h.b16 %v172
    %v623 = vunpack.c.l.b16 %v173
    %v624 = vunpack.c.h.b16 %v173
    %v625 = vunpack.c.l.b16 %v174
    %v626 = vunpack.c.h.b16 %v174
    %v627 = vunpack.c.l.b16 %v175
    %v628 = vunpack.c.h.b16 %v175
    %v629 = vunpack.c.l.b16 %v176
    %v630 = vunpack.c.h.b16 %v176
    %v631 = vunpack.c.l.b16 %v177
    %v632 = vunpack.c.h.b16 %v177
    %v633 = vunpack.c.l.b16 %v178
    %v634 = vunpack.c.h.b16 %v178
    %v635 = vunpack.c.l.b16 %v179
    %v636 = vunpack.c.h.b16 %v179
    %v637 = vunpack.c.l.b16 %v180
    %v638 = vunpack.c.h.b16 %v180
    %v639 = vunpack.c.l.b16 %v181
    %v640 = vunpack.c.h.b16 %v181
    %v641 = vunpack.c.l.b16 %v182
    %v642 = vunpack.c.h.b16 %v182
    %v643 = vunpack.c.l.b16 %v183
    %v644 = vunpack.c.h.b16 %v183
    %v645 = vunpack.c.l.b16 %v184
    %v646 = vunpack.c.h.b16 %v184
    %v647 = vunpack.c.l.b16 %v185
    %v648 = vunpack.c.h.b16 %v185
    %v649 = vunpack.c.l.b16 %v186
    %v650 = vunpack.c.h.b16 %v186
    %v651 = vunpack.c.l.b16 %v187
    %v652 = vunpack.c.h.b16 %v187
    %v653 = vunpack.c.l.b16 %v188
    %v654 = vunpack.c.h.b16 %v188
    %v655 = vunpack.c.l.b16 %v189
    %v656 = vunpack.c.h.b16 %v189
    %v657 = vunpack.c.l.b16 %v190
    %v658 = vunpack.c.h.b16 %v190
    %v659 = vunpack.c.l.b16 %v191
    %v660 = vunpack.c.h.b16 %v191
    %v661 = vunpack.c.l.b16 %v192
    %v662 = vunpack.c.h.b16 %v192
    %v663 = vunpack.c.l.b16 %v193
    %v664 = vunpack.c.h.b16 %v193
    %v665 = vunpack.c.l.b16 %v194
    %v666 = vunpack.c.h.b16 %v194
    %v667 = vunpack.c.l.b16 %v195
    %v668 = vunpack.c.h.b16 %v195
    %v669 = vunpack.c.l.b16 %v196
    %v670 = vunpack.c.h.b16 %v196
    %v671 = vunpack.c.l.b16 %v197
    %v672 = vunpack.c.h.b16 %v197
    %v673 = vunpack.c.l.b16 %v198
    %v674 = vunpack.c.h.b16 %v198
    %v675 = vunpack.c.l.b16 %v199
    %v676 = vunpack.c.h.b16 %v199
    %v677 = vunpack.c.l.b16 %v200
    %v678 = vunpack.c.h.b16 %v200
    %v679 = vunpack.c.l.b16 %v201
    %v680 = vunpack.c.h.b16 %v201
    %v681 = vunpack.c.l.b16 %v202
    %v682 = vunpack.c.h.b16 %v202
    %v683 = vunpack.c.l.b16 %v203
    %v684 = vunpack.c.h.b16 %v203
    %v685 = vunpack.c.l.b16 %v204
    %v686 = vunpack.c.h.b16 %v204
    %v687 = vunpack.c.l.b16 %v205
    %v688 = vunpack.c.h.b16 %v205
    %v689 = vunpack.c.l.b16 %v206
    %v690 = vunpack.c.h.b16 %v206
    %v691 = vunpack.c.l.b16 %v207
    %v692 = vunpack.c.h.b16 %v207
    %v693 = vunpack.c.l.b16 %v208
    %v694 = vunpack.c.h.b16 %v208
    %v695 = vunpack.c.l.b16 %v209
    %v696 = vunpack.c.h.b16 %v209
    %v697 = vunpack.c.l.b16 %v210
    %v698 = vunpack.c.h.b16 %v210
    %v699 = vunpack.c.l.b16 %v211
    %v700 = vunpack.c.h.b16 %v211
    %v701 = vunpack.c.l.b16 %v212
    %v702 = vunpack.c.h.b16 %v212
    %v703 = vunpack.c.l.b16 %v213
    %v704 = vunpack.c.h.b16 %v213
    %v705 = vunpack.c.l.b16 %v214
    %v706 = vunpack.c.h.b16 %v214
    %v707 = vunpack.c.l.b16 %v215
    %v708 = vunpack.c.h.b16 %v215
    %v709 = vunpack.c.l.b16 %v216
    %v710 = vunpack.c.h.b16 %v216
    %v711 = vunpack.c.l.b16 %v217
    %v712 = vunpack.c.h.b16 %v217
    %v713 = vunpack.c.l.b16 %v218
    %v714 = vunpack.c.h.b16 %v218
    %v715 = vunpack.c.l.b16 %v219
    %v716 = vunpack.c.h.b16 %v219
    %v717 = vunpack.c.l.b16 %v220
    %v718 = vunpack.c.h.b16 %v220
    %v719 = vunpack.c.l.b16 %v221
    %v720 = vunpack.c.h.b16 %v221
    %v721 = vunpack.c.l.b16 %v222
    %v722 = vunpack.c.h.b16 %v222
    %v723 = vunpack.c.l.b16 %v223
    %v724 = vunpack.c.h.b16 %v223
    %v725 = vunpack.c.l.b16 %v224
    %v726 = vunpack.c.h.b16 %v224
    %v727 = vunpack.c.l.b16 %v225
    %v728 = vunpack.c.h.b16 %v225
    %v729 = vunpack.c.l.b16 %v226
    %v730 = vunpack.c.h.b16 %v226
    %v731 = vunpack.c.l.b16 %v227
    %v732 = vunpack.c.h.b16 %v227
    %v733 = vunpack.c.l.b16 %v228
    %v734 = vunpack.c.h.b16 %v228
    %v735 = vunpack.c.l.b16 %v229
    %v736 = vunpack.c.h.b16 %v229
    %v737 = vunpack.c.l.b16 %v230
    %v738 = vunpack.c.h.b16 %v230
    %v739 = vunpack.c.l.b16 %v231
    %v740 = vunpack.c.h.b16 %v231
    %v741 = vunpack.c.l.b16 %v232
    %v742 = vunpack.c.h.b16 %v232
    %v743 = vunpack.c.l.b16 %v233
    %v744 = vunpack.c.h.b16 %v233
    %v745 = vunpack.c.l.b16 %v234
    %v746 = vunpack.c.h.b16 %v234
    %v747 = vunpack.c.l.b16 %v235
    %v748 = vunpack.c.h.b16 %v235
    %v749 = vunpack.c.l.b16 %v236
    %v750 = vunpack.c.h.b16 %v236
    %v751 = vunpack.c.l.b16 %v237
    %v752 = vunpack.c.h.b16 %v237
    %v753 = vunpack.c.l.b16 %v238
    %v754 = vunpack.c.h.b16 %v238
    %v755 = vunpack.c.l.b16 %v239
    %v756 = vunpack.c.h.b16 %v239
    %v757 = vunpack.c.l.b16 %v240
    %v758 = vunpack.c.h.b16 %v240
    %v759 = vunpack.c.l.b16 %v241
    %v760 = vunpack.c.h.b16 %v241
    %v761 = vunpack.c.l.b16 %v242
    %v762 = vunpack.c.h.b16 %v242
    %v763 = vunpack.c.l.b16 %v243
    %v764 = vunpack.c.h.b16 %v243
    %v765 = vunpack.c.l.b16 %v244
    %v766 = vunpack.c.h.b16 %v244
    %v767 = vunpack.c.l.b16 %v245
    %v768 = vunpack.c.h.b16 %v245
    %v769 = vunpack.c.l.b16 %v246
    %v770 = vunpack.c.h.b16 %v246
    %v771 = vunpack.c.l.b16 %v247
    %v772 = vunpack.c.h.b16 %v247
    %v773 = vunpack.c.l.b16 %v248
    %v774 = vunpack.c.h.b16 %v248
    %v775 = vunpack.c.l.b16 %v249
    %v776 = vunpack.c.h.b16 %v249
    %v777 = vunpack.c.l.b16 %v250
    %v778 = vunpack.c.h.b16 %v250
    %v779 = vunpack.c.l.b16 %v251
    %v780 = vunpack.c.h.b16 %v251
    %v781 = vunpack.c.l.b16 %v252
    %v782 = vunpack.c.h.b16 %v252
    %v783 = vunpack.c.l.b16 %v253
    %v784 = vunpack.c.h.b16 %v253
    %v785 = vunpack.c.l.b16 %v254
    %v786 = vunpack.c.h.b16 %v254
    %v787 = vunpack.c.l.b16 %v255
    %v788 = vunpack.c.h.b16 %v255
    %v789 = vunpack.c.l.b16 %v256
    %v790 = vunpack.c.h.b16 %v256
    %v791 = vunpack.c.l.b16 %v257
    %v792 = vunpack.c.h.b16 %v257
    %v793 = vunpack.c.l.b16 %v258
    %v794 = vunpack.c.h.b16 %v258
    %v795 = vunpack.c.l.b16 %v259
    %v796 = vunpack.c.h.b16 %v259
    %v797 = vunpack.c.l.b16 %v260
    %v798 = vunpack.c.h.b16 %v260
    %v799 = vunpack.c.l.b16 %v261
    %v800 = vunpack.c.h.b16 %v261
    %v801 = vunpack.c.l.b16 %v262
    %v802 = vunpack.c.h.b16 %v262
    %v803 = vunpack.c.l.b16 %v263
    %v804 = vunpack.c.h.b16 %v263
    %v805 = vunpack.c.l.b16 %v264
    %v806 = vunpack.c.h.b16 %v264
    %v807 = vunpack.c.l.b16 %v265
    %v808 = vunpack.c.h.b16 %v265
    %v809 = vunpack.c.l.b16 %v266
    %v810 = vunpack.c.h.b16 %v266
    %v811 = vunpack.c.l.b16 %v267
    %v812 = vunpack.c.h.b16 %v267
    %v813 = vunpack.c.l.b16 %v268
    %v814 = vunpack.c.h.b16 %v268
    %v815 = vunpack.c.l.b16 %v269
    %v816 = vunpack.c.h.b16 %v269
    %v817 = vunpack.c.l.b16 %v270
    %v818 = vunpack.c.h.b16 %v270
    %v819 = vunpack.c.l.b16 %v271
    %v820 = vunpack.c.h.b16 %v271
    %v821 = vunpack.c.l.b16 %v272
    %v822 = vunpack.c.h.b16 %v272
    %v823 = vunpack.c.l.b16 %v273
    %v824 = vunpack.c.h.b16 %v273
    %v825 = vunpack.c.l.b16 %v274
    %v826 = vunpack.c.h.b16 %v274
    %v827 = vunpack.c.l.b16 %v275
    %v828 = vunpack.c.h.b16 %v275
    %v829 = vunpack.c.l.b16 %v276
    %v830 = vunpack.c.h.b16 %v276
    %v831 = vunpack.c.l.b16 %v277
    %v832 = vunpack.c.h.b16 %v277
    %v833 = vunpack.c.l.b16 %v278
    %v834 = vunpack.c.h.b16 %v278
    %v835 = vunpack.c.l.b16 %v279
    %v836 = vunpack.c.h.b16 %v279
    %v837 = vunpack.c.l.b16 %v280
    %v838 = vunpack.c.h.b16 %v280
    %v839 = vunpack.c.l.b16 %v281
    %v840 = vunpack.c.h.b16 %v281
    %v841 = vunpack.c.l.b16 %v282
    %v842 = vunpack.c.h.b16 %v282
    %v843 = vunpack.c.l.b16 %v283
    %v844 = vunpack.c.h.b16 %v283
    %v845 = vunpack.c.l.b16 %v284
    %v846 = vunpack.c.h.b16 %v284
    %v847 = vunpack.c.l.b16 %v285
    %v848 = vunpack.c.h.b16 %v285
    %v849 = vunpack.c.l.b16 %v286
    %v850 = vunpack.c.h.b16 %v286
    %v851 = vunpack.c.l.b16 %v287
    %v852 = vunpack.c.h.b16 %v287
    %v853 = vunpack.c.l.b16 %v288
    %v854 = vunpack.c.h.b16 %v288
    %v855 = vunpack.c.l.b16 %v289
    %v856 = vunpack.c.h.b16 %v289
    %v857 = vunpack.c.l.b16 %v290
    %v858 = vunpack.c.h.b16 %v290
    %v859 = vunpack.c.l.b16 %v291
    %v860 = vunpack.c.h.b16 %v291
    %v861 = vunpack.c.l.b16 %v292
    %v862 = vunpack.c.h.b16 %v292
    %v863 = vunpack.c.l.b16 %v293
    %v864 = vunpack.c.h.b16 %v293
    %v865 = vunpack.c.l.b16 %v294
    %v866 = vunpack.c.h.b16 %v294
    %v867 = vunpack.c.l.b16 %v295
    %v868 = vunpack.c.h.b16 %v295
    %v869 = vunpack.c.l.b16 %v296
    %v870 = vunpack.c.h.b16 %v296
    %v871 = vunpack.c.l.b16 %v297
    %v872 = vunpack.c.h.b16 %v297
    %v873 = vunpack.c.l.b16 %v298
    %v874 = vunpack.c.h.b16 %v298
    %v875 = vunpack.c.l.b16 %v299
    %v876 = vunpack.c.h.b16 %v299
    %v877 = vunpack.c.l.b16 %v300
    %v878 = vunpack.c.h.b16 %v300
    %v879 = vunpack.c.l.b16 %v301
    %v880 = vunpack.c.h.b16 %v301
    %v881 = vunpack.c.l.b16 %v302
    %v882 = vunpack.c.h.b16 %v302
    %v883 = vunpack.c.l.b16 %v303
    %v884 = vunpack.c.h.b16 %v303
    %v885 = vunpack.c.l.b16 %v304
    %v886 = vunpack.c.h.b16 %v304
    %v887 = vunpack.c.l.b16 %v305
    %v888 = vunpack.c.h.b16 %v305
    %v889 = vunpack.c.l.b16 %v306
    %v890 = vunpack.c.h.b16 %v306
    %v891 = vunpack.c.l.b16 %v307
    %v892 = vunpack.c.h.b16 %v307
    %v893 = vunpack.c.l.b16 %v308
    %v894 = vunpack.c.h.b16 %v308
    %v895 = vunpack.c.l.b16 %v309
    %v896 = vunpack.c.h.b16 %v309
    %v897 = vunpack.c.l.b16 %v310
    %v898 = vunpack.c.h.b16 %v310
    %v899 = vunpack.c.l.b16 %v311
    %v900 = vunpack.c.h.b16 %v311
    %v901 = vunpack.c.l.b16 %v312
    %v902 = vunpack.c.h.b16 %v312
    %v903 = vunpack.c.l.b16 %v313
    %v904 = vunpack.c.h.b16 %v313
    %v905 = vunpack.c.l.b16 %v314
    %v906 = vunpack.c.h.b16 %v314
    %v907 = vunpack.c.l.b16 %v315
    %v908 = vunpack.c.h.b16 %v315
    %v909 = vunpack.c.l.b16 %v316
    %v910 = vunpack.c.h.b16 %v316
    %v911 = vunpack.c.l.b16 %v317
    %v912 = vunpack.c.h.b16 %v317
    %v913 = vunpack.c.l.b16 %v318
    %v914 = vunpack.c.h.b16 %v318
    %v915 = vunpack.c.l.b16 %v319
    %v916 = vunpack.c.h.b16 %v319
    %v917 = vunpack.c.l.b16 %v320
    %v918 = vunpack.c.h.b16 %v320
    %v919 = vpack.c.b16 %v531, %v527
    %v920 = vpack.c.b16 %v532, %v528
    %v921 = vpack.c.b16 %v533, %v529
    %v922 = vpack.c.b16 %v534, %v530
    %v923 = vpack.c.b16 %v539, %v535
    %v924 = vpack.c.b16 %v540, %v536
    %v925 = vpack.c.b16 %v541, %v537
    %v926 = vpack.c.b16 %v542, %v538
    %v927 = vpack.c.b16 %v547, %v543
    %v928 = vpack.c.b16 %v548, %v544
    %v929 = vpack.c.b16 %v549, %v545
    %v930 = vpack.c.b16 %v550, %v546
    %v931 = vpack.c.b16 %v555, %v551
    %v932 = vpack.c.b16 %v556, %v552
    %v933 = vpack.c.b16 %v557, %v553
    %v934 = vpack.c.b16 %v558, %v554
    %v935 = vpack.c.b16 %v563, %v559
    %v936 = vpack.c.b16 %v564, %v560
    %v937 = vpack.c.b16 %v565, %v561
    %v938 = vpack.c.b16 %v566, %v562
    %v939 = vpack.c.b16 %v571, %v567
    %v940 = vpack.c.b16 %v572, %v568
    %v941 = vpack.c.b16 %v573, %v569
    %v942 = vpack.c.b16 %v574, %v570
    %v943 = vpack.c.b16 %v579, %v575
    %v944 = vpack.c.b16 %v580, %v576
    %v945 = vpack.c.b16 %v581, %v577
    %v946 = vpack.c.b16 %v582, %v578
    %v947 = vpack.c.b16 %v587, %v583
    %v948 = vpack.c.b16 %v588, %v584
    %v949 = vpack.c.b16 %v589, %v585
    %v950 = vpack.c.b16 %v590, %v586
    %v951 = vpack.c.b16 %v595, %v591
    %v952 = vpack.c.b16 %v596, %v592
    %v953 = vpack.c.b16 %v597, %v593
    %v954 = vpack.c.b16 %v598, %v594
    %v955 = vpack.c.b16 %v603, %v599
    %v956 = vpack.c.b16 %v604, %v600
    %v957 = vpack.c.b16 %v605, %v601
    %v958 = vpack.c.b16 %v606, %v602
    %v959 = vpack.c.b16 %v611, %v607
    %v960 = vpack.c.b16 %v612, %v608
    %v961 = vpack.c.b16 %v613, %v609
    %v962 = vpack.c.b16 %v614, %v610
    %v963 = vpack.c.b16 %v619, %v615
    %v964 = vpack.c.b16 %v620, %v616
    %v965 = vpack.c.b16 %v621, %v617
    %v966 = vpack.c.b16 %v622, %v618
    %v967 = vpack.c.b16 %v627, %v623
    %v968 = vpack.c.b16 %v628, %v624
    %v969 = vpack.c.b16 %v629, %v625
    %v970 = vpack.c.b16 %v630, %v626
    %v971 = vpack.c.b16 %v635, %v631
    %v972 = vpack.c.b16 %v636, %v632
    %v973 = vpack.c.b16 %v637, %v633
    %v974 = vpack.c.b16 %v638, %v634
    %v975 = vpack.c.b16 %v643, %v639
    %v976 = vpack.c.b16 %v644, %v640
    %v977 = vpack.c.b16 %v645, %v641
    %v978 = vpack.c.b16 %v646, %v642
    %v979 = vpack.c.b16 %v651, %v647
    %v980 = vpack.c.b16 %v652, %v648
    %v981 = vpack.c.b16 %v653, %v649
    %v982 = vpack.c.b16 %v654, %v650
    %v983 = vpack.c.b16 %v659, %v655
    %v984 = vpack.c.b16 %v660, %v656
    %v985 = vpack.c.b16 %v661, %v657
    %v986 = vpack.c.b16 %v662, %v658
    %v987 = vpack.c.b16 %v667, %v663
    %v988 = vpack.c.b16 %v668, %v664
    %v989 = vpack.c.b16 %v669, %v665
    %v990 = vpack.c.b16 %v670, %v666
    %v991 = vpack.c.b16 %v675, %v671
    %v992 = vpack.c.b16 %v676, %v672
    %v993 = vpack.c.b16 %v677, %v673
    %v994 = vpack.c.b16 %v678, %v674
    %v995 = vpack.c.b16 %v683, %v679
    %v996 = vpack.c.b16 %v684, %v680
    %v997 = vpack.c.b16 %v685, %v681
    %v998 = vpack.c.b16 %v686, %v682
    %v999 = vpack.c.b16 %v691, %v687
    %v1000 = vpack.c.b16 %v692, %v688
    %v1001 = vpack.c.b16 %v693, %v689
    %v1002 = vpack.c.b16 %v694, %v690
    %v1003 = vpack.c.b16 %v699, %v695
    %v1004 = vpack.c.b16 %v700, %v696
    %v1005 = vpack.c.b16 %v701, %v697
    %v1006 = vpack.c.b16 %v702, %v698
    %v1007 = vpack.c.b16 %v707, %v703
    %v1008 = vpack.c.b16 %v708, %v704
    %v1009 = vpack.c.b16 %v709, %v705
    %v1010 = vpack.c.b16 %v710, %v706
    %v1011 = vpack.c.b16 %v715, %v711
    %v1012 = vpack.c.b16 %v716, %v712
    %v1013 = vpack.c.b16 %v717, %v713
    %v1014 = vpack.c.b16 %v718, %v714
    %v1015 = vpack.c.b16 %v723, %v719
    %v1016 = vpack.c.b16 %v724, %v720
    %v1017 = vpack.c.b16 %v725, %v721
    %v1018 = vpack.c.b16 %v726, %v722
    %v1019 = vpack.c.b16 %v731, %v727
    %v1020 = vpack.c.b16 %v732, %v728
    %v1021 = vpack.c.b16 %v733, %v729
    %v1022 = vpack.c.b16 %v734, %v730
    %v1023 = vpack.c.b16 %v739, %v735
    %v1024 = vpack.c.b16 %v740, %v736
    %v1025 = vpack.c.b16 %v741, %v737
    %v1026 = vpack.c.b16 %v742, %v738
    %v1027 = vpack.c.b16 %v747, %v743
    %v1028 = vpack.c.b16 %v748, %v744
    %v1029 = vpack.c.b16 %v749, %v745
    %v1030 = vpack.c.b16 %v750, %v746
    %v1031 = vpack.c.b16 %v755, %v751
    %v1032 = vpack.c.b16 %v756, %v752
    %v1033 = vpack.c.b16 %v757, %v753
    %v1034 = vpack.c.b16 %v758, %v754
    %v1035 = vpack.c.b16 %v763, %v759
    %v1036 = vpack.c.b16 %v764, %v760
    %v1037 = vpack.c.b16 %v765, %v761
    %v1038 = vpack.c.b16 %v766, %v762
    %v1039 = vpack.c.b16 %v771, %v767
    %v1040 = vpack.c.b16 %v772, %v768
    %v1041 = vpack.c.b16 %v773, %v769
    %v1042 = vpack.c.b16 %v774, %v770
    %v1043 = vpack.c.b16 %v779, %v775
    %v1044 = vpack.c.b16 %v780, %v776
    %v1045 = vpack.c.b16 %v781, %v777
    %v1046 = vpack.c.b16 %v782, %v778
    %v1047 = vpack.c.b16 %v787, %v783
    %v1048 = vpack.c.b16 %v788, %v784
    %v1049 = vpack.c.b16 %v789, %v785
    %v1050 = vpack.c.b16 %v790, %v786
    %v1051 = vpack.c.b16 %v795, %v791
    %v1052 = vpack.c.b16 %v796, %v792
    %v1053 = vpack.c.b16 %v797, %v793
    %v1054 = vpack.c.b16 %v798, %v794
    %v1055 = vpack.c.b16 %v803, %v799
    %v1056 = vpack.c.b16 %v804, %v800
    %v1057 = vpack.c.b16 %v805, %v801
    %v1058 = vpack.c.b16 %v806, %v802
    %v1059 = vpack.c.b16 %v811, %v807
    %v1060 = vpack.c.b16 %v812, %v808
    %v1061 = vpack.c.b16 %v813, %v809
    %v1062 = vpack.c.b16 %v814, %v810
    %v1063 = vpack.c.b16 %v819, %v815
    %v1064 = vpack.c.b16 %v820, %v816
    %v1065 = vpack.c.b16 %v821, %v817
    %v1066 = vpack.c.b16 %v822, %v818
    %v1067 = vpack.c.b16 %v827, %v823
    %v1068 = vpack.c.b16 %v828, %v824
    %v1069 = vpack.c.b16 %v829, %v825
    %v1070 = vpack.c.b16 %v830, %v826
    %v1071 = vpack.c.b16 %v835, %v831
    %v1072 = vpack.c.b16 %v836, %v832
    %v1073 = vpack.c.b16 %v837, %v833
    %v1074 = vpack.c.b16 %v838, %v834
    %v1075 = vpack.c.b16 %v843, %v839
    %v1076 = vpack.c.b16 %v844, %v840
    %v1077 = vpack.c.b16 %v845, %v841
    %v1078 = vpack.c.b16 %v846, %v842
    %v1079 = vpack.c.b16 %v851, %v847
    %v1080 = vpack.c.b16 %v852, %v848
    %v1081 = vpack.c.b16 %v853, %v849
    %v1082 = vpack.c.b16 %v854, %v850
    %v1083 = vpack.c.b16 %v859, %v855
    %v1084 = vpack.c.b16 %v860, %v856
    %v1085 = vpack.c.b16 %v861, %v857
    %v1086 = vpack.c.b16 %v862, %v858
    %v1087 = vpack.c.b16 %v867, %v863
    %v1088 = vpack.c.b16 %v868, %v864
    %v1089 = vpack.c.b16 %v869, %v865
    %v1090 = vpack.c.b16 %v870, %v866
    %v1091 = vpack.c.b16 %v875, %v871
    %v1092 = vpack.c.b16 %v876, %v872
    %v1093 = vpack.c.b16 %v877, %v873
    %v1094 = vpack.c.b16 %v878, %v874
    %v1095 = vpack.c.b16 %v883, %v879
    %v1096 = vpack.c.b16 %v884, %v880
    %v1097 = vpack.c.b16 %v885, %v881
    %v1098 = vpack.c.b16 %v886, %v882
    %v1099 = vpack.c.b16 %v891, %v887
    %v1100 = vpack.c.b16 %v892, %v888
    %v1101 = vpack.c.b16 %v893, %v889
    %v1102 = vpack.c.b16 %v894, %v890
    %v1103 = vpack.c.b16 %v899, %v895
    %v1104 = vpack.c.b16 %v900, %v896
    %v1105 = vpack.c.b16 %v901, %v897
    %v1106 = vpack.c.b16 %v902, %v898
    %v1107 = vpack.c.b16 %v907, %v903
    %v1108 = vpack.c.b16 %v908, %v904
    %v1109 = vpack.c.b16 %v909, %v905
    %v1110 = vpack.c.b16 %v910, %v906
    %v1111 = vpack.c.b16 %v915, %v911
    %v1112 = vpack.c.b16 %v916, %v912
    %v1113 = vpack.c.b16 %v917, %v913
    %v1114 = vpack.c.b16 %v918, %v914
    %vm1311 = vcmask 130048
    %v1313 = vsel %vm1311, %v124, 0
    %1315 = vmatpush.bf16.msra.mxu0 %v947
    %1316 = vmatpush.bf16.msra.mxu0 %v943
    %1317 = vmatpush.bf16.msra.mxu0 %v939
    %1318 = vmatpush.bf16.msra.mxu0 %v935
    %1319 = vmatpush.bf16.msra.mxu0 %v931
    %1320 = vmatpush.bf16.msra.mxu0 %v927
    %1321 = vmatpush.bf16.msra.mxu0 %v923
    %1322 = vmatpush.bf16.msra.mxu0 %v919
    %1323 = vmatmul.bf16.gmra.mxu0 %v118
    %v1324 = vpop.f32.mrf.mxu0
    %v1325 = vadd.f32 %v323, %v1324
    %v1326 = vpop.f32.mrf.mxu0
    %v1327 = vadd.f32 %v323, %v1326
    %1328 = vdwg.mxu0
    %1329 = vmatpush.bf16.msra.mxu0 %v979
    %1330 = vmatpush.bf16.msra.mxu0 %v975
    %1331 = vmatpush.bf16.msra.mxu0 %v971
    %1332 = vmatpush.bf16.msra.mxu0 %v967
    %1333 = vmatpush.bf16.msra.mxu0 %v963
    %1334 = vmatpush.bf16.msra.mxu0 %v959
    %1335 = vmatpush.bf16.msra.mxu0 %v955
    %1336 = vmatpush.bf16.msra.mxu0 %v951
    %1337 = vmatmul.bf16.gmra.mxu0 %v119
    %v1338 = vpop.f32.mrf.mxu0
    %v1339 = vadd.f32 %v1325, %v1338
    %v1340 = vpop.f32.mrf.mxu0
    %v1341 = vadd.f32 %v1327, %v1340
    %1342 = vdwg.mxu0
    %1343 = vmatpush.bf16.msra.mxu0 %v1011
    %1344 = vmatpush.bf16.msra.mxu0 %v1007
    %1345 = vmatpush.bf16.msra.mxu0 %v1003
    %1346 = vmatpush.bf16.msra.mxu0 %v999
    %1347 = vmatpush.bf16.msra.mxu0 %v995
    %1348 = vmatpush.bf16.msra.mxu0 %v991
    %1349 = vmatpush.bf16.msra.mxu0 %v987
    %1350 = vmatpush.bf16.msra.mxu0 %v983
    %1351 = vmatmul.bf16.gmra.mxu0 %v120
    %v1352 = vpop.f32.mrf.mxu0
    %v1353 = vadd.f32 %v1339, %v1352
    %v1354 = vpop.f32.mrf.mxu0
    %v1355 = vadd.f32 %v1341, %v1354
    %1356 = vdwg.mxu0
    %1357 = vmatpush.bf16.msra.mxu0 %v1043
    %1358 = vmatpush.bf16.msra.mxu0 %v1039
    %1359 = vmatpush.bf16.msra.mxu0 %v1035
    %1360 = vmatpush.bf16.msra.mxu0 %v1031
    %1361 = vmatpush.bf16.msra.mxu0 %v1027
    %1362 = vmatpush.bf16.msra.mxu0 %v1023
    %1363 = vmatpush.bf16.msra.mxu0 %v1019
    %1364 = vmatpush.bf16.msra.mxu0 %v1015
    %1365 = vmatmul.bf16.gmra.mxu0 %v121
    %v1366 = vpop.f32.mrf.mxu0
    %v1367 = vadd.f32 %v1353, %v1366
    %v1368 = vpop.f32.mrf.mxu0
    %v1369 = vadd.f32 %v1355, %v1368
    %1370 = vdwg.mxu0
    %1371 = vmatpush.bf16.msra.mxu0 %v1075
    %1372 = vmatpush.bf16.msra.mxu0 %v1071
    %1373 = vmatpush.bf16.msra.mxu0 %v1067
    %1374 = vmatpush.bf16.msra.mxu0 %v1063
    %1375 = vmatpush.bf16.msra.mxu0 %v1059
    %1376 = vmatpush.bf16.msra.mxu0 %v1055
    %1377 = vmatpush.bf16.msra.mxu0 %v1051
    %1378 = vmatpush.bf16.msra.mxu0 %v1047
    %1379 = vmatmul.bf16.gmra.mxu0 %v122
    %v1380 = vpop.f32.mrf.mxu0
    %v1381 = vadd.f32 %v1367, %v1380
    %v1382 = vpop.f32.mrf.mxu0
    %v1383 = vadd.f32 %v1369, %v1382
    %1384 = vdwg.mxu0
    %1385 = vmatpush.bf16.msra.mxu0 %v1107
    %1386 = vmatpush.bf16.msra.mxu0 %v1103
    %1387 = vmatpush.bf16.msra.mxu0 %v1099
    %1388 = vmatpush.bf16.msra.mxu0 %v1095
    %1389 = vmatpush.bf16.msra.mxu0 %v1091
    %1390 = vmatpush.bf16.msra.mxu0 %v1087
    %1391 = vmatpush.bf16.msra.mxu0 %v1083
    %1392 = vmatpush.bf16.msra.mxu0 %v1079
    %1393 = vmatmul.bf16.gmra.mxu0 %v123
    %v1394 = vpop.f32.mrf.mxu0
    %v1395 = vadd.f32 %v1381, %v1394
    %v1396 = vpop.f32.mrf.mxu0
    %v1397 = vadd.f32 %v1383, %v1396
    %1398 = vdwg.mxu0
    %1399 = vmatpush.bf16.msra.mxu0 0
    %1400 = vmatpush.bf16.msra.mxu0 0
    %1401 = vmatpush.bf16.msra.mxu0 0
    %1402 = vmatpush.bf16.msra.mxu0 0
    %1403 = vmatpush.bf16.msra.mxu0 0
    %1404 = vmatpush.bf16.msra.mxu0 0
    %1405 = vmatpush.bf16.msra.mxu0 0
    %1406 = vmatpush.bf16.msra.mxu0 %v1111
    %1407 = vmatmul.bf16.gmra.mxu0 %v1313
    %v1408 = vpop.f32.mrf.mxu0
    %v1409 = vadd.f32 %v1395, %v1408
    %v1410 = vpop.f32.mrf.mxu0
    %v1411 = vadd.f32 %v1397, %v1410
    %1412 = vdwg.mxu0
    %1413 = vmatpush.bf16.msra.mxu0 %v948
    %1414 = vmatpush.bf16.msra.mxu0 %v944
    %1415 = vmatpush.bf16.msra.mxu0 %v940
    %1416 = vmatpush.bf16.msra.mxu0 %v936
    %1417 = vmatpush.bf16.msra.mxu0 %v932
    %1418 = vmatpush.bf16.msra.mxu0 %v928
    %1419 = vmatpush.bf16.msra.mxu0 %v924
    %1420 = vmatpush.bf16.msra.mxu0 %v920
    %1421 = vmatmul.bf16.gmra.mxu0 %v118
    %v1422 = vpop.f32.mrf.mxu0
    %v1423 = vadd.f32 %v324, %v1422
    %v1424 = vpop.f32.mrf.mxu0
    %v1425 = vadd.f32 %v324, %v1424
    %1426 = vdwg.mxu0
    %1427 = vmatpush.bf16.msra.mxu0 %v980
    %1428 = vmatpush.bf16.msra.mxu0 %v976
    %1429 = vmatpush.bf16.msra.mxu0 %v972
    %1430 = vmatpush.bf16.msra.mxu0 %v968
    %1431 = vmatpush.bf16.msra.mxu0 %v964
    %1432 = vmatpush.bf16.msra.mxu0 %v960
    %1433 = vmatpush.bf16.msra.mxu0 %v956
    %1434 = vmatpush.bf16.msra.mxu0 %v952
    %1435 = vmatmul.bf16.gmra.mxu0 %v119
    %v1436 = vpop.f32.mrf.mxu0
    %v1437 = vadd.f32 %v1423, %v1436
    %v1438 = vpop.f32.mrf.mxu0
    %v1439 = vadd.f32 %v1425, %v1438
    %1440 = vdwg.mxu0
    %1441 = vmatpush.bf16.msra.mxu0 %v1012
    %1442 = vmatpush.bf16.msra.mxu0 %v1008
    %1443 = vmatpush.bf16.msra.mxu0 %v1004
    %1444 = vmatpush.bf16.msra.mxu0 %v1000
    %1445 = vmatpush.bf16.msra.mxu0 %v996
    %1446 = vmatpush.bf16.msra.mxu0 %v992
    %1447 = vmatpush.bf16.msra.mxu0 %v988
    %1448 = vmatpush.bf16.msra.mxu0 %v984
    %1449 = vmatmul.bf16.gmra.mxu0 %v120
    %v1450 = vpop.f32.mrf.mxu0
    %v1451 = vadd.f32 %v1437, %v1450
    %v1452 = vpop.f32.mrf.mxu0
    %v1453 = vadd.f32 %v1439, %v1452
    %1454 = vdwg.mxu0
    %1455 = vmatpush.bf16.msra.mxu0 %v1044
    %1456 = vmatpush.bf16.msra.mxu0 %v1040
    %1457 = vmatpush.bf16.msra.mxu0 %v1036
    %1458 = vmatpush.bf16.msra.mxu0 %v1032
    %1459 = vmatpush.bf16.msra.mxu0 %v1028
    %1460 = vmatpush.bf16.msra.mxu0 %v1024
    %1461 = vmatpush.bf16.msra.mxu0 %v1020
    %1462 = vmatpush.bf16.msra.mxu0 %v1016
    %1463 = vmatmul.bf16.gmra.mxu0 %v121
    %v1464 = vpop.f32.mrf.mxu0
    %v1465 = vadd.f32 %v1451, %v1464
    %v1466 = vpop.f32.mrf.mxu0
    %v1467 = vadd.f32 %v1453, %v1466
    %1468 = vdwg.mxu0
    %1469 = vmatpush.bf16.msra.mxu0 %v1076
    %1470 = vmatpush.bf16.msra.mxu0 %v1072
    %1471 = vmatpush.bf16.msra.mxu0 %v1068
    %1472 = vmatpush.bf16.msra.mxu0 %v1064
    %1473 = vmatpush.bf16.msra.mxu0 %v1060
    %1474 = vmatpush.bf16.msra.mxu0 %v1056
    %1475 = vmatpush.bf16.msra.mxu0 %v1052
    %1476 = vmatpush.bf16.msra.mxu0 %v1048
    %1477 = vmatmul.bf16.gmra.mxu0 %v122
    %v1478 = vpop.f32.mrf.mxu0
    %v1479 = vadd.f32 %v1465, %v1478
    %v1480 = vpop.f32.mrf.mxu0
    %v1481 = vadd.f32 %v1467, %v1480
    %1482 = vdwg.mxu0
    %1483 = vmatpush.bf16.msra.mxu0 %v1108
    %1484 = vmatpush.bf16.msra.mxu0 %v1104
    %1485 = vmatpush.bf16.msra.mxu0 %v1100
    %1486 = vmatpush.bf16.msra.mxu0 %v1096
    %1487 = vmatpush.bf16.msra.mxu0 %v1092
    %1488 = vmatpush.bf16.msra.mxu0 %v1088
    %1489 = vmatpush.bf16.msra.mxu0 %v1084
    %1490 = vmatpush.bf16.msra.mxu0 %v1080
    %1491 = vmatmul.bf16.gmra.mxu0 %v123
    %v1492 = vpop.f32.mrf.mxu0
    %v1493 = vadd.f32 %v1479, %v1492
    %v1494 = vpop.f32.mrf.mxu0
    %v1495 = vadd.f32 %v1481, %v1494
    %1496 = vdwg.mxu0
    %1497 = vmatpush.bf16.msra.mxu0 0
    %1498 = vmatpush.bf16.msra.mxu0 0
    %1499 = vmatpush.bf16.msra.mxu0 0
    %1500 = vmatpush.bf16.msra.mxu0 0
    %1501 = vmatpush.bf16.msra.mxu0 0
    %1502 = vmatpush.bf16.msra.mxu0 0
    %1503 = vmatpush.bf16.msra.mxu0 0
    %1504 = vmatpush.bf16.msra.mxu0 %v1112
    %1505 = vmatmul.bf16.gmra.mxu0 %v1313
    %v1506 = vpop.f32.mrf.mxu0
    %v1507 = vadd.f32 %v1493, %v1506
    %v1508 = vpop.f32.mrf.mxu0
    %v1509 = vadd.f32 %v1495, %v1508
    %1510 = vdwg.mxu0
    %1511 = vmatpush.bf16.msra.mxu0 %v949
    %1512 = vmatpush.bf16.msra.mxu0 %v945
    %1513 = vmatpush.bf16.msra.mxu0 %v941
    %1514 = vmatpush.bf16.msra.mxu0 %v937
    %1515 = vmatpush.bf16.msra.mxu0 %v933
    %1516 = vmatpush.bf16.msra.mxu0 %v929
    %1517 = vmatpush.bf16.msra.mxu0 %v925
    %1518 = vmatpush.bf16.msra.mxu0 %v921
    %1519 = vmatmul.bf16.gmra.mxu0 %v118
    %v1520 = vpop.f32.mrf.mxu0
    %v1521 = vadd.f32 %v325, %v1520
    %v1522 = vpop.f32.mrf.mxu0
    %v1523 = vadd.f32 %v325, %v1522
    %1524 = vdwg.mxu0
    %1525 = vmatpush.bf16.msra.mxu0 %v981
    %1526 = vmatpush.bf16.msra.mxu0 %v977
    %1527 = vmatpush.bf16.msra.mxu0 %v973
    %1528 = vmatpush.bf16.msra.mxu0 %v969
    %1529 = vmatpush.bf16.msra.mxu0 %v965
    %1530 = vmatpush.bf16.msra.mxu0 %v961
    %1531 = vmatpush.bf16.msra.mxu0 %v957
    %1532 = vmatpush.bf16.msra.mxu0 %v953
    %1533 = vmatmul.bf16.gmra.mxu0 %v119
    %v1534 = vpop.f32.mrf.mxu0
    %v1535 = vadd.f32 %v1521, %v1534
    %v1536 = vpop.f32.mrf.mxu0
    %v1537 = vadd.f32 %v1523, %v1536
    %1538 = vdwg.mxu0
    %1539 = vmatpush.bf16.msra.mxu0 %v1013
    %1540 = vmatpush.bf16.msra.mxu0 %v1009
    %1541 = vmatpush.bf16.msra.mxu0 %v1005
    %1542 = vmatpush.bf16.msra.mxu0 %v1001
    %1543 = vmatpush.bf16.msra.mxu0 %v997
    %1544 = vmatpush.bf16.msra.mxu0 %v993
    %1545 = vmatpush.bf16.msra.mxu0 %v989
    %1546 = vmatpush.bf16.msra.mxu0 %v985
    %1547 = vmatmul.bf16.gmra.mxu0 %v120
    %v1548 = vpop.f32.mrf.mxu0
    %v1549 = vadd.f32 %v1535, %v1548
    %v1550 = vpop.f32.mrf.mxu0
    %v1551 = vadd.f32 %v1537, %v1550
    %1552 = vdwg.mxu0
    %1553 = vmatpush.bf16.msra.mxu0 %v1045
    %1554 = vmatpush.bf16.msra.mxu0 %v1041
    %1555 = vmatpush.bf16.msra.mxu0 %v1037
    %1556 = vmatpush.bf16.msra.mxu0 %v1033
    %1557 = vmatpush.bf16.msra.mxu0 %v1029
    %1558 = vmatpush.bf16.msra.mxu0 %v1025
    %1559 = vmatpush.bf16.msra.mxu0 %v1021
    %1560 = vmatpush.bf16.msra.mxu0 %v1017
    %1561 = vmatmul.bf16.gmra.mxu0 %v121
    %v1562 = vpop.f32.mrf.mxu0
    %v1563 = vadd.f32 %v1549, %v1562
    %v1564 = vpop.f32.mrf.mxu0
    %v1565 = vadd.f32 %v1551, %v1564
    %1566 = vdwg.mxu0
    %1567 = vmatpush.bf16.msra.mxu0 %v1077
    %1568 = vmatpush.bf16.msra.mxu0 %v1073
    %1569 = vmatpush.bf16.msra.mxu0 %v1069
    %1570 = vmatpush.bf16.msra.mxu0 %v1065
    %1571 = vmatpush.bf16.msra.mxu0 %v1061
    %1572 = vmatpush.bf16.msra.mxu0 %v1057
    %1573 = vmatpush.bf16.msra.mxu0 %v1053
    %1574 = vmatpush.bf16.msra.mxu0 %v1049
    %1575 = vmatmul.bf16.gmra.mxu0 %v122
    %v1576 = vpop.f32.mrf.mxu0
    %v1577 = vadd.f32 %v1563, %v1576
    %v1578 = vpop.f32.mrf.mxu0
    %v1579 = vadd.f32 %v1565, %v1578
    %1580 = vdwg.mxu0
    %1581 = vmatpush.bf16.msra.mxu0 %v1109
    %1582 = vmatpush.bf16.msra.mxu0 %v1105
    %1583 = vmatpush.bf16.msra.mxu0 %v1101
    %1584 = vmatpush.bf16.msra.mxu0 %v1097
    %1585 = vmatpush.bf16.msra.mxu0 %v1093
    %1586 = vmatpush.bf16.msra.mxu0 %v1089
    %1587 = vmatpush.bf16.msra.mxu0 %v1085
    %1588 = vmatpush.bf16.msra.mxu0 %v1081
    %1589 = vmatmul.bf16.gmra.mxu0 %v123
    %v1590 = vpop.f32.mrf.mxu0
    %v1591 = vadd.f32 %v1577, %v1590
    %v1592 = vpop.f32.mrf.mxu0
    %v1593 = vadd.f32 %v1579, %v1592
    %1594 = vdwg.mxu0
    %1595 = vmatpush.bf16.msra.mxu0 0
    %1596 = vmatpush.bf16.msra.mxu0 0
    %1597 = vmatpush.bf16.msra.mxu0 0
    %1598 = vmatpush.bf16.msra.mxu0 0
    %1599 = vmatpush.bf16.msra.mxu0 0
    %1600 = vmatpush.bf16.msra.mxu0 0
    %1601 = vmatpush.bf16.msra.mxu0 0
    %1602 = vmatpush.bf16.msra.mxu0 %v1113
    %1603 = vmatmul.bf16.gmra.mxu0 %v1313
    %v1604 = vpop.f32.mrf.mxu0
    %v1605 = vadd.f32 %v1591, %v1604
    %v1606 = vpop.f32.mrf.mxu0
    %v1607 = vadd.f32 %v1593, %v1606
    %1608 = vdwg.mxu0
    %1609 = vmatpush.bf16.msra.mxu0 %v950
    %1610 = vmatpush.bf16.msra.mxu0 %v946
    %1611 = vmatpush.bf16.msra.mxu0 %v942
    %1612 = vmatpush.bf16.msra.mxu0 %v938
    %1613 = vmatpush.bf16.msra.mxu0 %v934
    %1614 = vmatpush.bf16.msra.mxu0 %v930
    %1615 = vmatpush.bf16.msra.mxu0 %v926
    %1616 = vmatpush.bf16.msra.mxu0 %v922
    %1617 = vmatmul.bf16.gmra.mxu0 %v118
    %v1618 = vpop.f32.mrf.mxu0
    %v1619 = vadd.f32 %v326, %v1618
    %v1620 = vpop.f32.mrf.mxu0
    %v1621 = vadd.f32 %v326, %v1620
    %1622 = vdwg.mxu0
    %1623 = vmatpush.bf16.msra.mxu0 %v982
    %1624 = vmatpush.bf16.msra.mxu0 %v978
    %1625 = vmatpush.bf16.msra.mxu0 %v974
    %1626 = vmatpush.bf16.msra.mxu0 %v970
    %1627 = vmatpush.bf16.msra.mxu0 %v966
    %1628 = vmatpush.bf16.msra.mxu0 %v962
    %1629 = vmatpush.bf16.msra.mxu0 %v958
    %1630 = vmatpush.bf16.msra.mxu0 %v954
    %1631 = vmatmul.bf16.gmra.mxu0 %v119
    %v1632 = vpop.f32.mrf.mxu0
    %v1633 = vadd.f32 %v1619, %v1632
    %v1634 = vpop.f32.mrf.mxu0
    %v1635 = vadd.f32 %v1621, %v1634
    %1636 = vdwg.mxu0
    %1637 = vmatpush.bf16.msra.mxu0 %v1014
    %1638 = vmatpush.bf16.msra.mxu0 %v1010
    %1639 = vmatpush.bf16.msra.mxu0 %v1006
    %1640 = vmatpush.bf16.msra.mxu0 %v1002
    %1641 = vmatpush.bf16.msra.mxu0 %v998
    %1642 = vmatpush.bf16.msra.mxu0 %v994
    %1643 = vmatpush.bf16.msra.mxu0 %v990
    %1644 = vmatpush.bf16.msra.mxu0 %v986
    %1645 = vmatmul.bf16.gmra.mxu0 %v120
    %v1646 = vpop.f32.mrf.mxu0
    %v1647 = vadd.f32 %v1633, %v1646
    %v1648 = vpop.f32.mrf.mxu0
    %v1649 = vadd.f32 %v1635, %v1648
    %1650 = vdwg.mxu0
    %1651 = vmatpush.bf16.msra.mxu0 %v1046
    %1652 = vmatpush.bf16.msra.mxu0 %v1042
    %1653 = vmatpush.bf16.msra.mxu0 %v1038
    %1654 = vmatpush.bf16.msra.mxu0 %v1034
    %1655 = vmatpush.bf16.msra.mxu0 %v1030
    %1656 = vmatpush.bf16.msra.mxu0 %v1026
    %1657 = vmatpush.bf16.msra.mxu0 %v1022
    %1658 = vmatpush.bf16.msra.mxu0 %v1018
    %1659 = vmatmul.bf16.gmra.mxu0 %v121
    %v1660 = vpop.f32.mrf.mxu0
    %v1661 = vadd.f32 %v1647, %v1660
    %v1662 = vpop.f32.mrf.mxu0
    %v1663 = vadd.f32 %v1649, %v1662
    %1664 = vdwg.mxu0
    %1665 = vmatpush.bf16.msra.mxu0 %v1078
    %1666 = vmatpush.bf16.msra.mxu0 %v1074
    %1667 = vmatpush.bf16.msra.mxu0 %v1070
    %1668 = vmatpush.bf16.msra.mxu0 %v1066
    %1669 = vmatpush.bf16.msra.mxu0 %v1062
    %1670 = vmatpush.bf16.msra.mxu0 %v1058
    %1671 = vmatpush.bf16.msra.mxu0 %v1054
    %1672 = vmatpush.bf16.msra.mxu0 %v1050
    %1673 = vmatmul.bf16.gmra.mxu0 %v122
    %v1674 = vpop.f32.mrf.mxu0
    %v1675 = vadd.f32 %v1661, %v1674
    %v1676 = vpop.f32.mrf.mxu0
    %v1677 = vadd.f32 %v1663, %v1676
    %1678 = vdwg.mxu0
    %1679 = vmatpush.bf16.msra.mxu0 %v1110
    %1680 = vmatpush.bf16.msra.mxu0 %v1106
    %1681 = vmatpush.bf16.msra.mxu0 %v1102
    %1682 = vmatpush.bf16.msra.mxu0 %v1098
    %1683 = vmatpush.bf16.msra.mxu0 %v1094
    %1684 = vmatpush.bf16.msra.mxu0 %v1090
    %1685 = vmatpush.bf16.msra.mxu0 %v1086
    %1686 = vmatpush.bf16.msra.mxu0 %v1082
    %1687 = vmatmul.bf16.gmra.mxu0 %v123
    %v1688 = vpop.f32.mrf.mxu0
    %v1689 = vadd.f32 %v1675, %v1688
    %v1690 = vpop.f32.mrf.mxu0
    %v1691 = vadd.f32 %v1677, %v1690
    %1692 = vdwg.mxu0
    %1693 = vmatpush.bf16.msra.mxu0 0
    %1694 = vmatpush.bf16.msra.mxu0 0
    %1695 = vmatpush.bf16.msra.mxu0 0
    %1696 = vmatpush.bf16.msra.mxu0 0
    %1697 = vmatpush.bf16.msra.mxu0 0
    %1698 = vmatpush.bf16.msra.mxu0 0
    %1699 = vmatpush.bf16.msra.mxu0 0
    %1700 = vmatpush.bf16.msra.mxu0 %v1114
    %1701 = vmatmul.bf16.gmra.mxu0 %v1313
    %v1702 = vpop.f32.mrf.mxu0
    %v1703 = vadd.f32 %v1689, %v1702
    %v1704 = vpop.f32.mrf.mxu0
    %v1705 = vadd.f32 %v1691, %v1704
    %1706 = vdwg.mxu0
    %v1707 = vmax.f32 %v1409, 0.0
    %v1708 = vmax.f32 %v1507, 0.0
    %v1709 = vmax.f32 %v1605, 0.0
    %v1710 = vmax.f32 %v1703, 0.0
    %v1711 = vmax.f32 %v1411, 0.0
    %v1712 = vmax.f32 %v1509, 0.0
    %v1713 = vmax.f32 %v1607, 0.0
    %v1714 = vmax.f32 %v1705, 0.0
    %v1715 = vpack.c.bf16 %v1711, %v1707
    %v1716 = vpack.c.bf16 %v1712, %v1708
    %v1717 = vpack.c.bf16 %v1713, %v1709
    %v1718 = vpack.c.bf16 %v1714, %v1710
    %v1719 = vld [vmem:[%s3] sm:$0xf]
    %v1720 = vld [vmem:[%s3 + $0x4] sm:$0xf]
    %v1721 = vld [vmem:[%s3 + $0x8] sm:$0xf]
    %v1722 = vld [vmem:[%s3 + $0xc] sm:$0xf]
    %v1723 = vld [vmem:[%s3 + $0x10] sm:$0xf]
    %v1724 = vld [vmem:[%s3 + $0x14] sm:$0xf]
    %v1725 = vld [vmem:[%s3 + $0x18] sm:$0xf]
    %v1726 = vld [vmem:[%s3 + $0x1c] sm:$0xf]
    %v1727 = vld [vmem:[%s3 + $0x20] sm:$0xf]
    %v1728 = vld [vmem:[%s3 + $0x24] sm:$0xf]
    %v1729 = vld [vmem:[%s3 + $0x28] sm:$0xf]
    %v1730 = vld [vmem:[%s3 + $0x2c] sm:$0xf]
    %v1731 = vld [vmem:[%s3 + $0x30] sm:$0xf]
    %v1732 = vld [vmem:[%s3 + $0x34] sm:$0xf]
    %v1733 = vld [vmem:[%s3 + $0x38] sm:$0xf]
    %v1734 = vld [vmem:[%s3 + $0x3c] sm:$0xf]
    %v1735 = vld [vmem:[%s3 + $0x40] sm:$0xf]
    %v1736 = vld [vmem:[%s3 + $0x44] sm:$0xf]
    %v1737 = vld [vmem:[%s3 + $0x48] sm:$0xf]
    %v1738 = vld [vmem:[%s3 + $0x4c] sm:$0xf]
    %v1739 = vld [vmem:[%s3 + $0x50] sm:$0xf]
    %v1740 = vld [vmem:[%s3 + $0x54] sm:$0xf]
    %v1741 = vld [vmem:[%s3 + $0x58] sm:$0xf]
    %v1742 = vld [vmem:[%s3 + $0x5c] sm:$0xf]
    %v1743 = vld [vmem:[%s3 + $0x60] sm:$0xf]
    %v1744 = vld [vmem:[%s3 + $0x64] sm:$0xf]
    %v1745 = vld [vmem:[%s3 + $0x68] sm:$0xf]
    %v1746 = vld [vmem:[%s3 + $0x6c] sm:$0xf]
    %v1747 = vld [vmem:[%s3 + $0x70] sm:$0xf]
    %v1748 = vld [vmem:[%s3 + $0x74] sm:$0xf]
    %v1749 = vld [vmem:[%s3 + $0x78] sm:$0xf]
    %v1750 = vld [vmem:[%s3 + $0x7c] sm:$0xf]
    %v1751 = vld [vmem:[%s3 + $0x80] sm:$0xf]
    %v1752 = vld [vmem:[%s3 + $0x84] sm:$0xf]
    %v1753 = vld [vmem:[%s3 + $0x88] sm:$0xf]
    %v1754 = vld [vmem:[%s3 + $0x8c] sm:$0xf]
    %v1755 = vld [vmem:[%s3 + $0x90] sm:$0xf]
    %v1756 = vld [vmem:[%s3 + $0x94] sm:$0xf]
    %v1757 = vld [vmem:[%s3 + $0x98] sm:$0xf]
    %v1758 = vld [vmem:[%s3 + $0x9c] sm:$0xf]
    %v1759 = vld [vmem:[%s3 + $0xa0] sm:$0xf]
    %v1760 = vld [vmem:[%s3 + $0xa4] sm:$0xf]
    %v1761 = vld [vmem:[%s3 + $0xa8] sm:$0xf]
    %v1762 = vld [vmem:[%s3 + $0xac] sm:$0xf]
    %v1763 = vld [vmem:[%s3 + $0xb0] sm:$0xf]
    %v1764 = vld [vmem:[%s3 + $0xb4] sm:$0xf]
    %v1765 = vld [vmem:[%s3 + $0xb8] sm:$0xf]
    %v1766 = vld [vmem:[%s3 + $0xbc] sm:$0xf]
    %v1767 = vld [vmem:[%s3 + $0xc0] sm:$0xf]
    %v1768 = vld [vmem:[%s3 + $0xc4] sm:$0xf]
    %v1769 = vld [vmem:[%s3 + $0xc8] sm:$0xf]
    %v1770 = vld [vmem:[%s3 + $0xcc] sm:$0xf]
    %v1771 = vld [vmem:[%s3 + $0xd0] sm:$0xf]
    %v1772 = vld [vmem:[%s3 + $0xd4] sm:$0xf]
    %v1773 = vld [vmem:[%s3 + $0xd8] sm:$0xf]
    %v1774 = vld [vmem:[%s3 + $0xdc] sm:$0xf]
    %v1775 = vld [vmem:[%s3 + $0xe0] sm:$0xf]
    %v1776 = vld [vmem:[%s3 + $0xe4] sm:$0xf]
    %v1777 = vld [vmem:[%s3 + $0xe8] sm:$0xf]
    %v1778 = vld [vmem:[%s3 + $0xec] sm:$0xf]
    %v1779 = vld [vmem:[%s3 + $0xf0] sm:$0xf]
    %v1780 = vld [vmem:[%s3 + $0xf4] sm:$0xf]
    %v1781 = vld [vmem:[%s3 + $0xf8] sm:$0xf]
    %v1782 = vld [vmem:[%s3 + $0xfc] sm:$0xf]
    %v1783 = vld [vmem:[%s4] sm:$0x1]
    %v1785 = vperm.slane %v1783, 0
    %v1851 = vunpack.c.l.b16 %v1719
    %v1852 = vunpack.c.l.b16 %v1720
    %v1853 = vunpack.c.l.b16 %v1721
    %v1854 = vunpack.c.l.b16 %v1722
    %v1855 = vunpack.c.l.b16 %v1723
    %v1856 = vunpack.c.l.b16 %v1724
    %v1857 = vunpack.c.l.b16 %v1725
    %v1858 = vunpack.c.l.b16 %v1726
    %v1859 = vunpack.c.l.b16 %v1727
    %v1860 = vunpack.c.l.b16 %v1728
    %v1861 = vunpack.c.l.b16 %v1729
    %v1862 = vunpack.c.l.b16 %v1730
    %v1863 = vunpack.c.l.b16 %v1731
    %v1864 = vunpack.c.l.b16 %v1732
    %v1865 = vunpack.c.l.b16 %v1733
    %v1866 = vunpack.c.l.b16 %v1734
    %v1867 = vunpack.c.l.b16 %v1735
    %v1868 = vunpack.c.l.b16 %v1736
    %v1869 = vunpack.c.l.b16 %v1737
    %v1870 = vunpack.c.l.b16 %v1738
    %v1871 = vunpack.c.l.b16 %v1739
    %v1872 = vunpack.c.l.b16 %v1740
    %v1873 = vunpack.c.l.b16 %v1741
    %v1874 = vunpack.c.l.b16 %v1742
    %v1875 = vunpack.c.l.b16 %v1743
    %v1876 = vunpack.c.l.b16 %v1744
    %v1877 = vunpack.c.l.b16 %v1745
    %v1878 = vunpack.c.l.b16 %v1746
    %v1879 = vunpack.c.l.b16 %v1747
    %v1880 = vunpack.c.l.b16 %v1748
    %v1881 = vunpack.c.l.b16 %v1749
    %v1882 = vunpack.c.l.b16 %v1750
    %v1883 = vunpack.c.l.b16 %v1751
    %v1884 = vunpack.c.l.b16 %v1752
    %v1885 = vunpack.c.l.b16 %v1753
    %v1886 = vunpack.c.l.b16 %v1754
    %v1887 = vunpack.c.l.b16 %v1755
    %v1888 = vunpack.c.l.b16 %v1756
    %v1889 = vunpack.c.l.b16 %v1757
    %v1890 = vunpack.c.l.b16 %v1758
    %v1891 = vunpack.c.l.b16 %v1759
    %v1892 = vunpack.c.l.b16 %v1760
    %v1893 = vunpack.c.l.b16 %v1761
    %v1894 = vunpack.c.l.b16 %v1762
    %v1895 = vunpack.c.l.b16 %v1763
    %v1896 = vunpack.c.l.b16 %v1764
    %v1897 = vunpack.c.l.b16 %v1765
    %v1898 = vunpack.c.l.b16 %v1766
    %v1899 = vunpack.c.l.b16 %v1767
    %v1900 = vunpack.c.l.b16 %v1768
    %v1901 = vunpack.c.l.b16 %v1769
    %v1902 = vunpack.c.l.b16 %v1770
    %v1903 = vunpack.c.l.b16 %v1771
    %v1904 = vunpack.c.l.b16 %v1772
    %v1905 = vunpack.c.l.b16 %v1773
    %v1906 = vunpack.c.l.b16 %v1774
    %v1907 = vunpack.c.l.b16 %v1775
    %v1908 = vunpack.c.l.b16 %v1776
    %v1909 = vunpack.c.l.b16 %v1777
    %v1910 = vunpack.c.l.b16 %v1778
    %v1911 = vunpack.c.l.b16 %v1779
    %v1912 = vunpack.c.l.b16 %v1780
    %v1913 = vunpack.c.l.b16 %v1781
    %v1914 = vunpack.c.l.b16 %v1782
    %v1915 = vpack.c.b16 %v1852, %v1851
    %v1916 = vpack.c.b16 %v1854, %v1853
    %v1917 = vpack.c.b16 %v1856, %v1855
    %v1918 = vpack.c.b16 %v1858, %v1857
    %v1919 = vpack.c.b16 %v1860, %v1859
    %v1920 = vpack.c.b16 %v1862, %v1861
    %v1921 = vpack.c.b16 %v1864, %v1863
    %v1922 = vpack.c.b16 %v1866, %v1865
    %v1923 = vpack.c.b16 %v1868, %v1867
    %v1924 = vpack.c.b16 %v1870, %v1869
    %v1925 = vpack.c.b16 %v1872, %v1871
    %v1926 = vpack.c.b16 %v1874, %v1873
    %v1927 = vpack.c.b16 %v1876, %v1875
    %v1928 = vpack.c.b16 %v1878, %v1877
    %v1929 = vpack.c.b16 %v1880, %v1879
    %v1930 = vpack.c.b16 %v1882, %v1881
    %v1931 = vpack.c.b16 %v1884, %v1883
    %v1932 = vpack.c.b16 %v1886, %v1885
    %v1933 = vpack.c.b16 %v1888, %v1887
    %v1934 = vpack.c.b16 %v1890, %v1889
    %v1935 = vpack.c.b16 %v1892, %v1891
    %v1936 = vpack.c.b16 %v1894, %v1893
    %v1937 = vpack.c.b16 %v1896, %v1895
    %v1938 = vpack.c.b16 %v1898, %v1897
    %v1939 = vpack.c.b16 %v1900, %v1899
    %v1940 = vpack.c.b16 %v1902, %v1901
    %v1941 = vpack.c.b16 %v1904, %v1903
    %v1942 = vpack.c.b16 %v1906, %v1905
    %v1943 = vpack.c.b16 %v1908, %v1907
    %v1944 = vpack.c.b16 %v1910, %v1909
    %v1945 = vpack.c.b16 %v1912, %v1911
    %v1946 = vpack.c.b16 %v1914, %v1913
    %1979 = vmatpush.bf16.msra.mxu0 %v1922
    %1980 = vmatpush.bf16.msra.mxu0 %v1921
    %1981 = vmatpush.bf16.msra.mxu0 %v1920
    %1982 = vmatpush.bf16.msra.mxu0 %v1919
    %1983 = vmatpush.bf16.msra.mxu0 %v1918
    %1984 = vmatpush.bf16.msra.mxu0 %v1917
    %1985 = vmatpush.bf16.msra.mxu0 %v1916
    %1986 = vmatpush.bf16.msra.mxu0 %v1915
    %1987 = vmatmul.bf16.gmra.mxu0 %v1715
    %v1988 = vpop.f32.mrf.mxu0
    %v1989 = vadd.f32 %v1785, %v1988
    %v1990 = vpop.f32.mrf.mxu0
    %v1991 = vadd.f32 %v1785, %v1990
    %1992 = vdwg.mxu0
    %1993 = vmatpush.bf16.msra.mxu0 %v1930
    %1994 = vmatpush.bf16.msra.mxu0 %v1929
    %1995 = vmatpush.bf16.msra.mxu0 %v1928
    %1996 = vmatpush.bf16.msra.mxu0 %v1927
    %1997 = vmatpush.bf16.msra.mxu0 %v1926
    %1998 = vmatpush.bf16.msra.mxu0 %v1925
    %1999 = vmatpush.bf16.msra.mxu0 %v1924
    %2000 = vmatpush.bf16.msra.mxu0 %v1923
    %2001 = vmatmul.bf16.gmra.mxu0 %v1716
    %v2002 = vpop.f32.mrf.mxu0
    %v2003 = vadd.f32 %v1989, %v2002
    %v2004 = vpop.f32.mrf.mxu0
    %v2005 = vadd.f32 %v1991, %v2004
    %2006 = vdwg.mxu0
    %2007 = vmatpush.bf16.msra.mxu0 %v1938
    %2008 = vmatpush.bf16.msra.mxu0 %v1937
    %2009 = vmatpush.bf16.msra.mxu0 %v1936
    %2010 = vmatpush.bf16.msra.mxu0 %v1935
    %2011 = vmatpush.bf16.msra.mxu0 %v1934
    %2012 = vmatpush.bf16.msra.mxu0 %v1933
    %2013 = vmatpush.bf16.msra.mxu0 %v1932
    %2014 = vmatpush.bf16.msra.mxu0 %v1931
    %2015 = vmatmul.bf16.gmra.mxu0 %v1717
    %v2016 = vpop.f32.mrf.mxu0
    %v2017 = vadd.f32 %v2003, %v2016
    %v2018 = vpop.f32.mrf.mxu0
    %v2019 = vadd.f32 %v2005, %v2018
    %2020 = vdwg.mxu0
    %2021 = vmatpush.bf16.msra.mxu0 %v1946
    %2022 = vmatpush.bf16.msra.mxu0 %v1945
    %2023 = vmatpush.bf16.msra.mxu0 %v1944
    %2024 = vmatpush.bf16.msra.mxu0 %v1943
    %2025 = vmatpush.bf16.msra.mxu0 %v1942
    %2026 = vmatpush.bf16.msra.mxu0 %v1941
    %2027 = vmatpush.bf16.msra.mxu0 %v1940
    %2028 = vmatpush.bf16.msra.mxu0 %v1939
    %2029 = vmatmul.bf16.gmra.mxu0 %v1718
    %v2030 = vpop.f32.mrf.mxu0
    %v2031 = vadd.f32 %v2017, %v2030
    %v2032 = vpop.f32.mrf.mxu0
    %v2033 = vadd.f32 %v2019, %v2032
    %2034 = vdwg.mxu0
    %v2035 = vmax.f32 %v2031, 0.0
    %v2036 = vmax.f32 %v2033, 0.0
    %v2037 = vpack.c.bf16 %v2036, %v2035
    %v2038 = vld [vmem:[#allocation4] sm:$0xff]
    %v2039 = vld [vmem:[#allocation4 + $0x8] sm:$0xff]
    %v2040 = vld [vmem:[#allocation4 + $0x10] sm:$0xff]
    %v2041 = vld [vmem:[#allocation4 + $0x18] sm:$0xff]
    %v2042 = vld [vmem:[#allocation4 + $0x20] sm:$0xff]
    %v2043 = vld [vmem:[#allocation4 + $0x28] sm:$0xff]
    %v2044 = vld [vmem:[#allocation4 + $0x30] sm:$0xff]
    %v2045 = vld [vmem:[#allocation4 + $0x38] sm:$0xff]
    %v2046 = vld [vmem:[#allocation4 + $0x40] sm:$0xff]
    %v2047 = vld [vmem:[#allocation4 + $0x48] sm:$0xff]
    %v2048 = vld [vmem:[#allocation4 + $0x50] sm:$0xff]
    %v2049 = vld [vmem:[#allocation4 + $0x58] sm:$0xff]
    %v2050 = vld [vmem:[#allocation4 + $0x60] sm:$0xff]
    %v2051 = vld [vmem:[#allocation4 + $0x68] sm:$0xff]
    %v2052 = vld [vmem:[#allocation4 + $0x70] sm:$0xff]
    %v2053 = vld [vmem:[#allocation4 + $0x78] sm:$0xff]
    %v2054 = vld [vmem:[%s6] sm:$0x3]
    %v2056 = vperm.slane %v2054, 0
    %v2057 = vperm.slane %v2054, 1
    %v2076 = vunpack.c.l.b16 %v2038
    %v2077 = vunpack.c.h.b16 %v2038
    %v2078 = vunpack.c.l.b16 %v2039
    %v2079 = vunpack.c.h.b16 %v2039
    %v2080 = vunpack.c.l.b16 %v2040
    %v2081 = vunpack.c.h.b16 %v2040
    %v2082 = vunpack.c.l.b16 %v2041
    %v2083 = vunpack.c.h.b16 %v2041
    %v2084 = vunpack.c.l.b16 %v2042
    %v2085 = vunpack.c.h.b16 %v2042
    %v2086 = vunpack.c.l.b16 %v2043
    %v2087 = vunpack.c.h.b16 %v2043
    %v2088 = vunpack.c.l.b16 %v2044
    %v2089 = vunpack.c.h.b16 %v2044
    %v2090 = vunpack.c.l.b16 %v2045
    %v2091 = vunpack.c.h.b16 %v2045
    %v2092 = vunpack.c.l.b16 %v2046
    %v2093 = vunpack.c.h.b16 %v2046
    %v2094 = vunpack.c.l.b16 %v2047
    %v2095 = vunpack.c.h.b16 %v2047
    %v2096 = vunpack.c.l.b16 %v2048
    %v2097 = vunpack.c.h.b16 %v2048
    %v2098 = vunpack.c.l.b16 %v2049
    %v2099 = vunpack.c.h.b16 %v2049
    %v2100 = vunpack.c.l.b16 %v2050
    %v2101 = vunpack.c.h.b16 %v2050
    %v2102 = vunpack.c.l.b16 %v2051
    %v2103 = vunpack.c.h.b16 %v2051
    %v2104 = vunpack.c.l.b16 %v2052
    %v2105 = vunpack.c.h.b16 %v2052
    %v2106 = vunpack.c.l.b16 %v2053
    %v2107 = vunpack.c.h.b16 %v2053
    %v2108 = vpack.c.b16 %v2078, %v2076
    %v2109 = vpack.c.b16 %v2079, %v2077
    %v2110 = vpack.c.b16 %v2082, %v2080
    %v2111 = vpack.c.b16 %v2083, %v2081
    %v2112 = vpack.c.b16 %v2086, %v2084
    %v2113 = vpack.c.b16 %v2087, %v2085
    %v2114 = vpack.c.b16 %v2090, %v2088
    %v2115 = vpack.c.b16 %v2091, %v2089
    %v2116 = vpack.c.b16 %v2094, %v2092
    %v2117 = vpack.c.b16 %v2095, %v2093
    %v2118 = vpack.c.b16 %v2098, %v2096
    %v2119 = vpack.c.b16 %v2099, %v2097
    %v2120 = vpack.c.b16 %v2102, %v2100
    %v2121 = vpack.c.b16 %v2103, %v2101
    %v2122 = vpack.c.b16 %v2106, %v2104
    %v2123 = vpack.c.b16 %v2107, %v2105
    %2140 = vmatpush.bf16.msra.mxu0 %v2122
    %2141 = vmatpush.bf16.msra.mxu0 %v2120
    %2142 = vmatpush.bf16.msra.mxu0 %v2118
    %2143 = vmatpush.bf16.msra.mxu0 %v2116
    %2144 = vmatpush.bf16.msra.mxu0 %v2114
    %2145 = vmatpush.bf16.msra.mxu0 %v2112
    %2146 = vmatpush.bf16.msra.mxu0 %v2110
    %2147 = vmatpush.bf16.msra.mxu0 %v2108
    %2148 = vmatmul.bf16.gmra.mxu0 %v2037
    %v2149 = vpop.f32.mrf.mxu0
    %v2150 = vadd.f32 %v2056, %v2149
    %v2151 = vpop.f32.mrf.mxu0
    %v2152 = vadd.f32 %v2056, %v2151
    %2153 = vdwg.mxu0
    %2154 = vmatpush.bf16.msra.mxu0 %v2123
    %2155 = vmatpush.bf16.msra.mxu0 %v2121
    %2156 = vmatpush.bf16.msra.mxu0 %v2119
    %2157 = vmatpush.bf16.msra.mxu0 %v2117
    %2158 = vmatpush.bf16.msra.mxu0 %v2115
    %2159 = vmatpush.bf16.msra.mxu0 %v2113
    %2160 = vmatpush.bf16.msra.mxu0 %v2111
    %2161 = vmatpush.bf16.msra.mxu0 %v2109
    %2162 = vmatmul.bf16.gmra.mxu0 %v2037
    %v2163 = vpop.f32.mrf.mxu0
    %v2164 = vadd.f32 %v2057, %v2163
    %v2165 = vpop.f32.mrf.mxu0
    %v2166 = vadd.f32 %v2057, %v2165
    %2167 = vdwg.mxu0
    %v2168 = vmax.f32 %v2164, 0.0
    %v2169 = vmax.f32 %v2166, 0.0
    %v2170 = vpack.c.bf16 %v2169, %v2168
    %v2171 = vld [vmem:[#allocation6] sm:$0xff]
    %v2172 = vld [vmem:[#allocation6 + $0x8] sm:$0xff]
    %v2173 = vld [vmem:[#allocation6 + $0x10] sm:$0xff]
    %v2174 = vld [vmem:[#allocation6 + $0x18] sm:$0xff]
    %v2175 = vld [vmem:[#allocation6 + $0x20] sm:$0xff]
    %v2176 = vld [vmem:[#allocation6 + $0x28] sm:$0xff]
    %v2177 = vld [vmem:[#allocation6 + $0x30] sm:$0xff]
    %v2178 = vld [vmem:[#allocation6 + $0x38] sm:$0xff]
    %v2179 = vld [vmem:[#allocation6 + $0x40] sm:$0xff]
    %v2180 = vld [vmem:[#allocation6 + $0x48] sm:$0xff]
    %v2181 = vld [vmem:[#allocation6 + $0x50] sm:$0xff]
    %v2182 = vld [vmem:[#allocation6 + $0x58] sm:$0xff]
    %v2183 = vld [vmem:[#allocation6 + $0x60] sm:$0xff]
    %v2184 = vld [vmem:[#allocation6 + $0x68] sm:$0xff]
    %v2185 = vld [vmem:[#allocation6 + $0x70] sm:$0xff]
    %v2186 = vld [vmem:[#allocation6 + $0x78] sm:$0xff]
    %v2187 = vld [vmem:[#allocation6 + $0x80] sm:$0xff]
    %v2188 = vld [vmem:[#allocation6 + $0x88] sm:$0xff]
    %v2189 = vld [vmem:[#allocation6 + $0x90] sm:$0xff]
    %v2190 = vld [vmem:[#allocation6 + $0x98] sm:$0xff]
    %v2191 = vld [vmem:[#allocation6 + $0xa0] sm:$0xff]
    %v2192 = vld [vmem:[#allocation6 + $0xa8] sm:$0xff]
    %v2193 = vld [vmem:[#allocation6 + $0xb0] sm:$0xff]
    %v2194 = vld [vmem:[#allocation6 + $0xb8] sm:$0xff]
    %v2195 = vld [vmem:[#allocation6 + $0xc0] sm:$0xff]
    %v2196 = vld [vmem:[#allocation6 + $0xc8] sm:$0xff]
    %v2197 = vld [vmem:[#allocation6 + $0xd0] sm:$0xff]
    %v2198 = vld [vmem:[#allocation6 + $0xd8] sm:$0xff]
    %v2199 = vld [vmem:[#allocation6 + $0xe0] sm:$0xff]
    %v2200 = vld [vmem:[#allocation6 + $0xe8] sm:$0xff]
    %v2201 = vld [vmem:[#allocation6 + $0xf0] sm:$0xff]
    %v2202 = vld [vmem:[#allocation6 + $0xf8] sm:$0xff]
    %v2203 = vld [vmem:[%s8] sm:$0xf]
    %v2205 = vperm.slane %v2203, 0
    %v2206 = vperm.slane %v2203, 1
    %v2207 = vperm.slane %v2203, 2
    %v2208 = vperm.slane %v2203, 3
    %v2245 = vunpack.c.l.b16 %v2171
    %v2246 = vunpack.c.h.b16 %v2171
    %v2247 = vunpack.c.l.b16 %v2172
    %v2248 = vunpack.c.h.b16 %v2172
    %v2249 = vunpack.c.l.b16 %v2173
    %v2250 = vunpack.c.h.b16 %v2173
    %v2251 = vunpack.c.l.b16 %v2174
    %v2252 = vunpack.c.h.b16 %v2174
    %v2253 = vunpack.c.l.b16 %v2175
    %v2254 = vunpack.c.h.b16 %v2175
    %v2255 = vunpack.c.l.b16 %v2176
    %v2256 = vunpack.c.h.b16 %v2176
    %v2257 = vunpack.c.l.b16 %v2177
    %v2258 = vunpack.c.h.b16 %v2177
    %v2259 = vunpack.c.l.b16 %v2178
    %v2260 = vunpack.c.h.b16 %v2178
    %v2261 = vunpack.c.l.b16 %v2179
    %v2262 = vunpack.c.h.b16 %v2179
    %v2263 = vunpack.c.l.b16 %v2180
    %v2264 = vunpack.c.h.b16 %v2180
    %v2265 = vunpack.c.l.b16 %v2181
    %v2266 = vunpack.c.h.b16 %v2181
    %v2267 = vunpack.c.l.b16 %v2182
    %v2268 = vunpack.c.h.b16 %v2182
    %v2269 = vunpack.c.l.b16 %v2183
    %v2270 = vunpack.c.h.b16 %v2183
    %v2271 = vunpack.c.l.b16 %v2184
    %v2272 = vunpack.c.h.b16 %v2184
    %v2273 = vunpack.c.l.b16 %v2185
    %v2274 = vunpack.c.h.b16 %v2185
    %v2275 = vunpack.c.l.b16 %v2186
    %v2276 = vunpack.c.h.b16 %v2186
    %v2277 = vunpack.c.l.b16 %v2187
    %v2278 = vunpack.c.h.b16 %v2187
    %v2279 = vunpack.c.l.b16 %v2188
    %v2280 = vunpack.c.h.b16 %v2188
    %v2281 = vunpack.c.l.b16 %v2189
    %v2282 = vunpack.c.h.b16 %v2189
    %v2283 = vunpack.c.l.b16 %v2190
    %v2284 = vunpack.c.h.b16 %v2190
    %v2285 = vunpack.c.l.b16 %v2191
    %v2286 = vunpack.c.h.b16 %v2191
    %v2287 = vunpack.c.l.b16 %v2192
    %v2288 = vunpack.c.h.b16 %v2192
    %v2289 = vunpack.c.l.b16 %v2193
    %v2290 = vunpack.c.h.b16 %v2193
    %v2291 = vunpack.c.l.b16 %v2194
    %v2292 = vunpack.c.h.b16 %v2194
    %v2293 = vunpack.c.l.b16 %v2195
    %v2294 = vunpack.c.h.b16 %v2195
    %v2295 = vunpack.c.l.b16 %v2196
    %v2296 = vunpack.c.h.b16 %v2196
    %v2297 = vunpack.c.l.b16 %v2197
    %v2298 = vunpack.c.h.b16 %v2197
    %v2299 = vunpack.c.l.b16 %v2198
    %v2300 = vunpack.c.h.b16 %v2198
    %v2301 = vunpack.c.l.b16 %v2199
    %v2302 = vunpack.c.h.b16 %v2199
    %v2303 = vunpack.c.l.b16 %v2200
    %v2304 = vunpack.c.h.b16 %v2200
    %v2305 = vunpack.c.l.b16 %v2201
    %v2306 = vunpack.c.h.b16 %v2201
    %v2307 = vunpack.c.l.b16 %v2202
    %v2308 = vunpack.c.h.b16 %v2202
    %v2309 = vpack.c.b16 %v2249, %v2245
    %v2310 = vpack.c.b16 %v2250, %v2246
    %v2311 = vpack.c.b16 %v2251, %v2247
    %v2312 = vpack.c.b16 %v2252, %v2248
    %v2313 = vpack.c.b16 %v2257, %v2253
    %v2314 = vpack.c.b16 %v2258, %v2254
    %v2315 = vpack.c.b16 %v2259, %v2255
    %v2316 = vpack.c.b16 %v2260, %v2256
    %v2317 = vpack.c.b16 %v2265, %v2261
    %v2318 = vpack.c.b16 %v2266, %v2262
    %v2319 = vpack.c.b16 %v2267, %v2263
    %v2320 = vpack.c.b16 %v2268, %v2264
    %v2321 = vpack.c.b16 %v2273, %v2269
    %v2322 = vpack.c.b16 %v2274, %v2270
    %v2323 = vpack.c.b16 %v2275, %v2271
    %v2324 = vpack.c.b16 %v2276, %v2272
    %v2325 = vpack.c.b16 %v2281, %v2277
    %v2326 = vpack.c.b16 %v2282, %v2278
    %v2327 = vpack.c.b16 %v2283, %v2279
    %v2328 = vpack.c.b16 %v2284, %v2280
    %v2329 = vpack.c.b16 %v2289, %v2285
    %v2330 = vpack.c.b16 %v2290, %v2286
    %v2331 = vpack.c.b16 %v2291, %v2287
    %v2332 = vpack.c.b16 %v2292, %v2288
    %v2333 = vpack.c.b16 %v2297, %v2293
    %v2334 = vpack.c.b16 %v2298, %v2294
    %v2335 = vpack.c.b16 %v2299, %v2295
    %v2336 = vpack.c.b16 %v2300, %v2296
    %v2337 = vpack.c.b16 %v2305, %v2301
    %v2338 = vpack.c.b16 %v2306, %v2302
    %v2339 = vpack.c.b16 %v2307, %v2303
    %v2340 = vpack.c.b16 %v2308, %v2304
    %2373 = vmatpush.bf16.msra.mxu0 %v2337
    %2374 = vmatpush.bf16.msra.mxu0 %v2333
    %2375 = vmatpush.bf16.msra.mxu0 %v2329
    %2376 = vmatpush.bf16.msra.mxu0 %v2325
    %2377 = vmatpush.bf16.msra.mxu0 %v2321
    %2378 = vmatpush.bf16.msra.mxu0 %v2317
    %2379 = vmatpush.bf16.msra.mxu0 %v2313
    %2380 = vmatpush.bf16.msra.mxu0 %v2309
    %2381 = vmatmul.bf16.gmra.mxu0 %v2170
    %v2382 = vpop.f32.mrf.mxu0
    %v2383 = vadd.f32 %v2205, %v2382
    %v2384 = vpop.f32.mrf.mxu0
    %v2385 = vadd.f32 %v2205, %v2384
    %2386 = vdwg.mxu0
    %2387 = vmatpush.bf16.msra.mxu0 %v2338
    %2388 = vmatpush.bf16.msra.mxu0 %v2334
    %2389 = vmatpush.bf16.msra.mxu0 %v2330
    %2390 = vmatpush.bf16.msra.mxu0 %v2326
    %2391 = vmatpush.bf16.msra.mxu0 %v2322
    %2392 = vmatpush.bf16.msra.mxu0 %v2318
    %2393 = vmatpush.bf16.msra.mxu0 %v2314
    %2394 = vmatpush.bf16.msra.mxu0 %v2310
    %2395 = vmatmul.bf16.gmra.mxu0 %v2170
    %v2396 = vpop.f32.mrf.mxu0
    %v2397 = vadd.f32 %v2206, %v2396
    %v2398 = vpop.f32.mrf.mxu0
    %v2399 = vadd.f32 %v2206, %v2398
    %2400 = vdwg.mxu0
    %2401 = vmatpush.bf16.msra.mxu0 %v2339
    %2402 = vmatpush.bf16.msra.mxu0 %v2335
    %2403 = vmatpush.bf16.msra.mxu0 %v2331
    %2404 = vmatpush.bf16.msra.mxu0 %v2327
    %2405 = vmatpush.bf16.msra.mxu0 %v2323
    %2406 = vmatpush.bf16.msra.mxu0 %v2319
    %2407 = vmatpush.bf16.msra.mxu0 %v2315
    %2408 = vmatpush.bf16.msra.mxu0 %v2311
    %2409 = vmatmul.bf16.gmra.mxu0 %v2170
    %v2410 = vpop.f32.mrf.mxu0
    %v2411 = vadd.f32 %v2207, %v2410
    %v2412 = vpop.f32.mrf.mxu0
    %v2413 = vadd.f32 %v2207, %v2412
    %2414 = vdwg.mxu0
    %2415 = vmatpush.bf16.msra.mxu0 %v2340
    %2416 = vmatpush.bf16.msra.mxu0 %v2336
    %2417 = vmatpush.bf16.msra.mxu0 %v2332
    %2418 = vmatpush.bf16.msra.mxu0 %v2328
    %2419 = vmatpush.bf16.msra.mxu0 %v2324
    %2420 = vmatpush.bf16.msra.mxu0 %v2320
    %2421 = vmatpush.bf16.msra.mxu0 %v2316
    %2422 = vmatpush.bf16.msra.mxu0 %v2312
    %2423 = vmatmul.bf16.gmra.mxu0 %v2170
    %v2424 = vpop.f32.mrf.mxu0
    %v2425 = vadd.f32 %v2208, %v2424
    %v2426 = vpop.f32.mrf.mxu0
    %v2427 = vadd.f32 %v2208, %v2426
    %2428 = vdwg.mxu0
    %v2429 = vmax.f32 %v2383, 0.0
    %v2430 = vmax.f32 %v2397, 0.0
    %v2431 = vmax.f32 %v2411, 0.0
    %v2432 = vmax.f32 %v2425, 0.0
    %v2433 = vmax.f32 %v2385, 0.0
    %v2434 = vmax.f32 %v2399, 0.0
    %v2435 = vmax.f32 %v2413, 0.0
    %v2436 = vmax.f32 %v2427, 0.0
    %v2437 = vpack.c.bf16 %v2433, %v2429
    %v2438 = vpack.c.bf16 %v2434, %v2430
    %v2439 = vpack.c.bf16 %v2435, %v2431
    %v2440 = vpack.c.bf16 %v2436, %v2432
    %v2441 = vld [vmem:[#allocation7] sm:$0xff]
    %v2442 = vld [vmem:[#allocation7 + $0x8] sm:$0xff]
    %v2443 = vld [vmem:[#allocation7 + $0x10] sm:$0xff]
    %v2444 = vld [vmem:[#allocation7 + $0x18] sm:$0xf]
    %v2445 = vld [vmem:[#allocation7 + $0x1c] sm:$0xff]
    %v2446 = vld [vmem:[#allocation7 + $0x24] sm:$0xff]
    %v2447 = vld [vmem:[#allocation7 + $0x2c] sm:$0xff]
    %v2448 = vld [vmem:[#allocation7 + $0x34] sm:$0xf]
    %v2449 = vld [vmem:[#allocation7 + $0x38] sm:$0xff]
    %v2450 = vld [vmem:[#allocation7 + $0x40] sm:$0xff]
    %v2451 = vld [vmem:[#allocation7 + $0x48] sm:$0xff]
    %v2452 = vld [vmem:[#allocation7 + $0x50] sm:$0xf]
    %v2453 = vld [vmem:[#allocation7 + $0x54] sm:$0xff]
    %v2454 = vld [vmem:[#allocation7 + $0x5c] sm:$0xff]
    %v2455 = vld [vmem:[#allocation7 + $0x64] sm:$0xff]
    %v2456 = vld [vmem:[#allocation7 + $0x6c] sm:$0xf]
    %v2457 = vld [vmem:[#allocation7 + $0x70] sm:$0xff]
    %v2458 = vld [vmem:[#allocation7 + $0x78] sm:$0xff]
    %v2459 = vld [vmem:[#allocation7 + $0x80] sm:$0xff]
    %v2460 = vld [vmem:[#allocation7 + $0x88] sm:$0xf]
    %v2461 = vld [vmem:[#allocation7 + $0x8c] sm:$0xff]
    %v2462 = vld [vmem:[#allocation7 + $0x94] sm:$0xff]
    %v2463 = vld [vmem:[#allocation7 + $0x9c] sm:$0xff]
    %v2464 = vld [vmem:[#allocation7 + $0xa4] sm:$0xf]
    %v2465 = vld [vmem:[#allocation7 + $0xa8] sm:$0xff]
    %v2466 = vld [vmem:[#allocation7 + $0xb0] sm:$0xff]
    %v2467 = vld [vmem:[#allocation7 + $0xb8] sm:$0xff]
    %v2468 = vld [vmem:[#allocation7 + $0xc0] sm:$0xf]
    %v2469 = vld [vmem:[#allocation7 + $0xc4] sm:$0xff]
    %v2470 = vld [vmem:[#allocation7 + $0xcc] sm:$0xff]
    %v2471 = vld [vmem:[#allocation7 + $0xd4] sm:$0xff]
    %v2472 = vld [vmem:[#allocation7 + $0xdc] sm:$0xf]
    %v2473 = vld [vmem:[#allocation7 + $0xe0] sm:$0xff]
    %v2474 = vld [vmem:[#allocation7 + $0xe8] sm:$0xff]
    %v2475 = vld [vmem:[#allocation7 + $0xf0] sm:$0xff]
    %v2476 = vld [vmem:[#allocation7 + $0xf8] sm:$0xf]
    %v2477 = vld [vmem:[#allocation7 + $0xfc] sm:$0xff]
    %v2478 = vld [vmem:[#allocation7 + $0x104] sm:$0xff]
    %v2479 = vld [vmem:[#allocation7 + $0x10c] sm:$0xff]
    %v2480 = vld [vmem:[#allocation7 + $0x114] sm:$0xf]
    %v2481 = vld [vmem:[#allocation7 + $0x118] sm:$0xff]
    %v2482 = vld [vmem:[#allocation7 + $0x120] sm:$0xff]
    %v2483 = vld [vmem:[#allocation7 + $0x128] sm:$0xff]
    %v2484 = vld [vmem:[#allocation7 + $0x130] sm:$0xf]
    %v2485 = vld [vmem:[#allocation7 + $0x134] sm:$0xff]
    %v2486 = vld [vmem:[#allocation7 + $0x13c] sm:$0xff]
    %v2487 = vld [vmem:[#allocation7 + $0x144] sm:$0xff]
    %v2488 = vld [vmem:[#allocation7 + $0x14c] sm:$0xf]
    %v2489 = vld [vmem:[#allocation7 + $0x150] sm:$0xff]
    %v2490 = vld [vmem:[#allocation7 + $0x158] sm:$0xff]
    %v2491 = vld [vmem:[#allocation7 + $0x160] sm:$0xff]
    %v2492 = vld [vmem:[#allocation7 + $0x168] sm:$0xf]
    %v2493 = vld [vmem:[#allocation7 + $0x16c] sm:$0xff]
    %v2494 = vld [vmem:[#allocation7 + $0x174] sm:$0xff]
    %v2495 = vld [vmem:[#allocation7 + $0x17c] sm:$0xff]
    %v2496 = vld [vmem:[#allocation7 + $0x184] sm:$0xf]
    %v2497 = vld [vmem:[#allocation7 + $0x188] sm:$0xff]
    %v2498 = vld [vmem:[#allocation7 + $0x190] sm:$0xff]
    %v2499 = vld [vmem:[#allocation7 + $0x198] sm:$0xff]
    %v2500 = vld [vmem:[#allocation7 + $0x1a0] sm:$0xf]
    %v2501 = vld [vmem:[#allocation7 + $0x1a4] sm:$0xff]
    %v2502 = vld [vmem:[#allocation7 + $0x1ac] sm:$0xff]
    %v2503 = vld [vmem:[#allocation7 + $0x1b4] sm:$0xff]
    %v2504 = vld [vmem:[#allocation7 + $0x1bc] sm:$0xf]
    %v2505 = vld [vmem:[#allocation7 + $0x1c0] sm:$0xff]
    %v2506 = vld [vmem:[#allocation7 + $0x1c8] sm:$0xff]
    %v2507 = vld [vmem:[#allocation7 + $0x1d0] sm:$0xff]
    %v2508 = vld [vmem:[#allocation7 + $0x1d8] sm:$0xf]
    %v2509 = vld [vmem:[#allocation7 + $0x1dc] sm:$0xff]
    %v2510 = vld [vmem:[#allocation7 + $0x1e4] sm:$0xff]
    %v2511 = vld [vmem:[#allocation7 + $0x1ec] sm:$0xff]
    %v2512 = vld [vmem:[#allocation7 + $0x1f4] sm:$0xf]
    %v2513 = vld [vmem:[#allocation7 + $0x1f8] sm:$0xff]
    %v2514 = vld [vmem:[#allocation7 + $0x200] sm:$0xff]
    %v2515 = vld [vmem:[#allocation7 + $0x208] sm:$0xff]
    %v2516 = vld [vmem:[#allocation7 + $0x210] sm:$0xf]
    %v2517 = vld [vmem:[#allocation7 + $0x214] sm:$0xff]
    %v2518 = vld [vmem:[#allocation7 + $0x21c] sm:$0xff]
    %v2519 = vld [vmem:[#allocation7 + $0x224] sm:$0xff]
    %v2520 = vld [vmem:[#allocation7 + $0x22c] sm:$0xf]
    %v2521 = vld [vmem:[#allocation7 + $0x230] sm:$0xff]
    %v2522 = vld [vmem:[#allocation7 + $0x238] sm:$0xff]
    %v2523 = vld [vmem:[#allocation7 + $0x240] sm:$0xff]
    %v2524 = vld [vmem:[#allocation7 + $0x248] sm:$0xf]
    %v2525 = vld [vmem:[#allocation7 + $0x24c] sm:$0xff]
    %v2526 = vld [vmem:[#allocation7 + $0x254] sm:$0xff]
    %v2527 = vld [vmem:[#allocation7 + $0x25c] sm:$0xff]
    %v2528 = vld [vmem:[#allocation7 + $0x264] sm:$0xf]
    %v2529 = vld [vmem:[#allocation7 + $0x268] sm:$0xff]
    %v2530 = vld [vmem:[#allocation7 + $0x270] sm:$0xff]
    %v2531 = vld [vmem:[#allocation7 + $0x278] sm:$0xff]
    %v2532 = vld [vmem:[#allocation7 + $0x280] sm:$0xf]
    %v2533 = vld [vmem:[#allocation7 + $0x284] sm:$0xff]
    %v2534 = vld [vmem:[#allocation7 + $0x28c] sm:$0xff]
    %v2535 = vld [vmem:[#allocation7 + $0x294] sm:$0xff]
    %v2536 = vld [vmem:[#allocation7 + $0x29c] sm:$0xf]
    %v2537 = vld [vmem:[#allocation7 + $0x2a0] sm:$0xff]
    %v2538 = vld [vmem:[#allocation7 + $0x2a8] sm:$0xff]
    %v2539 = vld [vmem:[#allocation7 + $0x2b0] sm:$0xff]
    %v2540 = vld [vmem:[#allocation7 + $0x2b8] sm:$0xf]
    %v2541 = vld [vmem:[#allocation7 + $0x2bc] sm:$0xff]
    %v2542 = vld [vmem:[#allocation7 + $0x2c4] sm:$0xff]
    %v2543 = vld [vmem:[#allocation7 + $0x2cc] sm:$0xff]
    %v2544 = vld [vmem:[#allocation7 + $0x2d4] sm:$0xf]
    %v2545 = vld [vmem:[#allocation7 + $0x2d8] sm:$0xff]
    %v2546 = vld [vmem:[#allocation7 + $0x2e0] sm:$0xff]
    %v2547 = vld [vmem:[#allocation7 + $0x2e8] sm:$0xff]
    %v2548 = vld [vmem:[#allocation7 + $0x2f0] sm:$0xf]
    %v2549 = vld [vmem:[#allocation7 + $0x2f4] sm:$0xff]
    %v2550 = vld [vmem:[#allocation7 + $0x2fc] sm:$0xff]
    %v2551 = vld [vmem:[#allocation7 + $0x304] sm:$0xff]
    %v2552 = vld [vmem:[#allocation7 + $0x30c] sm:$0xf]
    %v2553 = vld [vmem:[#allocation7 + $0x310] sm:$0xff]
    %v2554 = vld [vmem:[#allocation7 + $0x318] sm:$0xff]
    %v2555 = vld [vmem:[#allocation7 + $0x320] sm:$0xff]
    %v2556 = vld [vmem:[#allocation7 + $0x328] sm:$0xf]
    %v2557 = vld [vmem:[#allocation7 + $0x32c] sm:$0xff]
    %v2558 = vld [vmem:[#allocation7 + $0x334] sm:$0xff]
    %v2559 = vld [vmem:[#allocation7 + $0x33c] sm:$0xff]
    %v2560 = vld [vmem:[#allocation7 + $0x344] sm:$0xf]
    %v2561 = vld [vmem:[#allocation7 + $0x348] sm:$0xff]
    %v2562 = vld [vmem:[#allocation7 + $0x350] sm:$0xff]
    %v2563 = vld [vmem:[#allocation7 + $0x358] sm:$0xff]
    %v2564 = vld [vmem:[#allocation7 + $0x360] sm:$0xf]
    %v2565 = vld [vmem:[#allocation7 + $0x364] sm:$0xff]
    %v2566 = vld [vmem:[#allocation7 + $0x36c] sm:$0xff]
    %v2567 = vld [vmem:[#allocation7 + $0x374] sm:$0xff]
    %v2568 = vld [vmem:[#allocation7 + $0x37c] sm:$0xf]
    %v2569 = vld [vmem:[#allocation7 + $0x380] sm:$0xff]
    %v2570 = vld [vmem:[#allocation7 + $0x388] sm:$0xff]
    %v2571 = vld [vmem:[#allocation7 + $0x390] sm:$0xff]
    %v2572 = vld [vmem:[#allocation7 + $0x398] sm:$0xf]
    %v2573 = vld [vmem:[#allocation7 + $0x39c] sm:$0xff]
    %v2574 = vld [vmem:[#allocation7 + $0x3a4] sm:$0xff]
    %v2575 = vld [vmem:[#allocation7 + $0x3ac] sm:$0xff]
    %v2576 = vld [vmem:[#allocation7 + $0x3b4] sm:$0xf]
    %v2577 = vld [vmem:[#allocation7 + $0x3b8] sm:$0xff]
    %v2578 = vld [vmem:[#allocation7 + $0x3c0] sm:$0xff]
    %v2579 = vld [vmem:[#allocation7 + $0x3c8] sm:$0xff]
    %v2580 = vld [vmem:[#allocation7 + $0x3d0] sm:$0xf]
    %v2581 = vld [vmem:[#allocation7 + $0x3d4] sm:$0xff]
    %v2582 = vld [vmem:[#allocation7 + $0x3dc] sm:$0xff]
    %v2583 = vld [vmem:[#allocation7 + $0x3e4] sm:$0xff]
    %v2584 = vld [vmem:[#allocation7 + $0x3ec] sm:$0xf]
    %v2585 = vld [vmem:[#allocation7 + $0x3f0] sm:$0xff]
    %v2586 = vld [vmem:[#allocation7 + $0x3f8] sm:$0xff]
    %v2587 = vld [vmem:[#allocation7 + $0x400] sm:$0xff]
    %v2588 = vld [vmem:[#allocation7 + $0x408] sm:$0xf]
    %v2589 = vld [vmem:[#allocation7 + $0x40c] sm:$0xff]
    %v2590 = vld [vmem:[#allocation7 + $0x414] sm:$0xff]
    %v2591 = vld [vmem:[#allocation7 + $0x41c] sm:$0xff]
    %v2592 = vld [vmem:[#allocation7 + $0x424] sm:$0xf]
    %v2593 = vld [vmem:[#allocation7 + $0x428] sm:$0xff]
    %v2594 = vld [vmem:[#allocation7 + $0x430] sm:$0xff]
    %v2595 = vld [vmem:[#allocation7 + $0x438] sm:$0xff]
    %v2596 = vld [vmem:[#allocation7 + $0x440] sm:$0xf]
    %v2597 = vld [vmem:[#allocation7 + $0x444] sm:$0xff]
    %v2598 = vld [vmem:[#allocation7 + $0x44c] sm:$0xff]
    %v2599 = vld [vmem:[#allocation7 + $0x454] sm:$0xff]
    %v2600 = vld [vmem:[#allocation7 + $0x45c] sm:$0xf]
    %v2601 = vld [vmem:[#allocation7 + $0x460] sm:$0xff]
    %v2602 = vld [vmem:[#allocation7 + $0x468] sm:$0xff]
    %v2603 = vld [vmem:[#allocation7 + $0x470] sm:$0xff]
    %v2604 = vld [vmem:[#allocation7 + $0x478] sm:$0xf]
    %v2605 = vld [vmem:[#allocation7 + $0x47c] sm:$0xff]
    %v2606 = vld [vmem:[#allocation7 + $0x484] sm:$0xff]
    %v2607 = vld [vmem:[#allocation7 + $0x48c] sm:$0xff]
    %v2608 = vld [vmem:[#allocation7 + $0x494] sm:$0xf]
    %v2609 = vld [vmem:[#allocation7 + $0x498] sm:$0xff]
    %v2610 = vld [vmem:[#allocation7 + $0x4a0] sm:$0xff]
    %v2611 = vld [vmem:[#allocation7 + $0x4a8] sm:$0xff]
    %v2612 = vld [vmem:[#allocation7 + $0x4b0] sm:$0xf]
    %v2613 = vld [vmem:[#allocation7 + $0x4b4] sm:$0xff]
    %v2614 = vld [vmem:[#allocation7 + $0x4bc] sm:$0xff]
    %v2615 = vld [vmem:[#allocation7 + $0x4c4] sm:$0xff]
    %v2616 = vld [vmem:[#allocation7 + $0x4cc] sm:$0xf]
    %v2617 = vld [vmem:[#allocation7 + $0x4d0] sm:$0xff]
    %v2618 = vld [vmem:[#allocation7 + $0x4d8] sm:$0xff]
    %v2619 = vld [vmem:[#allocation7 + $0x4e0] sm:$0xff]
    %v2620 = vld [vmem:[#allocation7 + $0x4e8] sm:$0xf]
    %v2621 = vld [vmem:[#allocation7 + $0x4ec] sm:$0xff]
    %v2622 = vld [vmem:[#allocation7 + $0x4f4] sm:$0xff]
    %v2623 = vld [vmem:[#allocation7 + $0x4fc] sm:$0xff]
    %v2624 = vld [vmem:[#allocation7 + $0x504] sm:$0xf]
    %v2625 = vld [vmem:[#allocation7 + $0x508] sm:$0xff]
    %v2626 = vld [vmem:[#allocation7 + $0x510] sm:$0xff]
    %v2627 = vld [vmem:[#allocation7 + $0x518] sm:$0xff]
    %v2628 = vld [vmem:[#allocation7 + $0x520] sm:$0xf]
    %v2629 = vld [vmem:[#allocation7 + $0x524] sm:$0xff]
    %v2630 = vld [vmem:[#allocation7 + $0x52c] sm:$0xff]
    %v2631 = vld [vmem:[#allocation7 + $0x534] sm:$0xff]
    %v2632 = vld [vmem:[#allocation7 + $0x53c] sm:$0xf]
    %v2633 = vld [vmem:[#allocation7 + $0x540] sm:$0xff]
    %v2634 = vld [vmem:[#allocation7 + $0x548] sm:$0xff]
    %v2635 = vld [vmem:[#allocation7 + $0x550] sm:$0xff]
    %v2636 = vld [vmem:[#allocation7 + $0x558] sm:$0xf]
    %v2637 = vld [vmem:[#allocation7 + $0x55c] sm:$0xff]
    %v2638 = vld [vmem:[#allocation7 + $0x564] sm:$0xff]
    %v2639 = vld [vmem:[#allocation7 + $0x56c] sm:$0xff]
    %v2640 = vld [vmem:[#allocation7 + $0x574] sm:$0xf]
    %v2641 = vld [vmem:[#allocation7 + $0x578] sm:$0xff]
    %v2642 = vld [vmem:[#allocation7 + $0x580] sm:$0xff]
    %v2643 = vld [vmem:[#allocation7 + $0x588] sm:$0xff]
    %v2644 = vld [vmem:[#allocation7 + $0x590] sm:$0xf]
    %v2645 = vld [vmem:[#allocation7 + $0x594] sm:$0xff]
    %v2646 = vld [vmem:[#allocation7 + $0x59c] sm:$0xff]
    %v2647 = vld [vmem:[#allocation7 + $0x5a4] sm:$0xff]
    %v2648 = vld [vmem:[#allocation7 + $0x5ac] sm:$0xf]
    %v2649 = vld [vmem:[#allocation7 + $0x5b0] sm:$0xff]
    %v2650 = vld [vmem:[#allocation7 + $0x5b8] sm:$0xff]
    %v2651 = vld [vmem:[#allocation7 + $0x5c0] sm:$0xff]
    %v2652 = vld [vmem:[#allocation7 + $0x5c8] sm:$0xf]
    %v2653 = vld [vmem:[#allocation7 + $0x5cc] sm:$0xff]
    %v2654 = vld [vmem:[#allocation7 + $0x5d4] sm:$0xff]
    %v2655 = vld [vmem:[#allocation7 + $0x5dc] sm:$0xff]
    %v2656 = vld [vmem:[#allocation7 + $0x5e4] sm:$0xf]
    %v2657 = vld [vmem:[#allocation7 + $0x5e8] sm:$0xff]
    %v2658 = vld [vmem:[#allocation7 + $0x5f0] sm:$0xff]
    %v2659 = vld [vmem:[#allocation7 + $0x5f8] sm:$0xff]
    %v2660 = vld [vmem:[#allocation7 + $0x600] sm:$0xf]
    %v2661 = vld [vmem:[#allocation7 + $0x604] sm:$0xff]
    %v2662 = vld [vmem:[#allocation7 + $0x60c] sm:$0xff]
    %v2663 = vld [vmem:[#allocation7 + $0x614] sm:$0xff]
    %v2664 = vld [vmem:[#allocation7 + $0x61c] sm:$0xf]
    %v2665 = vld [vmem:[#allocation7 + $0x620] sm:$0xff]
    %v2666 = vld [vmem:[#allocation7 + $0x628] sm:$0xff]
    %v2667 = vld [vmem:[#allocation7 + $0x630] sm:$0xff]
    %v2668 = vld [vmem:[#allocation7 + $0x638] sm:$0xf]
    %v2669 = vld [vmem:[#allocation7 + $0x63c] sm:$0xff]
    %v2670 = vld [vmem:[#allocation7 + $0x644] sm:$0xff]
    %v2671 = vld [vmem:[#allocation7 + $0x64c] sm:$0xff]
    %v2672 = vld [vmem:[#allocation7 + $0x654] sm:$0xf]
    %v2673 = vld [vmem:[#allocation7 + $0x658] sm:$0xff]
    %v2674 = vld [vmem:[#allocation7 + $0x660] sm:$0xff]
    %v2675 = vld [vmem:[#allocation7 + $0x668] sm:$0xff]
    %v2676 = vld [vmem:[#allocation7 + $0x670] sm:$0xf]
    %v2677 = vld [vmem:[#allocation7 + $0x674] sm:$0xff]
    %v2678 = vld [vmem:[#allocation7 + $0x67c] sm:$0xff]
    %v2679 = vld [vmem:[#allocation7 + $0x684] sm:$0xff]
    %v2680 = vld [vmem:[#allocation7 + $0x68c] sm:$0xf]
    %v2681 = vld [vmem:[#allocation7 + $0x690] sm:$0xff]
    %v2682 = vld [vmem:[#allocation7 + $0x698] sm:$0xff]
    %v2683 = vld [vmem:[#allocation7 + $0x6a0] sm:$0xff]
    %v2684 = vld [vmem:[#allocation7 + $0x6a8] sm:$0xf]
    %v2685 = vld [vmem:[#allocation7 + $0x6ac] sm:$0xff]
    %v2686 = vld [vmem:[#allocation7 + $0x6b4] sm:$0xff]
    %v2687 = vld [vmem:[#allocation7 + $0x6bc] sm:$0xff]
    %v2688 = vld [vmem:[#allocation7 + $0x6c4] sm:$0xf]
    %v2689 = vld [vmem:[#allocation7 + $0x6c8] sm:$0xff]
    %v2690 = vld [vmem:[#allocation7 + $0x6d0] sm:$0xff]
    %v2691 = vld [vmem:[#allocation7 + $0x6d8] sm:$0xff]
    %v2692 = vld [vmem:[#allocation7 + $0x6e0] sm:$0xf]
    %v2693 = vld [vmem:[#allocation7 + $0x6e4] sm:$0xff]
    %v2694 = vld [vmem:[#allocation7 + $0x6ec] sm:$0xff]
    %v2695 = vld [vmem:[#allocation7 + $0x6f4] sm:$0xff]
    %v2696 = vld [vmem:[#allocation7 + $0x6fc] sm:$0xf]
    %v2697 = vld [vmem:[%s10] sm:$0xff]
    %v2699 = vperm.slane %v2697, 0
    %v2700 = vperm.slane %v2697, 1
    %v2701 = vperm.slane %v2697, 2
    %v2702 = vperm.slane %v2697, 3
    %v2703 = vperm.slane %v2697, 4
    %v2704 = vperm.slane %v2697, 5
    %v2705 = vperm.slane %v2697, 6
    %v2969 = vunpack.c.l.b16 %v2441
    %v2970 = vunpack.c.h.b16 %v2441
    %v2971 = vunpack.c.l.b16 %v2442
    %v2972 = vunpack.c.h.b16 %v2442
    %v2973 = vunpack.c.l.b16 %v2443
    %v2974 = vunpack.c.h.b16 %v2443
    %v2975 = vunpack.c.l.b16 %v2444
    %v2976 = vunpack.c.l.b16 %v2445
    %v2977 = vunpack.c.h.b16 %v2445
    %v2978 = vunpack.c.l.b16 %v2446
    %v2979 = vunpack.c.h.b16 %v2446
    %v2980 = vunpack.c.l.b16 %v2447
    %v2981 = vunpack.c.h.b16 %v2447
    %v2982 = vunpack.c.l.b16 %v2448
    %v2983 = vunpack.c.l.b16 %v2449
    %v2984 = vunpack.c.h.b16 %v2449
    %v2985 = vunpack.c.l.b16 %v2450
    %v2986 = vunpack.c.h.b16 %v2450
    %v2987 = vunpack.c.l.b16 %v2451
    %v2988 = vunpack.c.h.b16 %v2451
    %v2989 = vunpack.c.l.b16 %v2452
    %v2990 = vunpack.c.l.b16 %v2453
    %v2991 = vunpack.c.h.b16 %v2453
    %v2992 = vunpack.c.l.b16 %v2454
    %v2993 = vunpack.c.h.b16 %v2454
    %v2994 = vunpack.c.l.b16 %v2455
    %v2995 = vunpack.c.h.b16 %v2455
    %v2996 = vunpack.c.l.b16 %v2456
    %v2997 = vunpack.c.l.b16 %v2457
    %v2998 = vunpack.c.h.b16 %v2457
    %v2999 = vunpack.c.l.b16 %v2458
    %v3000 = vunpack.c.h.b16 %v2458
    %v3001 = vunpack.c.l.b16 %v2459
    %v3002 = vunpack.c.h.b16 %v2459
    %v3003 = vunpack.c.l.b16 %v2460
    %v3004 = vunpack.c.l.b16 %v2461
    %v3005 = vunpack.c.h.b16 %v2461
    %v3006 = vunpack.c.l.b16 %v2462
    %v3007 = vunpack.c.h.b16 %v2462
    %v3008 = vunpack.c.l.b16 %v2463
    %v3009 = vunpack.c.h.b16 %v2463
    %v3010 = vunpack.c.l.b16 %v2464
    %v3011 = vunpack.c.l.b16 %v2465
    %v3012 = vunpack.c.h.b16 %v2465
    %v3013 = vunpack.c.l.b16 %v2466
    %v3014 = vunpack.c.h.b16 %v2466
    %v3015 = vunpack.c.l.b16 %v2467
    %v3016 = vunpack.c.h.b16 %v2467
    %v3017 = vunpack.c.l.b16 %v2468
    %v3018 = vunpack.c.l.b16 %v2469
    %v3019 = vunpack.c.h.b16 %v2469
    %v3020 = vunpack.c.l.b16 %v2470
    %v3021 = vunpack.c.h.b16 %v2470
    %v3022 = vunpack.c.l.b16 %v2471
    %v3023 = vunpack.c.h.b16 %v2471
    %v3024 = vunpack.c.l.b16 %v2472
    %v3025 = vunpack.c.l.b16 %v2473
    %v3026 = vunpack.c.h.b16 %v2473
    %v3027 = vunpack.c.l.b16 %v2474
    %v3028 = vunpack.c.h.b16 %v2474
    %v3029 = vunpack.c.l.b16 %v2475
    %v3030 = vunpack.c.h.b16 %v2475
    %v3031 = vunpack.c.l.b16 %v2476
    %v3032 = vunpack.c.l.b16 %v2477
    %v3033 = vunpack.c.h.b16 %v2477
    %v3034 = vunpack.c.l.b16 %v2478
    %v3035 = vunpack.c.h.b16 %v2478
    %v3036 = vunpack.c.l.b16 %v2479
    %v3037 = vunpack.c.h.b16 %v2479
    %v3038 = vunpack.c.l.b16 %v2480
    %v3039 = vunpack.c.l.b16 %v2481
    %v3040 = vunpack.c.h.b16 %v2481
    %v3041 = vunpack.c.l.b16 %v2482
    %v3042 = vunpack.c.h.b16 %v2482
    %v3043 = vunpack.c.l.b16 %v2483
    %v3044 = vunpack.c.h.b16 %v2483
    %v3045 = vunpack.c.l.b16 %v2484
    %v3046 = vunpack.c.l.b16 %v2485
    %v3047 = vunpack.c.h.b16 %v2485
    %v3048 = vunpack.c.l.b16 %v2486
    %v3049 = vunpack.c.h.b16 %v2486
    %v3050 = vunpack.c.l.b16 %v2487
    %v3051 = vunpack.c.h.b16 %v2487
    %v3052 = vunpack.c.l.b16 %v2488
    %v3053 = vunpack.c.l.b16 %v2489
    %v3054 = vunpack.c.h.b16 %v2489
    %v3055 = vunpack.c.l.b16 %v2490
    %v3056 = vunpack.c.h.b16 %v2490
    %v3057 = vunpack.c.l.b16 %v2491
    %v3058 = vunpack.c.h.b16 %v2491
    %v3059 = vunpack.c.l.b16 %v2492
    %v3060 = vunpack.c.l.b16 %v2493
    %v3061 = vunpack.c.h.b16 %v2493
    %v3062 = vunpack.c.l.b16 %v2494
    %v3063 = vunpack.c.h.b16 %v2494
    %v3064 = vunpack.c.l.b16 %v2495
    %v3065 = vunpack.c.h.b16 %v2495
    %v3066 = vunpack.c.l.b16 %v2496
    %v3067 = vunpack.c.l.b16 %v2497
    %v3068 = vunpack.c.h.b16 %v2497
    %v3069 = vunpack.c.l.b16 %v2498
    %v3070 = vunpack.c.h.b16 %v2498
    %v3071 = vunpack.c.l.b16 %v2499
    %v3072 = vunpack.c.h.b16 %v2499
    %v3073 = vunpack.c.l.b16 %v2500
    %v3074 = vunpack.c.l.b16 %v2501
    %v3075 = vunpack.c.h.b16 %v2501
    %v3076 = vunpack.c.l.b16 %v2502
    %v3077 = vunpack.c.h.b16 %v2502
    %v3078 = vunpack.c.l.b16 %v2503
    %v3079 = vunpack.c.h.b16 %v2503
    %v3080 = vunpack.c.l.b16 %v2504
    %v3081 = vunpack.c.l.b16 %v2505
    %v3082 = vunpack.c.h.b16 %v2505
    %v3083 = vunpack.c.l.b16 %v2506
    %v3084 = vunpack.c.h.b16 %v2506
    %v3085 = vunpack.c.l.b16 %v2507
    %v3086 = vunpack.c.h.b16 %v2507
    %v3087 = vunpack.c.l.b16 %v2508
    %v3088 = vunpack.c.l.b16 %v2509
    %v3089 = vunpack.c.h.b16 %v2509
    %v3090 = vunpack.c.l.b16 %v2510
    %v3091 = vunpack.c.h.b16 %v2510
    %v3092 = vunpack.c.l.b16 %v2511
    %v3093 = vunpack.c.h.b16 %v2511
    %v3094 = vunpack.c.l.b16 %v2512
    %v3095 = vunpack.c.l.b16 %v2513
    %v3096 = vunpack.c.h.b16 %v2513
    %v3097 = vunpack.c.l.b16 %v2514
    %v3098 = vunpack.c.h.b16 %v2514
    %v3099 = vunpack.c.l.b16 %v2515
    %v3100 = vunpack.c.h.b16 %v2515
    %v3101 = vunpack.c.l.b16 %v2516
    %v3102 = vunpack.c.l.b16 %v2517
    %v3103 = vunpack.c.h.b16 %v2517
    %v3104 = vunpack.c.l.b16 %v2518
    %v3105 = vunpack.c.h.b16 %v2518
    %v3106 = vunpack.c.l.b16 %v2519
    %v3107 = vunpack.c.h.b16 %v2519
    %v3108 = vunpack.c.l.b16 %v2520
    %v3109 = vunpack.c.l.b16 %v2521
    %v3110 = vunpack.c.h.b16 %v2521
    %v3111 = vunpack.c.l.b16 %v2522
    %v3112 = vunpack.c.h.b16 %v2522
    %v3113 = vunpack.c.l.b16 %v2523
    %v3114 = vunpack.c.h.b16 %v2523
    %v3115 = vunpack.c.l.b16 %v2524
    %v3116 = vunpack.c.l.b16 %v2525
    %v3117 = vunpack.c.h.b16 %v2525
    %v3118 = vunpack.c.l.b16 %v2526
    %v3119 = vunpack.c.h.b16 %v2526
    %v3120 = vunpack.c.l.b16 %v2527
    %v3121 = vunpack.c.h.b16 %v2527
    %v3122 = vunpack.c.l.b16 %v2528
    %v3123 = vunpack.c.l.b16 %v2529
    %v3124 = vunpack.c.h.b16 %v2529
    %v3125 = vunpack.c.l.b16 %v2530
    %v3126 = vunpack.c.h.b16 %v2530
    %v3127 = vunpack.c.l.b16 %v2531
    %v3128 = vunpack.c.h.b16 %v2531
    %v3129 = vunpack.c.l.b16 %v2532
    %v3130 = vunpack.c.l.b16 %v2533
    %v3131 = vunpack.c.h.b16 %v2533
    %v3132 = vunpack.c.l.b16 %v2534
    %v3133 = vunpack.c.h.b16 %v2534
    %v3134 = vunpack.c.l.b16 %v2535
    %v3135 = vunpack.c.h.b16 %v2535
    %v3136 = vunpack.c.l.b16 %v2536
    %v3137 = vunpack.c.l.b16 %v2537
    %v3138 = vunpack.c.h.b16 %v2537
    %v3139 = vunpack.c.l.b16 %v2538
    %v3140 = vunpack.c.h.b16 %v2538
    %v3141 = vunpack.c.l.b16 %v2539
    %v3142 = vunpack.c.h.b16 %v2539
    %v3143 = vunpack.c.l.b16 %v2540
    %v3144 = vunpack.c.l.b16 %v2541
    %v3145 = vunpack.c.h.b16 %v2541
    %v3146 = vunpack.c.l.b16 %v2542
    %v3147 = vunpack.c.h.b16 %v2542
    %v3148 = vunpack.c.l.b16 %v2543
    %v3149 = vunpack.c.h.b16 %v2543
    %v3150 = vunpack.c.l.b16 %v2544
    %v3151 = vunpack.c.l.b16 %v2545
    %v3152 = vunpack.c.h.b16 %v2545
    %v3153 = vunpack.c.l.b16 %v2546
    %v3154 = vunpack.c.h.b16 %v2546
    %v3155 = vunpack.c.l.b16 %v2547
    %v3156 = vunpack.c.h.b16 %v2547
    %v3157 = vunpack.c.l.b16 %v2548
    %v3158 = vunpack.c.l.b16 %v2549
    %v3159 = vunpack.c.h.b16 %v2549
    %v3160 = vunpack.c.l.b16 %v2550
    %v3161 = vunpack.c.h.b16 %v2550
    %v3162 = vunpack.c.l.b16 %v2551
    %v3163 = vunpack.c.h.b16 %v2551
    %v3164 = vunpack.c.l.b16 %v2552
    %v3165 = vunpack.c.l.b16 %v2553
    %v3166 = vunpack.c.h.b16 %v2553
    %v3167 = vunpack.c.l.b16 %v2554
    %v3168 = vunpack.c.h.b16 %v2554
    %v3169 = vunpack.c.l.b16 %v2555
    %v3170 = vunpack.c.h.b16 %v2555
    %v3171 = vunpack.c.l.b16 %v2556
    %v3172 = vunpack.c.l.b16 %v2557
    %v3173 = vunpack.c.h.b16 %v2557
    %v3174 = vunpack.c.l.b16 %v2558
    %v3175 = vunpack.c.h.b16 %v2558
    %v3176 = vunpack.c.l.b16 %v2559
    %v3177 = vunpack.c.h.b16 %v2559
    %v3178 = vunpack.c.l.b16 %v2560
    %v3179 = vunpack.c.l.b16 %v2561
    %v3180 = vunpack.c.h.b16 %v2561
    %v3181 = vunpack.c.l.b16 %v2562
    %v3182 = vunpack.c.h.b16 %v2562
    %v3183 = vunpack.c.l.b16 %v2563
    %v3184 = vunpack.c.h.b16 %v2563
    %v3185 = vunpack.c.l.b16 %v2564
    %v3186 = vunpack.c.l.b16 %v2565
    %v3187 = vunpack.c.h.b16 %v2565
    %v3188 = vunpack.c.l.b16 %v2566
    %v3189 = vunpack.c.h.b16 %v2566
    %v3190 = vunpack.c.l.b16 %v2567
    %v3191 = vunpack.c.h.b16 %v2567
    %v3192 = vunpack.c.l.b16 %v2568
    %v3193 = vunpack.c.l.b16 %v2569
    %v3194 = vunpack.c.h.b16 %v2569
    %v3195 = vunpack.c.l.b16 %v2570
    %v3196 = vunpack.c.h.b16 %v2570
    %v3197 = vunpack.c.l.b16 %v2571
    %v3198 = vunpack.c.h.b16 %v2571
    %v3199 = vunpack.c.l.b16 %v2572
    %v3200 = vunpack.c.l.b16 %v2573
    %v3201 = vunpack.c.h.b16 %v2573
    %v3202 = vunpack.c.l.b16 %v2574
    %v3203 = vunpack.c.h.b16 %v2574
    %v3204 = vunpack.c.l.b16 %v2575
    %v3205 = vunpack.c.h.b16 %v2575
    %v3206 = vunpack.c.l.b16 %v2576
    %v3207 = vunpack.c.l.b16 %v2577
    %v3208 = vunpack.c.h.b16 %v2577
    %v3209 = vunpack.c.l.b16 %v2578
    %v3210 = vunpack.c.h.b16 %v2578
    %v3211 = vunpack.c.l.b16 %v2579
    %v3212 = vunpack.c.h.b16 %v2579
    %v3213 = vunpack.c.l.b16 %v2580
    %v3214 = vunpack.c.l.b16 %v2581
    %v3215 = vunpack.c.h.b16 %v2581
    %v3216 = vunpack.c.l.b16 %v2582
    %v3217 = vunpack.c.h.b16 %v2582
    %v3218 = vunpack.c.l.b16 %v2583
    %v3219 = vunpack.c.h.b16 %v2583
    %v3220 = vunpack.c.l.b16 %v2584
    %v3221 = vunpack.c.l.b16 %v2585
    %v3222 = vunpack.c.h.b16 %v2585
    %v3223 = vunpack.c.l.b16 %v2586
    %v3224 = vunpack.c.h.b16 %v2586
    %v3225 = vunpack.c.l.b16 %v2587
    %v3226 = vunpack.c.h.b16 %v2587
    %v3227 = vunpack.c.l.b16 %v2588
    %v3228 = vunpack.c.l.b16 %v2589
    %v3229 = vunpack.c.h.b16 %v2589
    %v3230 = vunpack.c.l.b16 %v2590
    %v3231 = vunpack.c.h.b16 %v2590
    %v3232 = vunpack.c.l.b16 %v2591
    %v3233 = vunpack.c.h.b16 %v2591
    %v3234 = vunpack.c.l.b16 %v2592
    %v3235 = vunpack.c.l.b16 %v2593
    %v3236 = vunpack.c.h.b16 %v2593
    %v3237 = vunpack.c.l.b16 %v2594
    %v3238 = vunpack.c.h.b16 %v2594
    %v3239 = vunpack.c.l.b16 %v2595
    %v3240 = vunpack.c.h.b16 %v2595
    %v3241 = vunpack.c.l.b16 %v2596
    %v3242 = vunpack.c.l.b16 %v2597
    %v3243 = vunpack.c.h.b16 %v2597
    %v3244 = vunpack.c.l.b16 %v2598
    %v3245 = vunpack.c.h.b16 %v2598
    %v3246 = vunpack.c.l.b16 %v2599
    %v3247 = vunpack.c.h.b16 %v2599
    %v3248 = vunpack.c.l.b16 %v2600
    %v3249 = vunpack.c.l.b16 %v2601
    %v3250 = vunpack.c.h.b16 %v2601
    %v3251 = vunpack.c.l.b16 %v2602
    %v3252 = vunpack.c.h.b16 %v2602
    %v3253 = vunpack.c.l.b16 %v2603
    %v3254 = vunpack.c.h.b16 %v2603
    %v3255 = vunpack.c.l.b16 %v2604
    %v3256 = vunpack.c.l.b16 %v2605
    %v3257 = vunpack.c.h.b16 %v2605
    %v3258 = vunpack.c.l.b16 %v2606
    %v3259 = vunpack.c.h.b16 %v2606
    %v3260 = vunpack.c.l.b16 %v2607
    %v3261 = vunpack.c.h.b16 %v2607
    %v3262 = vunpack.c.l.b16 %v2608
    %v3263 = vunpack.c.l.b16 %v2609
    %v3264 = vunpack.c.h.b16 %v2609
    %v3265 = vunpack.c.l.b16 %v2610
    %v3266 = vunpack.c.h.b16 %v2610
    %v3267 = vunpack.c.l.b16 %v2611
    %v3268 = vunpack.c.h.b16 %v2611
    %v3269 = vunpack.c.l.b16 %v2612
    %v3270 = vunpack.c.l.b16 %v2613
    %v3271 = vunpack.c.h.b16 %v2613
    %v3272 = vunpack.c.l.b16 %v2614
    %v3273 = vunpack.c.h.b16 %v2614
    %v3274 = vunpack.c.l.b16 %v2615
    %v3275 = vunpack.c.h.b16 %v2615
    %v3276 = vunpack.c.l.b16 %v2616
    %v3277 = vunpack.c.l.b16 %v2617
    %v3278 = vunpack.c.h.b16 %v2617
    %v3279 = vunpack.c.l.b16 %v2618
    %v3280 = vunpack.c.h.b16 %v2618
    %v3281 = vunpack.c.l.b16 %v2619
    %v3282 = vunpack.c.h.b16 %v2619
    %v3283 = vunpack.c.l.b16 %v2620
    %v3284 = vunpack.c.l.b16 %v2621
    %v3285 = vunpack.c.h.b16 %v2621
    %v3286 = vunpack.c.l.b16 %v2622
    %v3287 = vunpack.c.h.b16 %v2622
    %v3288 = vunpack.c.l.b16 %v2623
    %v3289 = vunpack.c.h.b16 %v2623
    %v3290 = vunpack.c.l.b16 %v2624
    %v3291 = vunpack.c.l.b16 %v2625
    %v3292 = vunpack.c.h.b16 %v2625
    %v3293 = vunpack.c.l.b16 %v2626
    %v3294 = vunpack.c.h.b16 %v2626
    %v3295 = vunpack.c.l.b16 %v2627
    %v3296 = vunpack.c.h.b16 %v2627
    %v3297 = vunpack.c.l.b16 %v2628
    %v3298 = vunpack.c.l.b16 %v2629
    %v3299 = vunpack.c.h.b16 %v2629
    %v3300 = vunpack.c.l.b16 %v2630
    %v3301 = vunpack.c.h.b16 %v2630
    %v3302 = vunpack.c.l.b16 %v2631
    %v3303 = vunpack.c.h.b16 %v2631
    %v3304 = vunpack.c.l.b16 %v2632
    %v3305 = vunpack.c.l.b16 %v2633
    %v3306 = vunpack.c.h.b16 %v2633
    %v3307 = vunpack.c.l.b16 %v2634
    %v3308 = vunpack.c.h.b16 %v2634
    %v3309 = vunpack.c.l.b16 %v2635
    %v3310 = vunpack.c.h.b16 %v2635
    %v3311 = vunpack.c.l.b16 %v2636
    %v3312 = vunpack.c.l.b16 %v2637
    %v3313 = vunpack.c.h.b16 %v2637
    %v3314 = vunpack.c.l.b16 %v2638
    %v3315 = vunpack.c.h.b16 %v2638
    %v3316 = vunpack.c.l.b16 %v2639
    %v3317 = vunpack.c.h.b16 %v2639
    %v3318 = vunpack.c.l.b16 %v2640
    %v3319 = vunpack.c.l.b16 %v2641
    %v3320 = vunpack.c.h.b16 %v2641
    %v3321 = vunpack.c.l.b16 %v2642
    %v3322 = vunpack.c.h.b16 %v2642
    %v3323 = vunpack.c.l.b16 %v2643
    %v3324 = vunpack.c.h.b16 %v2643
    %v3325 = vunpack.c.l.b16 %v2644
    %v3326 = vunpack.c.l.b16 %v2645
    %v3327 = vunpack.c.h.b16 %v2645
    %v3328 = vunpack.c.l.b16 %v2646
    %v3329 = vunpack.c.h.b16 %v2646
    %v3330 = vunpack.c.l.b16 %v2647
    %v3331 = vunpack.c.h.b16 %v2647
    %v3332 = vunpack.c.l.b16 %v2648
    %v3333 = vunpack.c.l.b16 %v2649
    %v3334 = vunpack.c.h.b16 %v2649
    %v3335 = vunpack.c.l.b16 %v2650
    %v3336 = vunpack.c.h.b16 %v2650
    %v3337 = vunpack.c.l.b16 %v2651
    %v3338 = vunpack.c.h.b16 %v2651
    %v3339 = vunpack.c.l.b16 %v2652
    %v3340 = vunpack.c.l.b16 %v2653
    %v3341 = vunpack.c.h.b16 %v2653
    %v3342 = vunpack.c.l.b16 %v2654
    %v3343 = vunpack.c.h.b16 %v2654
    %v3344 = vunpack.c.l.b16 %v2655
    %v3345 = vunpack.c.h.b16 %v2655
    %v3346 = vunpack.c.l.b16 %v2656
    %v3347 = vunpack.c.l.b16 %v2657
    %v3348 = vunpack.c.h.b16 %v2657
    %v3349 = vunpack.c.l.b16 %v2658
    %v3350 = vunpack.c.h.b16 %v2658
    %v3351 = vunpack.c.l.b16 %v2659
    %v3352 = vunpack.c.h.b16 %v2659
    %v3353 = vunpack.c.l.b16 %v2660
    %v3354 = vunpack.c.l.b16 %v2661
    %v3355 = vunpack.c.h.b16 %v2661
    %v3356 = vunpack.c.l.b16 %v2662
    %v3357 = vunpack.c.h.b16 %v2662
    %v3358 = vunpack.c.l.b16 %v2663
    %v3359 = vunpack.c.h.b16 %v2663
    %v3360 = vunpack.c.l.b16 %v2664
    %v3361 = vunpack.c.l.b16 %v2665
    %v3362 = vunpack.c.h.b16 %v2665
    %v3363 = vunpack.c.l.b16 %v2666
    %v3364 = vunpack.c.h.b16 %v2666
    %v3365 = vunpack.c.l.b16 %v2667
    %v3366 = vunpack.c.h.b16 %v2667
    %v3367 = vunpack.c.l.b16 %v2668
    %v3368 = vunpack.c.l.b16 %v2669
    %v3369 = vunpack.c.h.b16 %v2669
    %v3370 = vunpack.c.l.b16 %v2670
    %v3371 = vunpack.c.h.b16 %v2670
    %v3372 = vunpack.c.l.b16 %v2671
    %v3373 = vunpack.c.h.b16 %v2671
    %v3374 = vunpack.c.l.b16 %v2672
    %v3375 = vunpack.c.l.b16 %v2673
    %v3376 = vunpack.c.h.b16 %v2673
    %v3377 = vunpack.c.l.b16 %v2674
    %v3378 = vunpack.c.h.b16 %v2674
    %v3379 = vunpack.c.l.b16 %v2675
    %v3380 = vunpack.c.h.b16 %v2675
    %v3381 = vunpack.c.l.b16 %v2676
    %v3382 = vunpack.c.l.b16 %v2677
    %v3383 = vunpack.c.h.b16 %v2677
    %v3384 = vunpack.c.l.b16 %v2678
    %v3385 = vunpack.c.h.b16 %v2678
    %v3386 = vunpack.c.l.b16 %v2679
    %v3387 = vunpack.c.h.b16 %v2679
    %v3388 = vunpack.c.l.b16 %v2680
    %v3389 = vunpack.c.l.b16 %v2681
    %v3390 = vunpack.c.h.b16 %v2681
    %v3391 = vunpack.c.l.b16 %v2682
    %v3392 = vunpack.c.h.b16 %v2682
    %v3393 = vunpack.c.l.b16 %v2683
    %v3394 = vunpack.c.h.b16 %v2683
    %v3395 = vunpack.c.l.b16 %v2684
    %v3396 = vunpack.c.l.b16 %v2685
    %v3397 = vunpack.c.h.b16 %v2685
    %v3398 = vunpack.c.l.b16 %v2686
    %v3399 = vunpack.c.h.b16 %v2686
    %v3400 = vunpack.c.l.b16 %v2687
    %v3401 = vunpack.c.h.b16 %v2687
    %v3402 = vunpack.c.l.b16 %v2688
    %v3403 = vunpack.c.l.b16 %v2689
    %v3404 = vunpack.c.h.b16 %v2689
    %v3405 = vunpack.c.l.b16 %v2690
    %v3406 = vunpack.c.h.b16 %v2690
    %v3407 = vunpack.c.l.b16 %v2691
    %v3408 = vunpack.c.h.b16 %v2691
    %v3409 = vunpack.c.l.b16 %v2692
    %v3410 = vunpack.c.l.b16 %v2693
    %v3411 = vunpack.c.h.b16 %v2693
    %v3412 = vunpack.c.l.b16 %v2694
    %v3413 = vunpack.c.h.b16 %v2694
    %v3414 = vunpack.c.l.b16 %v2695
    %v3415 = vunpack.c.h.b16 %v2695
    %v3416 = vunpack.c.l.b16 %v2696
    %v3417 = vpack.c.b16 %v2976, %v2969
    %v3418 = vpack.c.b16 %v2977, %v2970
    %v3419 = vpack.c.b16 %v2978, %v2971
    %v3420 = vpack.c.b16 %v2979, %v2972
    %v3421 = vpack.c.b16 %v2980, %v2973
    %v3422 = vpack.c.b16 %v2981, %v2974
    %v3423 = vpack.c.b16 %v2982, %v2975
    %v3424 = vpack.c.b16 %v2990, %v2983
    %v3425 = vpack.c.b16 %v2991, %v2984
    %v3426 = vpack.c.b16 %v2992, %v2985
    %v3427 = vpack.c.b16 %v2993, %v2986
    %v3428 = vpack.c.b16 %v2994, %v2987
    %v3429 = vpack.c.b16 %v2995, %v2988
    %v3430 = vpack.c.b16 %v2996, %v2989
    %v3431 = vpack.c.b16 %v3004, %v2997
    %v3432 = vpack.c.b16 %v3005, %v2998
    %v3433 = vpack.c.b16 %v3006, %v2999
    %v3434 = vpack.c.b16 %v3007, %v3000
    %v3435 = vpack.c.b16 %v3008, %v3001
    %v3436 = vpack.c.b16 %v3009, %v3002
    %v3437 = vpack.c.b16 %v3010, %v3003
    %v3438 = vpack.c.b16 %v3018, %v3011
    %v3439 = vpack.c.b16 %v3019, %v3012
    %v3440 = vpack.c.b16 %v3020, %v3013
    %v3441 = vpack.c.b16 %v3021, %v3014
    %v3442 = vpack.c.b16 %v3022, %v3015
    %v3443 = vpack.c.b16 %v3023, %v3016
    %v3444 = vpack.c.b16 %v3024, %v3017
    %v3445 = vpack.c.b16 %v3032, %v3025
    %v3446 = vpack.c.b16 %v3033, %v3026
    %v3447 = vpack.c.b16 %v3034, %v3027
    %v3448 = vpack.c.b16 %v3035, %v3028
    %v3449 = vpack.c.b16 %v3036, %v3029
    %v3450 = vpack.c.b16 %v3037, %v3030
    %v3451 = vpack.c.b16 %v3038, %v3031
    %v3452 = vpack.c.b16 %v3046, %v3039
    %v3453 = vpack.c.b16 %v3047, %v3040
    %v3454 = vpack.c.b16 %v3048, %v3041
    %v3455 = vpack.c.b16 %v3049, %v3042
    %v3456 = vpack.c.b16 %v3050, %v3043
    %v3457 = vpack.c.b16 %v3051, %v3044
    %v3458 = vpack.c.b16 %v3052, %v3045
    %v3459 = vpack.c.b16 %v3060, %v3053
    %v3460 = vpack.c.b16 %v3061, %v3054
    %v3461 = vpack.c.b16 %v3062, %v3055
    %v3462 = vpack.c.b16 %v3063, %v3056
    %v3463 = vpack.c.b16 %v3064, %v3057
    %v3464 = vpack.c.b16 %v3065, %v3058
    %v3465 = vpack.c.b16 %v3066, %v3059
    %v3466 = vpack.c.b16 %v3074, %v3067
    %v3467 = vpack.c.b16 %v3075, %v3068
    %v3468 = vpack.c.b16 %v3076, %v3069
    %v3469 = vpack.c.b16 %v3077, %v3070
    %v3470 = vpack.c.b16 %v3078, %v3071
    %v3471 = vpack.c.b16 %v3079, %v3072
    %v3472 = vpack.c.b16 %v3080, %v3073
    %v3473 = vpack.c.b16 %v3088, %v3081
    %v3474 = vpack.c.b16 %v3089, %v3082
    %v3475 = vpack.c.b16 %v3090, %v3083
    %v3476 = vpack.c.b16 %v3091, %v3084
    %v3477 = vpack.c.b16 %v3092, %v3085
    %v3478 = vpack.c.b16 %v3093, %v3086
    %v3479 = vpack.c.b16 %v3094, %v3087
    %v3480 = vpack.c.b16 %v3102, %v3095
    %v3481 = vpack.c.b16 %v3103, %v3096
    %v3482 = vpack.c.b16 %v3104, %v3097
    %v3483 = vpack.c.b16 %v3105, %v3098
    %v3484 = vpack.c.b16 %v3106, %v3099
    %v3485 = vpack.c.b16 %v3107, %v3100
    %v3486 = vpack.c.b16 %v3108, %v3101
    %v3487 = vpack.c.b16 %v3116, %v3109
    %v3488 = vpack.c.b16 %v3117, %v3110
    %v3489 = vpack.c.b16 %v3118, %v3111
    %v3490 = vpack.c.b16 %v3119, %v3112
    %v3491 = vpack.c.b16 %v3120, %v3113
    %v3492 = vpack.c.b16 %v3121, %v3114
    %v3493 = vpack.c.b16 %v3122, %v3115
    %v3494 = vpack.c.b16 %v3130, %v3123
    %v3495 = vpack.c.b16 %v3131, %v3124
    %v3496 = vpack.c.b16 %v3132, %v3125
    %v3497 = vpack.c.b16 %v3133, %v3126
    %v3498 = vpack.c.b16 %v3134, %v3127
    %v3499 = vpack.c.b16 %v3135, %v3128
    %v3500 = vpack.c.b16 %v3136, %v3129
    %v3501 = vpack.c.b16 %v3144, %v3137
    %v3502 = vpack.c.b16 %v3145, %v3138
    %v3503 = vpack.c.b16 %v3146, %v3139
    %v3504 = vpack.c.b16 %v3147, %v3140
    %v3505 = vpack.c.b16 %v3148, %v3141
    %v3506 = vpack.c.b16 %v3149, %v3142
    %v3507 = vpack.c.b16 %v3150, %v3143
    %v3508 = vpack.c.b16 %v3158, %v3151
    %v3509 = vpack.c.b16 %v3159, %v3152
    %v3510 = vpack.c.b16 %v3160, %v3153
    %v3511 = vpack.c.b16 %v3161, %v3154
    %v3512 = vpack.c.b16 %v3162, %v3155
    %v3513 = vpack.c.b16 %v3163, %v3156
    %v3514 = vpack.c.b16 %v3164, %v3157
    %v3515 = vpack.c.b16 %v3172, %v3165
    %v3516 = vpack.c.b16 %v3173, %v3166
    %v3517 = vpack.c.b16 %v3174, %v3167
    %v3518 = vpack.c.b16 %v3175, %v3168
    %v3519 = vpack.c.b16 %v3176, %v3169
    %v3520 = vpack.c.b16 %v3177, %v3170
    %v3521 = vpack.c.b16 %v3178, %v3171
    %v3522 = vpack.c.b16 %v3186, %v3179
    %v3523 = vpack.c.b16 %v3187, %v3180
    %v3524 = vpack.c.b16 %v3188, %v3181
    %v3525 = vpack.c.b16 %v3189, %v3182
    %v3526 = vpack.c.b16 %v3190, %v3183
    %v3527 = vpack.c.b16 %v3191, %v3184
    %v3528 = vpack.c.b16 %v3192, %v3185
    %v3529 = vpack.c.b16 %v3200, %v3193
    %v3530 = vpack.c.b16 %v3201, %v3194
    %v3531 = vpack.c.b16 %v3202, %v3195
    %v3532 = vpack.c.b16 %v3203, %v3196
    %v3533 = vpack.c.b16 %v3204, %v3197
    %v3534 = vpack.c.b16 %v3205, %v3198
    %v3535 = vpack.c.b16 %v3206, %v3199
    %v3536 = vpack.c.b16 %v3214, %v3207
    %v3537 = vpack.c.b16 %v3215, %v3208
    %v3538 = vpack.c.b16 %v3216, %v3209
    %v3539 = vpack.c.b16 %v3217, %v3210
    %v3540 = vpack.c.b16 %v3218, %v3211
    %v3541 = vpack.c.b16 %v3219, %v3212
    %v3542 = vpack.c.b16 %v3220, %v3213
    %v3543 = vpack.c.b16 %v3228, %v3221
    %v3544 = vpack.c.b16 %v3229, %v3222
    %v3545 = vpack.c.b16 %v3230, %v3223
    %v3546 = vpack.c.b16 %v3231, %v3224
    %v3547 = vpack.c.b16 %v3232, %v3225
    %v3548 = vpack.c.b16 %v3233, %v3226
    %v3549 = vpack.c.b16 %v3234, %v3227
    %v3550 = vpack.c.b16 %v3242, %v3235
    %v3551 = vpack.c.b16 %v3243, %v3236
    %v3552 = vpack.c.b16 %v3244, %v3237
    %v3553 = vpack.c.b16 %v3245, %v3238
    %v3554 = vpack.c.b16 %v3246, %v3239
    %v3555 = vpack.c.b16 %v3247, %v3240
    %v3556 = vpack.c.b16 %v3248, %v3241
    %v3557 = vpack.c.b16 %v3256, %v3249
    %v3558 = vpack.c.b16 %v3257, %v3250
    %v3559 = vpack.c.b16 %v3258, %v3251
    %v3560 = vpack.c.b16 %v3259, %v3252
    %v3561 = vpack.c.b16 %v3260, %v3253
    %v3562 = vpack.c.b16 %v3261, %v3254
    %v3563 = vpack.c.b16 %v3262, %v3255
    %v3564 = vpack.c.b16 %v3270, %v3263
    %v3565 = vpack.c.b16 %v3271, %v3264
    %v3566 = vpack.c.b16 %v3272, %v3265
    %v3567 = vpack.c.b16 %v3273, %v3266
    %v3568 = vpack.c.b16 %v3274, %v3267
    %v3569 = vpack.c.b16 %v3275, %v3268
    %v3570 = vpack.c.b16 %v3276, %v3269
    %v3571 = vpack.c.b16 %v3284, %v3277
    %v3572 = vpack.c.b16 %v3285, %v3278
    %v3573 = vpack.c.b16 %v3286, %v3279
    %v3574 = vpack.c.b16 %v3287, %v3280
    %v3575 = vpack.c.b16 %v3288, %v3281
    %v3576 = vpack.c.b16 %v3289, %v3282
    %v3577 = vpack.c.b16 %v3290, %v3283
    %v3578 = vpack.c.b16 %v3298, %v3291
    %v3579 = vpack.c.b16 %v3299, %v3292
    %v3580 = vpack.c.b16 %v3300, %v3293
    %v3581 = vpack.c.b16 %v3301, %v3294
    %v3582 = vpack.c.b16 %v3302, %v3295
    %v3583 = vpack.c.b16 %v3303, %v3296
    %v3584 = vpack.c.b16 %v3304, %v3297
    %v3585 = vpack.c.b16 %v3312, %v3305
    %v3586 = vpack.c.b16 %v3313, %v3306
    %v3587 = vpack.c.b16 %v3314, %v3307
    %v3588 = vpack.c.b16 %v3315, %v3308
    %v3589 = vpack.c.b16 %v3316, %v3309
    %v3590 = vpack.c.b16 %v3317, %v3310
    %v3591 = vpack.c.b16 %v3318, %v3311
    %v3592 = vpack.c.b16 %v3326, %v3319
    %v3593 = vpack.c.b16 %v3327, %v3320
    %v3594 = vpack.c.b16 %v3328, %v3321
    %v3595 = vpack.c.b16 %v3329, %v3322
    %v3596 = vpack.c.b16 %v3330, %v3323
    %v3597 = vpack.c.b16 %v3331, %v3324
    %v3598 = vpack.c.b16 %v3332, %v3325
    %v3599 = vpack.c.b16 %v3340, %v3333
    %v3600 = vpack.c.b16 %v3341, %v3334
    %v3601 = vpack.c.b16 %v3342, %v3335
    %v3602 = vpack.c.b16 %v3343, %v3336
    %v3603 = vpack.c.b16 %v3344, %v3337
    %v3604 = vpack.c.b16 %v3345, %v3338
    %v3605 = vpack.c.b16 %v3346, %v3339
    %v3606 = vpack.c.b16 %v3354, %v3347
    %v3607 = vpack.c.b16 %v3355, %v3348
    %v3608 = vpack.c.b16 %v3356, %v3349
    %v3609 = vpack.c.b16 %v3357, %v3350
    %v3610 = vpack.c.b16 %v3358, %v3351
    %v3611 = vpack.c.b16 %v3359, %v3352
    %v3612 = vpack.c.b16 %v3360, %v3353
    %v3613 = vpack.c.b16 %v3368, %v3361
    %v3614 = vpack.c.b16 %v3369, %v3362
    %v3615 = vpack.c.b16 %v3370, %v3363
    %v3616 = vpack.c.b16 %v3371, %v3364
    %v3617 = vpack.c.b16 %v3372, %v3365
    %v3618 = vpack.c.b16 %v3373, %v3366
    %v3619 = vpack.c.b16 %v3374, %v3367
    %v3620 = vpack.c.b16 %v3382, %v3375
    %v3621 = vpack.c.b16 %v3383, %v3376
    %v3622 = vpack.c.b16 %v3384, %v3377
    %v3623 = vpack.c.b16 %v3385, %v3378
    %v3624 = vpack.c.b16 %v3386, %v3379
    %v3625 = vpack.c.b16 %v3387, %v3380
    %v3626 = vpack.c.b16 %v3388, %v3381
    %v3627 = vpack.c.b16 %v3396, %v3389
    %v3628 = vpack.c.b16 %v3397, %v3390
    %v3629 = vpack.c.b16 %v3398, %v3391
    %v3630 = vpack.c.b16 %v3399, %v3392
    %v3631 = vpack.c.b16 %v3400, %v3393
    %v3632 = vpack.c.b16 %v3401, %v3394
    %v3633 = vpack.c.b16 %v3402, %v3395
    %v3634 = vpack.c.b16 %v3410, %v3403
    %v3635 = vpack.c.b16 %v3411, %v3404
    %v3636 = vpack.c.b16 %v3412, %v3405
    %v3637 = vpack.c.b16 %v3413, %v3406
    %v3638 = vpack.c.b16 %v3414, %v3407
    %v3639 = vpack.c.b16 %v3415, %v3408
    %v3640 = vpack.c.b16 %v3416, %v3409
    %3865 = vmatpush.bf16.msra.mxu0 %v3466
    %3866 = vmatpush.bf16.msra.mxu0 %v3459
    %3867 = vmatpush.bf16.msra.mxu0 %v3452
    %3868 = vmatpush.bf16.msra.mxu0 %v3445
    %3869 = vmatpush.bf16.msra.mxu0 %v3438
    %3870 = vmatpush.bf16.msra.mxu0 %v3431
    %3871 = vmatpush.bf16.msra.mxu0 %v3424
    %3872 = vmatpush.bf16.msra.mxu0 %v3417
    %3873 = vmatmul.bf16.gmra.mxu0 %v2437
    %v3874 = vpop.f32.mrf.mxu0
    %v3875 = vadd.f32 %v2699, %v3874
    %v3876 = vpop.f32.mrf.mxu0
    %v3877 = vadd.f32 %v2699, %v3876
    %3878 = vdwg.mxu0
    %3879 = vmatpush.bf16.msra.mxu0 %v3522
    %3880 = vmatpush.bf16.msra.mxu0 %v3515
    %3881 = vmatpush.bf16.msra.mxu0 %v3508
    %3882 = vmatpush.bf16.msra.mxu0 %v3501
    %3883 = vmatpush.bf16.msra.mxu0 %v3494
    %3884 = vmatpush.bf16.msra.mxu0 %v3487
    %3885 = vmatpush.bf16.msra.mxu0 %v3480
    %3886 = vmatpush.bf16.msra.mxu0 %v3473
    %3887 = vmatmul.bf16.gmra.mxu0 %v2438
    %v3888 = vpop.f32.mrf.mxu0
    %v3889 = vadd.f32 %v3875, %v3888
    %v3890 = vpop.f32.mrf.mxu0
    %v3891 = vadd.f32 %v3877, %v3890
    %3892 = vdwg.mxu0
    %3893 = vmatpush.bf16.msra.mxu0 %v3578
    %3894 = vmatpush.bf16.msra.mxu0 %v3571
    %3895 = vmatpush.bf16.msra.mxu0 %v3564
    %3896 = vmatpush.bf16.msra.mxu0 %v3557
    %3897 = vmatpush.bf16.msra.mxu0 %v3550
    %3898 = vmatpush.bf16.msra.mxu0 %v3543
    %3899 = vmatpush.bf16.msra.mxu0 %v3536
    %3900 = vmatpush.bf16.msra.mxu0 %v3529
    %3901 = vmatmul.bf16.gmra.mxu0 %v2439
    %v3902 = vpop.f32.mrf.mxu0
    %v3903 = vadd.f32 %v3889, %v3902
    %v3904 = vpop.f32.mrf.mxu0
    %v3905 = vadd.f32 %v3891, %v3904
    %3906 = vdwg.mxu0
    %3907 = vmatpush.bf16.msra.mxu0 %v3634
    %3908 = vmatpush.bf16.msra.mxu0 %v3627
    %3909 = vmatpush.bf16.msra.mxu0 %v3620
    %3910 = vmatpush.bf16.msra.mxu0 %v3613
    %3911 = vmatpush.bf16.msra.mxu0 %v3606
    %3912 = vmatpush.bf16.msra.mxu0 %v3599
    %3913 = vmatpush.bf16.msra.mxu0 %v3592
    %3914 = vmatpush.bf16.msra.mxu0 %v3585
    %3915 = vmatmul.bf16.gmra.mxu0 %v2440
    %v3916 = vpop.f32.mrf.mxu0
    %v3917 = vadd.f32 %v3903, %v3916
    %v3918 = vpop.f32.mrf.mxu0
    %v3919 = vadd.f32 %v3905, %v3918
    %3920 = vdwg.mxu0
    %3921 = vmatpush.bf16.msra.mxu0 %v3467
    %3922 = vmatpush.bf16.msra.mxu0 %v3460
    %3923 = vmatpush.bf16.msra.mxu0 %v3453
    %3924 = vmatpush.bf16.msra.mxu0 %v3446
    %3925 = vmatpush.bf16.msra.mxu0 %v3439
    %3926 = vmatpush.bf16.msra.mxu0 %v3432
    %3927 = vmatpush.bf16.msra.mxu0 %v3425
    %3928 = vmatpush.bf16.msra.mxu0 %v3418
    %3929 = vmatmul.bf16.gmra.mxu0 %v2437
    %v3930 = vpop.f32.mrf.mxu0
    %v3931 = vadd.f32 %v2700, %v3930
    %v3932 = vpop.f32.mrf.mxu0
    %v3933 = vadd.f32 %v2700, %v3932
    %3934 = vdwg.mxu0
    %3935 = vmatpush.bf16.msra.mxu0 %v3523
    %3936 = vmatpush.bf16.msra.mxu0 %v3516
    %3937 = vmatpush.bf16.msra.mxu0 %v3509
    %3938 = vmatpush.bf16.msra.mxu0 %v3502
    %3939 = vmatpush.bf16.msra.mxu0 %v3495
    %3940 = vmatpush.bf16.msra.mxu0 %v3488
    %3941 = vmatpush.bf16.msra.mxu0 %v3481
    %3942 = vmatpush.bf16.msra.mxu0 %v3474
    %3943 = vmatmul.bf16.gmra.mxu0 %v2438
    %v3944 = vpop.f32.mrf.mxu0
    %v3945 = vadd.f32 %v3931, %v3944
    %v3946 = vpop.f32.mrf.mxu0
    %v3947 = vadd.f32 %v3933, %v3946
    %3948 = vdwg.mxu0
    %3949 = vmatpush.bf16.msra.mxu0 %v3579
    %3950 = vmatpush.bf16.msra.mxu0 %v3572
    %3951 = vmatpush.bf16.msra.mxu0 %v3565
    %3952 = vmatpush.bf16.msra.mxu0 %v3558
    %3953 = vmatpush.bf16.msra.mxu0 %v3551
    %3954 = vmatpush.bf16.msra.mxu0 %v3544
    %3955 = vmatpush.bf16.msra.mxu0 %v3537
    %3956 = vmatpush.bf16.msra.mxu0 %v3530
    %3957 = vmatmul.bf16.gmra.mxu0 %v2439
    %v3958 = vpop.f32.mrf.mxu0
    %v3959 = vadd.f32 %v3945, %v3958
    %v3960 = vpop.f32.mrf.mxu0
    %v3961 = vadd.f32 %v3947, %v3960
    %3962 = vdwg.mxu0
    %3963 = vmatpush.bf16.msra.mxu0 %v3635
    %3964 = vmatpush.bf16.msra.mxu0 %v3628
    %3965 = vmatpush.bf16.msra.mxu0 %v3621
    %3966 = vmatpush.bf16.msra.mxu0 %v3614
    %3967 = vmatpush.bf16.msra.mxu0 %v3607
    %3968 = vmatpush.bf16.msra.mxu0 %v3600
    %3969 = vmatpush.bf16.msra.mxu0 %v3593
    %3970 = vmatpush.bf16.msra.mxu0 %v3586
    %3971 = vmatmul.bf16.gmra.mxu0 %v2440
    %v3972 = vpop.f32.mrf.mxu0
    %v3973 = vadd.f32 %v3959, %v3972
    %v3974 = vpop.f32.mrf.mxu0
    %v3975 = vadd.f32 %v3961, %v3974
    %3976 = vdwg.mxu0
    %3977 = vmatpush.bf16.msra.mxu0 %v3468
    %3978 = vmatpush.bf16.msra.mxu0 %v3461
    %3979 = vmatpush.bf16.msra.mxu0 %v3454
    %3980 = vmatpush.bf16.msra.mxu0 %v3447
    %3981 = vmatpush.bf16.msra.mxu0 %v3440
    %3982 = vmatpush.bf16.msra.mxu0 %v3433
    %3983 = vmatpush.bf16.msra.mxu0 %v3426
    %3984 = vmatpush.bf16.msra.mxu0 %v3419
    %3985 = vmatmul.bf16.gmra.mxu0 %v2437
    %v3986 = vpop.f32.mrf.mxu0
    %v3987 = vadd.f32 %v2701, %v3986
    %v3988 = vpop.f32.mrf.mxu0
    %v3989 = vadd.f32 %v2701, %v3988
    %3990 = vdwg.mxu0
    %3991 = vmatpush.bf16.msra.mxu0 %v3524
    %3992 = vmatpush.bf16.msra.mxu0 %v3517
    %3993 = vmatpush.bf16.msra.mxu0 %v3510
    %3994 = vmatpush.bf16.msra.mxu0 %v3503
    %3995 = vmatpush.bf16.msra.mxu0 %v3496
    %3996 = vmatpush.bf16.msra.mxu0 %v3489
    %3997 = vmatpush.bf16.msra.mxu0 %v3482
    %3998 = vmatpush.bf16.msra.mxu0 %v3475
    %3999 = vmatmul.bf16.gmra.mxu0 %v2438
    %v4000 = vpop.f32.mrf.mxu0
    %v4001 = vadd.f32 %v3987, %v4000
    %v4002 = vpop.f32.mrf.mxu0
    %v4003 = vadd.f32 %v3989, %v4002
    %4004 = vdwg.mxu0
    %4005 = vmatpush.bf16.msra.mxu0 %v3580
    %4006 = vmatpush.bf16.msra.mxu0 %v3573
    %4007 = vmatpush.bf16.msra.mxu0 %v3566
    %4008 = vmatpush.bf16.msra.mxu0 %v3559
    %4009 = vmatpush.bf16.msra.mxu0 %v3552
    %4010 = vmatpush.bf16.msra.mxu0 %v3545
    %4011 = vmatpush.bf16.msra.mxu0 %v3538
    %4012 = vmatpush.bf16.msra.mxu0 %v3531
    %4013 = vmatmul.bf16.gmra.mxu0 %v2439
    %v4014 = vpop.f32.mrf.mxu0
    %v4015 = vadd.f32 %v4001, %v4014
    %v4016 = vpop.f32.mrf.mxu0
    %v4017 = vadd.f32 %v4003, %v4016
    %4018 = vdwg.mxu0
    %4019 = vmatpush.bf16.msra.mxu0 %v3636
    %4020 = vmatpush.bf16.msra.mxu0 %v3629
    %4021 = vmatpush.bf16.msra.mxu0 %v3622
    %4022 = vmatpush.bf16.msra.mxu0 %v3615
    %4023 = vmatpush.bf16.msra.mxu0 %v3608
    %4024 = vmatpush.bf16.msra.mxu0 %v3601
    %4025 = vmatpush.bf16.msra.mxu0 %v3594
    %4026 = vmatpush.bf16.msra.mxu0 %v3587
    %4027 = vmatmul.bf16.gmra.mxu0 %v2440
    %v4028 = vpop.f32.mrf.mxu0
    %v4029 = vadd.f32 %v4015, %v4028
    %v4030 = vpop.f32.mrf.mxu0
    %v4031 = vadd.f32 %v4017, %v4030
    %4032 = vdwg.mxu0
    %4033 = vmatpush.bf16.msra.mxu0 %v3469
    %4034 = vmatpush.bf16.msra.mxu0 %v3462
    %4035 = vmatpush.bf16.msra.mxu0 %v3455
    %4036 = vmatpush.bf16.msra.mxu0 %v3448
    %4037 = vmatpush.bf16.msra.mxu0 %v3441
    %4038 = vmatpush.bf16.msra.mxu0 %v3434
    %4039 = vmatpush.bf16.msra.mxu0 %v3427
    %4040 = vmatpush.bf16.msra.mxu0 %v3420
    %4041 = vmatmul.bf16.gmra.mxu0 %v2437
    %v4042 = vpop.f32.mrf.mxu0
    %v4043 = vadd.f32 %v2702, %v4042
    %v4044 = vpop.f32.mrf.mxu0
    %v4045 = vadd.f32 %v2702, %v4044
    %4046 = vdwg.mxu0
    %4047 = vmatpush.bf16.msra.mxu0 %v3525
    %4048 = vmatpush.bf16.msra.mxu0 %v3518
    %4049 = vmatpush.bf16.msra.mxu0 %v3511
    %4050 = vmatpush.bf16.msra.mxu0 %v3504
    %4051 = vmatpush.bf16.msra.mxu0 %v3497
    %4052 = vmatpush.bf16.msra.mxu0 %v3490
    %4053 = vmatpush.bf16.msra.mxu0 %v3483
    %4054 = vmatpush.bf16.msra.mxu0 %v3476
    %4055 = vmatmul.bf16.gmra.mxu0 %v2438
    %v4056 = vpop.f32.mrf.mxu0
    %v4057 = vadd.f32 %v4043, %v4056
    %v4058 = vpop.f32.mrf.mxu0
    %v4059 = vadd.f32 %v4045, %v4058
    %4060 = vdwg.mxu0
    %4061 = vmatpush.bf16.msra.mxu0 %v3581
    %4062 = vmatpush.bf16.msra.mxu0 %v3574
    %4063 = vmatpush.bf16.msra.mxu0 %v3567
    %4064 = vmatpush.bf16.msra.mxu0 %v3560
    %4065 = vmatpush.bf16.msra.mxu0 %v3553
    %4066 = vmatpush.bf16.msra.mxu0 %v3546
    %4067 = vmatpush.bf16.msra.mxu0 %v3539
    %4068 = vmatpush.bf16.msra.mxu0 %v3532
    %4069 = vmatmul.bf16.gmra.mxu0 %v2439
    %v4070 = vpop.f32.mrf.mxu0
    %v4071 = vadd.f32 %v4057, %v4070
    %v4072 = vpop.f32.mrf.mxu0
    %v4073 = vadd.f32 %v4059, %v4072
    %4074 = vdwg.mxu0
    %4075 = vmatpush.bf16.msra.mxu0 %v3637
    %4076 = vmatpush.bf16.msra.mxu0 %v3630
    %4077 = vmatpush.bf16.msra.mxu0 %v3623
    %4078 = vmatpush.bf16.msra.mxu0 %v3616
    %4079 = vmatpush.bf16.msra.mxu0 %v3609
    %4080 = vmatpush.bf16.msra.mxu0 %v3602
    %4081 = vmatpush.bf16.msra.mxu0 %v3595
    %4082 = vmatpush.bf16.msra.mxu0 %v3588
    %4083 = vmatmul.bf16.gmra.mxu0 %v2440
    %v4084 = vpop.f32.mrf.mxu0
    %v4085 = vadd.f32 %v4071, %v4084
    %v4086 = vpop.f32.mrf.mxu0
    %v4087 = vadd.f32 %v4073, %v4086
    %4088 = vdwg.mxu0
    %4089 = vmatpush.bf16.msra.mxu0 %v3470
    %4090 = vmatpush.bf16.msra.mxu0 %v3463
    %4091 = vmatpush.bf16.msra.mxu0 %v3456
    %4092 = vmatpush.bf16.msra.mxu0 %v3449
    %4093 = vmatpush.bf16.msra.mxu0 %v3442
    %4094 = vmatpush.bf16.msra.mxu0 %v3435
    %4095 = vmatpush.bf16.msra.mxu0 %v3428
    %4096 = vmatpush.bf16.msra.mxu0 %v3421
    %4097 = vmatmul.bf16.gmra.mxu0 %v2437
    %v4098 = vpop.f32.mrf.mxu0
    %v4099 = vadd.f32 %v2703, %v4098
    %v4100 = vpop.f32.mrf.mxu0
    %v4101 = vadd.f32 %v2703, %v4100
    %4102 = vdwg.mxu0
    %4103 = vmatpush.bf16.msra.mxu0 %v3526
    %4104 = vmatpush.bf16.msra.mxu0 %v3519
    %4105 = vmatpush.bf16.msra.mxu0 %v3512
    %4106 = vmatpush.bf16.msra.mxu0 %v3505
    %4107 = vmatpush.bf16.msra.mxu0 %v3498
    %4108 = vmatpush.bf16.msra.mxu0 %v3491
    %4109 = vmatpush.bf16.msra.mxu0 %v3484
    %4110 = vmatpush.bf16.msra.mxu0 %v3477
    %4111 = vmatmul.bf16.gmra.mxu0 %v2438
    %v4112 = vpop.f32.mrf.mxu0
    %v4113 = vadd.f32 %v4099, %v4112
    %v4114 = vpop.f32.mrf.mxu0
    %v4115 = vadd.f32 %v4101, %v4114
    %4116 = vdwg.mxu0
    %4117 = vmatpush.bf16.msra.mxu0 %v3582
    %4118 = vmatpush.bf16.msra.mxu0 %v3575
    %4119 = vmatpush.bf16.msra.mxu0 %v3568
    %4120 = vmatpush.bf16.msra.mxu0 %v3561
    %4121 = vmatpush.bf16.msra.mxu0 %v3554
    %4122 = vmatpush.bf16.msra.mxu0 %v3547
    %4123 = vmatpush.bf16.msra.mxu0 %v3540
    %4124 = vmatpush.bf16.msra.mxu0 %v3533
    %4125 = vmatmul.bf16.gmra.mxu0 %v2439
    %v4126 = vpop.f32.mrf.mxu0
    %v4127 = vadd.f32 %v4113, %v4126
    %v4128 = vpop.f32.mrf.mxu0
    %v4129 = vadd.f32 %v4115, %v4128
    %4130 = vdwg.mxu0
    %4131 = vmatpush.bf16.msra.mxu0 %v3638
    %4132 = vmatpush.bf16.msra.mxu0 %v3631
    %4133 = vmatpush.bf16.msra.mxu0 %v3624
    %4134 = vmatpush.bf16.msra.mxu0 %v3617
    %4135 = vmatpush.bf16.msra.mxu0 %v3610
    %4136 = vmatpush.bf16.msra.mxu0 %v3603
    %4137 = vmatpush.bf16.msra.mxu0 %v3596
    %4138 = vmatpush.bf16.msra.mxu0 %v3589
    %4139 = vmatmul.bf16.gmra.mxu0 %v2440
    %v4140 = vpop.f32.mrf.mxu0
    %v4141 = vadd.f32 %v4127, %v4140
    %v4142 = vpop.f32.mrf.mxu0
    %v4143 = vadd.f32 %v4129, %v4142
    %4144 = vdwg.mxu0
    %4145 = vmatpush.bf16.msra.mxu0 %v3471
    %4146 = vmatpush.bf16.msra.mxu0 %v3464
    %4147 = vmatpush.bf16.msra.mxu0 %v3457
    %4148 = vmatpush.bf16.msra.mxu0 %v3450
    %4149 = vmatpush.bf16.msra.mxu0 %v3443
    %4150 = vmatpush.bf16.msra.mxu0 %v3436
    %4151 = vmatpush.bf16.msra.mxu0 %v3429
    %4152 = vmatpush.bf16.msra.mxu0 %v3422
    %4153 = vmatmul.bf16.gmra.mxu0 %v2437
    %v4154 = vpop.f32.mrf.mxu0
    %v4155 = vadd.f32 %v2704, %v4154
    %v4156 = vpop.f32.mrf.mxu0
    %v4157 = vadd.f32 %v2704, %v4156
    %4158 = vdwg.mxu0
    %4159 = vmatpush.bf16.msra.mxu0 %v3527
    %4160 = vmatpush.bf16.msra.mxu0 %v3520
    %4161 = vmatpush.bf16.msra.mxu0 %v3513
    %4162 = vmatpush.bf16.msra.mxu0 %v3506
    %4163 = vmatpush.bf16.msra.mxu0 %v3499
    %4164 = vmatpush.bf16.msra.mxu0 %v3492
    %4165 = vmatpush.bf16.msra.mxu0 %v3485
    %4166 = vmatpush.bf16.msra.mxu0 %v3478
    %4167 = vmatmul.bf16.gmra.mxu0 %v2438
    %v4168 = vpop.f32.mrf.mxu0
    %v4169 = vadd.f32 %v4155, %v4168
    %v4170 = vpop.f32.mrf.mxu0
    %v4171 = vadd.f32 %v4157, %v4170
    %4172 = vdwg.mxu0
    %4173 = vmatpush.bf16.msra.mxu0 %v3583
    %4174 = vmatpush.bf16.msra.mxu0 %v3576
    %4175 = vmatpush.bf16.msra.mxu0 %v3569
    %4176 = vmatpush.bf16.msra.mxu0 %v3562
    %4177 = vmatpush.bf16.msra.mxu0 %v3555
    %4178 = vmatpush.bf16.msra.mxu0 %v3548
    %4179 = vmatpush.bf16.msra.mxu0 %v3541
    %4180 = vmatpush.bf16.msra.mxu0 %v3534
    %4181 = vmatmul.bf16.gmra.mxu0 %v2439
    %v4182 = vpop.f32.mrf.mxu0
    %v4183 = vadd.f32 %v4169, %v4182
    %v4184 = vpop.f32.mrf.mxu0
    %v4185 = vadd.f32 %v4171, %v4184
    %4186 = vdwg.mxu0
    %4187 = vmatpush.bf16.msra.mxu0 %v3639
    %4188 = vmatpush.bf16.msra.mxu0 %v3632
    %4189 = vmatpush.bf16.msra.mxu0 %v3625
    %4190 = vmatpush.bf16.msra.mxu0 %v3618
    %4191 = vmatpush.bf16.msra.mxu0 %v3611
    %4192 = vmatpush.bf16.msra.mxu0 %v3604
    %4193 = vmatpush.bf16.msra.mxu0 %v3597
    %4194 = vmatpush.bf16.msra.mxu0 %v3590
    %4195 = vmatmul.bf16.gmra.mxu0 %v2440
    %v4196 = vpop.f32.mrf.mxu0
    %v4197 = vadd.f32 %v4183, %v4196
    %v4198 = vpop.f32.mrf.mxu0
    %v4199 = vadd.f32 %v4185, %v4198
    %4200 = vdwg.mxu0
    %4201 = vmatpush.bf16.msra.mxu0 %v3472
    %4202 = vmatpush.bf16.msra.mxu0 %v3465
    %4203 = vmatpush.bf16.msra.mxu0 %v3458
    %4204 = vmatpush.bf16.msra.mxu0 %v3451
    %4205 = vmatpush.bf16.msra.mxu0 %v3444
    %4206 = vmatpush.bf16.msra.mxu0 %v3437
    %4207 = vmatpush.bf16.msra.mxu0 %v3430
    %4208 = vmatpush.bf16.msra.mxu0 %v3423
    %4209 = vmatmul.bf16.gmra.mxu0 %v2437
    %v4210 = vpop.f32.mrf.mxu0
    %v4211 = vadd.f32 %v2705, %v4210
    %v4212 = vpop.f32.mrf.mxu0
    %v4213 = vadd.f32 %v2705, %v4212
    %4214 = vdwg.mxu0
    %4215 = vmatpush.bf16.msra.mxu0 %v3528
    %4216 = vmatpush.bf16.msra.mxu0 %v3521
    %4217 = vmatpush.bf16.msra.mxu0 %v3514
    %4218 = vmatpush.bf16.msra.mxu0 %v3507
    %4219 = vmatpush.bf16.msra.mxu0 %v3500
    %4220 = vmatpush.bf16.msra.mxu0 %v3493
    %4221 = vmatpush.bf16.msra.mxu0 %v3486
    %4222 = vmatpush.bf16.msra.mxu0 %v3479
    %4223 = vmatmul.bf16.gmra.mxu0 %v2438
    %v4224 = vpop.f32.mrf.mxu0
    %v4225 = vadd.f32 %v4211, %v4224
    %v4226 = vpop.f32.mrf.mxu0
    %v4227 = vadd.f32 %v4213, %v4226
    %4228 = vdwg.mxu0
    %4229 = vmatpush.bf16.msra.mxu0 %v3584
    %4230 = vmatpush.bf16.msra.mxu0 %v3577
    %4231 = vmatpush.bf16.msra.mxu0 %v3570
    %4232 = vmatpush.bf16.msra.mxu0 %v3563
    %4233 = vmatpush.bf16.msra.mxu0 %v3556
    %4234 = vmatpush.bf16.msra.mxu0 %v3549
    %4235 = vmatpush.bf16.msra.mxu0 %v3542
    %4236 = vmatpush.bf16.msra.mxu0 %v3535
    %4237 = vmatmul.bf16.gmra.mxu0 %v2439
    %v4238 = vpop.f32.mrf.mxu0
    %v4239 = vadd.f32 %v4225, %v4238
    %v4240 = vpop.f32.mrf.mxu0
    %v4241 = vadd.f32 %v4227, %v4240
    %4242 = vdwg.mxu0
    %4243 = vmatpush.bf16.msra.mxu0 %v3640
    %4244 = vmatpush.bf16.msra.mxu0 %v3633
    %4245 = vmatpush.bf16.msra.mxu0 %v3626
    %4246 = vmatpush.bf16.msra.mxu0 %v3619
    %4247 = vmatpush.bf16.msra.mxu0 %v3612
    %4248 = vmatpush.bf16.msra.mxu0 %v3605
    %4249 = vmatpush.bf16.msra.mxu0 %v3598
    %4250 = vmatpush.bf16.msra.mxu0 %v3591
    %4251 = vmatmul.bf16.gmra.mxu0 %v2440
    %v4252 = vpop.f32.mrf.mxu0
    %v4253 = vadd.f32 %v4239, %v4252
    %v4254 = vpop.f32.mrf.mxu0
    %v4255 = vadd.f32 %v4241, %v4254
    %4256 = vdwg.mxu0
    %v4257 = vmul.f32 %v3917, 0.5
    %v4258 = vmul.f32 %v3973, 0.5
    %v4259 = vmul.f32 %v4029, 0.5
    %v4260 = vmul.f32 %v4085, 0.5
    %v4261 = vmul.f32 %v4141, 0.5
    %v4262 = vmul.f32 %v4197, 0.5
    %v4263 = vmul.f32 %v4253, 0.5
    %v4264 = vmul.f32 %v3919, 0.5
    %v4265 = vmul.f32 %v3975, 0.5
    %v4266 = vmul.f32 %v4031, 0.5
    %v4267 = vmul.f32 %v4087, 0.5
    %v4268 = vmul.f32 %v4143, 0.5
    %v4269 = vmul.f32 %v4199, 0.5
    %v4270 = vmul.f32 %v4255, 0.5
    %v4271 = vtanh.pop %v4257
    %v4272 = vtanh.pop %v4258
    %v4273 = vtanh.pop %v4259
    %v4274 = vtanh.pop %v4260
    %v4275 = vtanh.pop %v4261
    %v4276 = vtanh.pop %v4262
    %v4277 = vtanh.pop %v4263
    %v4278 = vtanh.pop %v4264
    %v4279 = vtanh.pop %v4265
    %v4280 = vtanh.pop %v4266
    %v4281 = vtanh.pop %v4267
    %v4282 = vtanh.pop %v4268
    %v4283 = vtanh.pop %v4269
    %v4284 = vtanh.pop %v4270
    %v4285 = vmul.f32 %v4271, 0.5
    %v4286 = vmul.f32 %v4272, 0.5
    %v4287 = vmul.f32 %v4273, 0.5
    %v4288 = vmul.f32 %v4274, 0.5
    %v4289 = vmul.f32 %v4275, 0.5
    %v4290 = vmul.f32 %v4276, 0.5
    %v4291 = vmul.f32 %v4277, 0.5
    %v4292 = vmul.f32 %v4278, 0.5
    %v4293 = vmul.f32 %v4279, 0.5
    %v4294 = vmul.f32 %v4280, 0.5
    %v4295 = vmul.f32 %v4281, 0.5
    %v4296 = vmul.f32 %v4282, 0.5
    %v4297 = vmul.f32 %v4283, 0.5
    %v4298 = vmul.f32 %v4284, 0.5
    %v4299 = vadd.f32 %v4285, 0.5
    %v4300 = vadd.f32 %v4286, 0.5
    %v4301 = vadd.f32 %v4287, 0.5
    %v4302 = vadd.f32 %v4288, 0.5
    %v4303 = vadd.f32 %v4289, 0.5
    %v4304 = vadd.f32 %v4290, 0.5
    %v4305 = vadd.f32 %v4291, 0.5
    %v4306 = vadd.f32 %v4292, 0.5
    %v4307 = vadd.f32 %v4293, 0.5
    %v4308 = vadd.f32 %v4294, 0.5
    %v4309 = vadd.f32 %v4295, 0.5
    %v4310 = vadd.f32 %v4296, 0.5
    %v4311 = vadd.f32 %v4297, 0.5
    %v4312 = vadd.f32 %v4298, 0.5
    %v4313 = vpack.c.bf16 %v4300, %v4299
    %v4314 = vpack.c.bf16 %v4302, %v4301
    %v4315 = vpack.c.bf16 %v4304, %v4303
    %v4316 = vpack.c.bf16 %v4305, %v4305
    %v4317 = vpack.c.bf16 %v4307, %v4306
    %v4318 = vpack.c.bf16 %v4309, %v4308
    %v4319 = vpack.c.bf16 %v4311, %v4310
    %v4320 = vpack.c.bf16 %v4312, %v4312
    %4321 = vst [vmem:[%s11] sm:$0xff] %v4313
    %4322 = vst [vmem:[%s11 + $0x8] sm:$0xff] %v4314
    %4323 = vst [vmem:[%s11 + $0x10] sm:$0xff] %v4315
    %4324 = vst [vmem:[%s11 + $0x18] sm:$0xf] %v4316
    %4325 = vst [vmem:[%s11 + $0x1c] sm:$0xff] %v4317
    %4326 = vst [vmem:[%s11 + $0x24] sm:$0xff] %v4318
    %4327 = vst [vmem:[%s11 + $0x2c] sm:$0xff] %v4319
    %4328 = vst [vmem:[%s11 + $0x34] sm:$0xf] %v4320
    %4329 = vst [vmem:[%s12] sm:$0xff] %v2150
    %4330 = vst [vmem:[%s12 + $0x8] sm:$0xff] %v2152
    // Predicated region
    $region62: #{vae_forward.1} parent=1 // pred_check
      _
    $region63: #{vae_forward.1} parent=1 // pred_check_branch
      %4332 = sbr.rel (0) target = $region65
    $region64: #{vae_forward.1} parent=1 // pred_region
      _
    $region65: #{vae_forward.1} parent=1 // pred_fallthru
      _
    // Predicated region
    $region66: #{vae_forward.1} parent=1 // pred_check
      _
    $region67: #{vae_forward.1} parent=1 // pred_check_branch
      %4334 = sbr.rel (0) target = $region69
    $region68: #{vae_forward.1} parent=1 // pred_region
      _
    $region69: #{vae_forward.1} parent=1 // pred_fallthru
      _
    // Predicated region
    $region70: #{vae_forward.1} parent=1 // pred_check
      _
    $region71: #{vae_forward.1} parent=1 // pred_check_branch
      %4336 = sbr.rel (0) target = $region73
    $region72: #{vae_forward.1} parent=1 // pred_region
      _
    $region73: #{vae_forward.1} parent=1 // pred_fallthru
      _
    // Predicated region
    $region74: #{vae_forward.1} parent=1 // pred_check
      _
    $region75: #{vae_forward.1} parent=1 // pred_check_branch
      %4338 = sbr.rel (0) target = $region77
    $region76: #{vae_forward.1} parent=1 // pred_region
      _
    $region77: #{vae_forward.1} parent=1 // pred_fallthru
      _
    %4339 = vsyncpa [#allocation3], 1
    %4340 = vsyncpa [#allocation5], 1
    %4341 = vsyncpa [#allocation8], 1

</llo_original>
